<compile_context>
chip_gen: v6e
topology: v6e:2x2x1
jax: 0.10.0
libtpu: 0.0.40
codegen_flags: <defaults>
</compile_context>

<pallas_src>
import functools
import math

import jax
import jax.numpy as jnp
from jax import lax
from jax.experimental import pallas as pl
from jax.experimental.pallas import tpu as pltpu


# ---------------------------------------------------------------------------
# Helpers
# ---------------------------------------------------------------------------
def _round_up(v, m):
    return ((v + m - 1) // m) * m


def _nbytes(shape, dtype):
    return math.prod(shape) * jnp.dtype(dtype).itemsize


def _mosaic_params(semantics, streamed, resident):
    """vmem_limit_bytes sized from the actual buffers (double-buffered blocks + residents)."""
    vmem = 4 << 20
    for shape, dt in streamed:
        vmem += 2 * _nbytes(shape, dt)
    for shape, dt in resident:
        vmem += _nbytes(shape, dt)
    vmem = max(32 << 20, min(int(vmem), 128 << 20))
    return pltpu.CompilerParams(dimension_semantics=semantics, vmem_limit_bytes=vmem)


def _pick_chunk_t(T, Bp, Hp, budget_bytes=4 << 20):
    """Largest divisor of T whose streamed gi footprint stays within ~budget."""
    per_step = Bp * 3 * Hp * 2 * 2 * 2      # rows * 3Hp * bf16 * double-buffer * 2 dirs
    best = 1
    for c in range(1, T + 1):
        if T % c == 0 and c * per_step <= budget_bytes:
            best = c
    return best


# ---------------------------------------------------------------------------
# Pallas kernels
# ---------------------------------------------------------------------------
def _proj_kernel(num_x, *refs):
    """Input projection: gi = sum_k x_k @ w_k + b, written as bf16.

    refs = (x_0..x_{num_x-1}, w_0..w_{num_x-1}, b, gi_out)
    x_k block: (R, din_k) bf16; w_k: (din_k, G) bf16; b: (1, G) f32; gi: (R, G) bf16.
    """
    xs = refs[:num_x]
    ws = refs[num_x:2 * num_x]
    b_ref = refs[2 * num_x]
    gi_ref = refs[2 * num_x + 1]
    acc = jnp.dot(xs[0][...], ws[0][...], preferred_element_type=jnp.float32)
    for k in range(1, num_x):
        acc = acc + jnp.dot(xs[k][...], ws[k][...], preferred_element_type=jnp.float32)
    gi_ref[...] = (acc + b_ref[...]).astype(gi_ref.dtype)


def _recur_kernel(chunk_t, Bp, Hp, unroll,
                  gi_f_ref, gi_b_ref, wh_ref, bhnf_ref, bhnb_ref,
                  out_f_ref, out_b_ref, h_scr):
    """Bidirectional GRU recurrence over one time chunk (grid axis is sequential).

    gi_f block: (chunk_t*Bp, 3Hp) bf16, time-forward chunk c.
    gi_b block: (chunk_t*Bp, 3Hp) bf16, time chunk (n_chunks-1-c) (reversed direction).
    wh_ref:     (Hp, 6Hp) bf16 = [W_hh_fwd | W_hh_bwd] (gate order r|z|n, lane-padded).
    bhn_*:      (1, Hp) f32, n-gate hidden bias.
    out_*:      (chunk_t*Bp, Hp) bf16 hidden states.
    h_scr:      (2*Bp, Hp) f32 persistent carry [h_f ; h_b] across grid steps.
    """
    H3 = 3 * Hp

    @pl.when(pl.program_id(0) == 0)
    def _():
        h_scr[...] = jnp.zeros_like(h_scr)

    # Hoist the (1,Hp)->(Bp,Hp) bias broadcasts out of the time loop (no broadcast CSE).
    bhn_f = jnp.broadcast_to(bhnf_ref[...], (Bp, Hp))
    bhn_b = jnp.broadcast_to(bhnb_ref[...], (Bp, Hp))

    def step(i, carry):
        del carry
        h = h_scr[...]                                        # (2Bp, Hp) f32
        # One fused MXU push for both directions.
        gh = jnp.dot(h.astype(jnp.bfloat16), wh_ref[...],
                     preferred_element_type=jnp.float32)      # (2Bp, 6Hp)
        rows_f = pl.ds(pl.multiple_of(i * Bp, Bp), Bp)
        rows_b = pl.ds(pl.multiple_of((chunk_t - 1 - i) * Bp, Bp), Bp)
        gi_f = gi_f_ref[rows_f, :].astype(jnp.float32)        # (Bp, 3Hp)
        gi_b = gi_b_ref[rows_b, :].astype(jnp.float32)
        gh_f = gh[0:Bp, 0:H3]
        gh_b = gh[Bp:2 * Bp, H3:2 * H3]
        h_f = h[0:Bp, :]
        h_b = h[Bp:2 * Bp, :]

        r_f = jax.nn.sigmoid(gi_f[:, 0:Hp] + gh_f[:, 0:Hp])
        z_f = jax.nn.sigmoid(gi_f[:, Hp:2 * Hp] + gh_f[:, Hp:2 * Hp])
        n_f = jnp.tanh(gi_f[:, 2 * Hp:H3] + r_f * (gh_f[:, 2 * Hp:H3] + bhn_f))
        hf_new = (1.0 - z_f) * n_f + z_f * h_f

        r_b = jax.nn.sigmoid(gi_b[:, 0:Hp] + gh_b[:, 0:Hp])
        z_b = jax.nn.sigmoid(gi_b[:, Hp:2 * Hp] + gh_b[:, Hp:2 * Hp])
        n_b = jnp.tanh(gi_b[:, 2 * Hp:H3] + r_b * (gh_b[:, 2 * Hp:H3] + bhn_b))
        hb_new = (1.0 - z_b) * n_b + z_b * h_b

        h_scr[0:Bp, :] = hf_new
        h_scr[Bp:2 * Bp, :] = hb_new
        out_f_ref[rows_f, :] = hf_new.astype(out_f_ref.dtype)
        out_b_ref[rows_b, :] = hb_new.astype(out_b_ref.dtype)
        return 0

    lax.fori_loop(0, chunk_t, step, 0, unroll=unroll)


def _last_kernel(chunk_t, Bp, Hp, n_chunks, num_x, unroll, *refs):
    """Final bidirectional GRU layer fused with the Linear head (streamed fwd recurrence).

    refs = (gi_f, wh_f, bhn_f, x_last_0..x_last_{num_x-1}, wib_0..wib_{num_x-1},
            bi_b, bhn_b, wl, bl, out, h_scr)
    Only t = T-1 feeds the Linear: the backward direction is a single cell update with
    h0 = 0 (its hidden matmul vanishes), and the Linear is an epilogue on the last chunk.
    """
    H3 = 3 * Hp
    gi_ref, whf_ref, bhnf_ref = refs[0], refs[1], refs[2]
    xl_refs = refs[3:3 + num_x]
    wib_refs = refs[3 + num_x:3 + 2 * num_x]
    bib_ref = refs[3 + 2 * num_x]
    bhnb_ref = refs[4 + 2 * num_x]
    wl_ref = refs[5 + 2 * num_x]
    bl_ref = refs[6 + 2 * num_x]
    out_ref = refs[7 + 2 * num_x]
    h_scr = refs[8 + 2 * num_x]

    @pl.when(pl.program_id(0) == 0)
    def _():
        h_scr[...] = jnp.zeros_like(h_scr)

    bhn_f = jnp.broadcast_to(bhnf_ref[...], (Bp, Hp))

    def step(i, carry):
        del carry
        h = h_scr[...]
        gh = jnp.dot(h.astype(jnp.bfloat16), whf_ref[...],
                     preferred_element_type=jnp.float32)      # (Bp, 3Hp)
        rows = pl.ds(pl.multiple_of(i * Bp, Bp), Bp)
        gi = gi_ref[rows, :].astype(jnp.float32)
        r = jax.nn.sigmoid(gi[:, 0:Hp] + gh[:, 0:Hp])
        z = jax.nn.sigmoid(gi[:, Hp:2 * Hp] + gh[:, Hp:2 * Hp])
        n = jnp.tanh(gi[:, 2 * Hp:H3] + r * (gh[:, 2 * Hp:H3] + bhn_f))
        h_scr[...] = (1.0 - z) * n + z * h
        return 0

    lax.fori_loop(0, chunk_t, step, 0, unroll=unroll)

    @pl.when(pl.program_id(0) == n_chunks - 1)
    def _():
        h_f = h_scr[...]                                      # final forward state
        # Backward direction: single step on x[T-1] with h0 = 0.
        gi_b = jnp.dot(xl_refs[0][...], wib_refs[0][...],
                       preferred_element_type=jnp.float32)
        for k in range(1, num_x):
            gi_b = gi_b + jnp.dot(xl_refs[k][...], wib_refs[k][...],
                                  preferred_element_type=jnp.float32)
        gi_b = gi_b + bib_ref[...]
        r_b = jax.nn.sigmoid(gi_b[:, 0:Hp])
        z_b = jax.nn.sigmoid(gi_b[:, Hp:2 * Hp])
        n_b = jnp.tanh(gi_b[:, 2 * Hp:H3] + r_b * bhnb_ref[...])
        h_b = (1.0 - z_b) * n_b                               # + z_b * 0

        # Linear epilogue: [h_f | h_b] @ W = h_f @ W[:Hp] + h_b @ W[Hp:2Hp] + b.
        out_ref[...] = (
            jnp.dot(h_f.astype(jnp.bfloat16), wl_ref[0:Hp, :],
                    preferred_element_type=jnp.float32)
            + jnp.dot(h_b.astype(jnp.bfloat16), wl_ref[Hp:2 * Hp, :],
                      preferred_element_type=jnp.float32)
            + bl_ref[...])


# ---------------------------------------------------------------------------
# pallas_call wrappers
# ---------------------------------------------------------------------------
def _input_projection(xs, wi_parts, bi, T, Bp, chunk_t):
    R = chunk_t * Bp
    n_chunks = T // chunk_t
    G = wi_parts[0].shape[1]
    num_x = len(xs)

    in_specs = [pl.BlockSpec((R, xp.shape[1]), lambda c: (c, 0)) for xp in xs]
    in_specs += [pl.BlockSpec(wp.shape, lambda c: (0, 0)) for wp in wi_parts]
    in_specs += [pl.BlockSpec(bi.shape, lambda c: (0, 0))]

    streamed = [((R, xp.shape[1]), xp.dtype) for xp in xs] + [((R, G), jnp.bfloat16)]
    resident = [(wp.shape, wp.dtype) for wp in wi_parts] + [(bi.shape, bi.dtype)]

    return pl.pallas_call(
        functools.partial(_proj_kernel, num_x),
        grid=(n_chunks,),
        out_shape=jax.ShapeDtypeStruct((T * Bp, G), jnp.bfloat16),
        in_specs=in_specs,
        out_specs=pl.BlockSpec((R, G), lambda c: (c, 0)),
        compiler_params=_mosaic_params(("parallel",), streamed, resident),
    )(*xs, *wi_parts, bi)


def _bidir_recurrence(gi, layer, T, Bp, Hp, chunk_t):
    R = chunk_t * Bp
    n_chunks = T // chunk_t
    unroll = min(chunk_t, 8)
    whcat, bhn_f, bhn_b = layer["whcat"], layer["bhn_f"], layer["bhn_b"]

    in_specs = [
        pl.BlockSpec((R, 3 * Hp), lambda c: (c, 0)),                      # fwd gi chunk
        pl.BlockSpec((R, 3 * Hp), lambda c, n=n_chunks: (n - 1 - c, 1)),  # bwd gi chunk (reversed)
        pl.BlockSpec(whcat.shape, lambda c: (0, 0)),
        pl.BlockSpec(bhn_f.shape, lambda c: (0, 0)),
        pl.BlockSpec(bhn_b.shape, lambda c: (0, 0)),
    ]
    out_specs = [
        pl.BlockSpec((R, Hp), lambda c: (c, 0)),
        pl.BlockSpec((R, Hp), lambda c, n=n_chunks: (n - 1 - c, 0)),
    ]
    streamed = [((R, 3 * Hp), jnp.bfloat16)] * 2 + [((R, Hp), jnp.bfloat16)] * 2
    resident = [(whcat.shape, whcat.dtype), (bhn_f.shape, bhn_f.dtype),
                (bhn_b.shape, bhn_b.dtype), ((2 * Bp, Hp), jnp.float32)]

    out_f, out_b = pl.pallas_call(
        functools.partial(_recur_kernel, chunk_t, Bp, Hp, unroll),
        grid=(n_chunks,),
        out_shape=[jax.ShapeDtypeStruct((T * Bp, Hp), jnp.bfloat16),
                   jax.ShapeDtypeStruct((T * Bp, Hp), jnp.bfloat16)],
        in_specs=in_specs,
        out_specs=out_specs,
        scratch_shapes=[pltpu.VMEM((2 * Bp, Hp), jnp.float32)],
        compiler_params=_mosaic_params(("arbitrary",), streamed, resident),
    )(gi, gi, whcat, bhn_f, bhn_b)
    return out_f, out_b


def _last_layer_and_head(gi_f, x_last, layer, wl, bl, T, Bp, Hp, Op, chunk_t):
    R = chunk_t * Bp
    n_chunks = T // chunk_t
    unroll = min(chunk_t, 8)
    num_x = len(x_last)
    wh_f, bhn_f = layer["wh_f"], layer["bhn_f"]
    wi_b, bi_b, bhn_b = layer["wi_b"], layer["bi_b"], layer["bhn_b"]

    in_specs = [pl.BlockSpec((R, 3 * Hp), lambda c: (c, 0)),
                pl.BlockSpec(wh_f.shape, lambda c: (0, 0)),
                pl.BlockSpec(bhn_f.shape, lambda c: (0, 0))]
    in_specs += [pl.BlockSpec(xp.shape, lambda c: (0, 0)) for xp in x_last]
    in_specs += [pl.BlockSpec(wp.shape, lambda c: (0, 0)) for wp in wi_b]
    in_specs += [pl.BlockSpec(bi_b.shape, lambda c: (0, 0)),
                 pl.BlockSpec(bhn_b.shape, lambda c: (0, 0)),
                 pl.BlockSpec(wl.shape, lambda c: (0, 0)),
                 pl.BlockSpec(bl.shape, lambda c: (0, 0))]

    streamed = [((R, 3 * Hp), jnp.bfloat16)]
    resident = ([(wh_f.shape, wh_f.dtype), (bhn_f.shape, bhn_f.dtype)]
                + [(xp.shape, xp.dtype) for xp in x_last]
                + [(wp.shape, wp.dtype) for wp in wi_b]
                + [(bi_b.shape, bi_b.dtype), (bhn_b.shape, bhn_b.dtype),
                   (wl.shape, wl.dtype), (bl.shape, bl.dtype),
                   ((Bp, Op), jnp.float32), ((Bp, Hp), jnp.float32)])

    return pl.pallas_call(
        functools.partial(_last_kernel, chunk_t, Bp, Hp, n_chunks, num_x, unroll),
        grid=(n_chunks,),
        out_shape=jax.ShapeDtypeStruct((Bp, Op), jnp.float32),
        in_specs=in_specs,
        out_specs=pl.BlockSpec((Bp, Op), lambda c: (0, 0)),
        scratch_shapes=[pltpu.VMEM((Bp, Hp), jnp.float32)],
        compiler_params=_mosaic_params(("arbitrary",), streamed, resident),
    )(gi_f, wh_f, bhn_f, *x_last, *wi_b, bi_b, bhn_b, wl, bl)


def gru_rnn_forward(x, prep, *, out_features=1000, chunk_t=None):
    """x: (B, T, input_size) batch_first, matching the PyTorch module. Returns (B, out_features)."""
    B, T, D = x.shape
    Bp = _round_up(B, 8)
    layers = prep["layers"]
    wl, bl = prep["wl"], prep["bl"]
    Hp = wl.shape[0] // 2
    Op = wl.shape[1]

    # nn.Dropout(p=0.2) is the identity in eval mode.
    xt = jnp.transpose(x.astype(jnp.float32), (1, 0, 2))       # (T, B, D)
    if Bp != B:
        xt = jnp.pad(xt, ((0, 0), (0, Bp - B), (0, 0)))
    xs = (xt.reshape(T * Bp, D).astype(jnp.bfloat16),)          # time-major rows t*Bp + b

    if chunk_t is None:
        chunk_t = _pick_chunk_t(T, Bp, Hp)
    while T % chunk_t:
        chunk_t -= 1

    for layer in layers[:-1]:
        gi = _input_projection(xs, layer["wi"], layer["bi"], T, Bp, chunk_t)
        xs = _bidir_recurrence(gi, layer, T, Bp, Hp, chunk_t)   # (out_f, out_b) bf16

    last = layers[-1]
    gi_f = _input_projection(xs, last["wi_f"], last["bi_f"], T, Bp, chunk_t)
    x_last = tuple(xp[(T - 1) * Bp:T * Bp] for xp in xs)
    out = _last_layer_and_head(gi_f, x_last, last, wl, bl, T, Bp, Hp, Op, chunk_t)
    return out[:B, :out_features]


# ---------------------------------------------------------------------------
# Parameter init (PyTorch-style) + one-time packing for the kernels
# ---------------------------------------------------------------------------
def init_params(seed, input_size, hidden_size, num_layers, out_features=1000):
    key = jax.random.PRNGKey(seed)
    H = hidden_size
    stdv = 1.0 / (H ** 0.5)
    layers = []
    for l in range(num_layers):
        d_in = input_size if l == 0 else 2 * H
        dirs = {}
        for name in ("fwd", "bwd"):
            key, k1, k2, k3, k4 = jax.random.split(key, 5)
            wih = jax.random.uniform(k1, (3 * H, d_in), jnp.float32, -stdv, stdv)
            whh = jax.random.uniform(k2, (3 * H, H), jnp.float32, -stdv, stdv)
            bih = jax.random.uniform(k3, (3 * H,), jnp.float32, -stdv, stdv)
            bhh = jax.random.uniform(k4, (3 * H,), jnp.float32, -stdv, stdv)
            dirs[name] = (wih, whh, bih, bhh)
        layers.append(dirs)
    lin_in = 2 * H
    lk = 1.0 / (lin_in ** 0.5)
    key, kw, kb = jax.random.split(key, 3)
    lw = jax.random.uniform(kw, (out_features, lin_in), jnp.float32, -lk, lk)
    lb = jax.random.uniform(kb, (out_features,), jnp.float32, -lk, lk)
    return {"gru_layers": layers, "linear_w": lw, "linear_b": lb}


def prepare_params(params, lane=128):
    """One-time packing: gate fusion, lane padding to Hp, bias folding, bf16 weight casts."""
    layers_raw = params["gru_layers"]
    num_layers = len(layers_raw)
    H = layers_raw[0]["fwd"][1].shape[1]            # whh: (3H, H)
    Hp = _round_up(H, lane)
    out_features = params["linear_b"].shape[0]
    Op = _round_up(out_features, lane)

    def pad_gate_cols(w):                            # (din, 3H) -> (din, 3Hp)
        out = jnp.zeros((w.shape[0], 3 * Hp), w.dtype)
        for g in range(3):
            out = out.at[:, g * Hp:g * Hp + H].set(w[:, g * H:(g + 1) * H])
        return out

    def pad_gate_bias(b):                            # (3H,) -> (1, 3Hp)
        out = jnp.zeros((3 * Hp,), b.dtype)
        for g in range(3):
            out = out.at[g * Hp:g * Hp + H].set(b[g * H:(g + 1) * H])
        return out.reshape(1, -1)

    def pad_rows(w, rows_to):
        return jnp.zeros((rows_to, w.shape[1]), w.dtype).at[:w.shape[0]].set(w)

    def pack_input_w(wih_T, layer_idx):
        wp = pad_gate_cols(wih_T)                    # (d_in, 3Hp)
        if layer_idx == 0:
            return (wp,)
        # d_in = 2H: split into fwd-half / bwd-half row blocks, pad each to Hp rows.
        return (pad_rows(wp[:H], Hp), pad_rows(wp[H:2 * H], Hp))

    def fold_bias(bih, bhh):
        # r/z hidden biases fold into the input bias; n hidden bias stays separate.
        return pad_gate_bias(bih.at[0:2 * H].add(bhh[0:2 * H])).astype(jnp.float32)

    def pad_hidden_w(whh_T):                         # (H, 3H) -> (Hp, 3Hp)
        return pad_rows(pad_gate_cols(whh_T), Hp)

    def pad_hn_bias(bhh):                            # b_hn -> (1, Hp)
        return (jnp.zeros((Hp,), bhh.dtype).at[:H].set(bhh[2 * H:3 * H])
                .reshape(1, -1).astype(jnp.float32))

    packed_layers = []
    for l, dirs in enumerate(layers_raw):
        wih_f, whh_f, bih_f, bhh_f = dirs["fwd"]
        wih_b, whh_b, bih_b, bhh_b = dirs["bwd"]
        wi_f_parts = pack_input_w(wih_f.T, l)
        wi_b_parts = pack_input_w(wih_b.T, l)
        bi_f = fold_bias(bih_f, bhh_f)
        bi_b = fold_bias(bih_b, bhh_b)
        wh_f = pad_hidden_w(whh_f.T).astype(jnp.bfloat16)
        wh_b = pad_hidden_w(whh_b.T).astype(jnp.bfloat16)
        bhn_f = pad_hn_bias(bhh_f)
        bhn_b = pad_hn_bias(bhh_b)
        if l != num_layers - 1:
            wi_parts = tuple(jnp.concatenate([wf, wb], axis=1).astype(jnp.bfloat16)
                             for wf, wb in zip(wi_f_parts, wi_b_parts))
            packed_layers.append(dict(
                wi=wi_parts,
                bi=jnp.concatenate([bi_f, bi_b], axis=1),
                whcat=jnp.concatenate([wh_f, wh_b], axis=1),     # (Hp, 6Hp)
                bhn_f=bhn_f, bhn_b=bhn_b))
        else:
            packed_layers.append(dict(
                wi_f=tuple(p.astype(jnp.bfloat16) for p in wi_f_parts),
                bi_f=bi_f, wh_f=wh_f, bhn_f=bhn_f,
                wi_b=tuple(p.astype(jnp.bfloat16) for p in wi_b_parts),
                bi_b=bi_b, bhn_b=bhn_b))

    lw, lb = params["linear_w"], params["linear_b"]              # (O, 2H), (O,)
    wl = jnp.zeros((2 * Hp, Op), jnp.float32)
    wl = wl.at[0:H, 0:out_features].set(lw[:, 0:H].T)
    wl = wl.at[Hp:Hp + H, 0:out_features].set(lw[:, H:2 * H].T)
    bl = jnp.zeros((1, Op), jnp.float32).at[0, 0:out_features].set(lb)
    return dict(layers=packed_layers, wl=wl.astype(jnp.bfloat16), bl=bl)


# ---------------------------------------------------------------------------
# Pure-JAX f32 reference (for correctness check)
# ---------------------------------------------------------------------------
def _ref_gru_dir(x_tbd, wih, whh, bih, bhh, reverse):
    T, B, _ = x_tbd.shape
    H = whh.shape[1]
    h = jnp.zeros((B, H), jnp.float32)
    outs = [None] * T
    ts = range(T - 1, -1, -1) if reverse else range(T)
    for t in ts:
        gi = x_tbd[t] @ wih.T + bih
        gh = h @ whh.T + bhh
        i_r, i_z, i_n = jnp.split(gi, 3, axis=-1)
        h_r, h_z, h_n = jnp.split(gh, 3, axis=-1)
        r = jax.nn.sigmoid(i_r + h_r)
        z = jax.nn.sigmoid(i_z + h_z)
        n = jnp.tanh(i_n + r * h_n)
        h = (1.0 - z) * n + z * h
        outs[t] = h
    return jnp.stack(outs, axis=0)


def gru_rnn_ref(x, params):
    h = jnp.transpose(x, (1, 0, 2)).astype(jnp.float32)
    for layer in params["gru_layers"]:
        fwd = _ref_gru_dir(h, *layer["fwd"], reverse=False)
        bwd = _ref_gru_dir(h, *layer["bwd"], reverse=True)
        h = jnp.concatenate([fwd, bwd], axis=-1)
    return h[-1] @ params["linear_w"].T + params["linear_b"]


# ---------------------------------------------------------------------------
if __name__ == "__main__":
    B, T, INPUT, HIDDEN, LAYERS = 4, 8, 16, 32, 2

    params = init_params(0, INPUT, HIDDEN, LAYERS)
    prep = prepare_params(params)
    x = jax.random.normal(jax.random.PRNGKey(0), (B, T, INPUT), jnp.float32)

    # chunk_t=2 -> 4 grid steps per layer: exercises the streamed recurrence, the
    # persistent-carry scratch across grid iterations, and the last-chunk epilogue.
    fwd_fn = jax.jit(functools.partial(gru_rnn_forward, chunk_t=2))
    out = jax.block_until_ready(fwd_fn(x, prep))
    assert out.shape == (B, 1000), out.shape

    ref = gru_rnn_ref(x, params)
    # bf16 matmul inputs + bf16 gi / inter-layer storage with f32 gate math -> relaxed tol.
    if not bool(jnp.allclose(out, ref, atol=2e-2, rtol=2e-2)):
        err = float(jnp.max(jnp.abs(out - ref)))
        raise AssertionError(f"Pallas GRURNN output does not match reference (max abs err {err})")

    print("KERNEL_OK")
</pallas_src>

<mosaic_0001>
module attributes {stable_mosaic.version = 11 : i64} {
  func.func @_proj_kernel(%arg0: i32, %arg1: memref<16x16xbf16, #tpu.memory_space<vmem>>, %arg2: memref<16x768xbf16, #tpu.memory_space<vmem>>, %arg3: memref<1x768xf32, #tpu.memory_space<vmem>>, %arg4: memref<16x768xbf16, #tpu.memory_space<vmem>>) attributes {dimension_semantics = [#tpu.dimension_semantics<parallel>], iteration_bounds = array<i64: 4>, scalar_prefetch = 0 : i64, scratch_operands = 0 : i64, tpu.core_type = #tpu.core_type<tc>, window_params = [{transform_indices = @transform_0, window_bounds = array<i64: 16, 16>}, {pipeline_mode = #tpu.pipeline_mode<synchronous>, transform_indices = @transform_1, window_bounds = array<i64: 16, 768>}, {pipeline_mode = #tpu.pipeline_mode<synchronous>, transform_indices = @transform_2, window_bounds = array<i64: 1, 768>}, {transform_indices = @transform_3, window_bounds = array<i64: 16, 768>}]} {
    %c0 = arith.constant 0 : index
    %c0_0 = arith.constant 0 : index
    %0 = vector.load %arg1[%c0, %c0_0] : memref<16x16xbf16, #tpu.memory_space<vmem>>, vector<16x16xbf16>
    %c0_1 = arith.constant 0 : index
    %c0_2 = arith.constant 0 : index
    %1 = vector.load %arg2[%c0_1, %c0_2] : memref<16x768xbf16, #tpu.memory_space<vmem>>, vector<16x768xbf16>
    %cst = arith.constant dense<0.000000e+00> : vector<16x768xf32>
    %2 = tpu.matmul %0, %1, %cst {dimension_numbers = #tpu.dot_dimension_numbers<[1], [0], [0], [1], [0, 0, 1, 1], [], []>} : vector<16x16xbf16>, vector<16x768xbf16>, vector<16x768xf32> -> vector<16x768xf32>
    %c0_3 = arith.constant 0 : index
    %c0_4 = arith.constant 0 : index
    %3 = vector.load %arg3[%c0_3, %c0_4] : memref<1x768xf32, #tpu.memory_space<vmem>>, vector<1x768xf32>
    %4 = vector.broadcast %3 : vector<1x768xf32> to vector<16x768xf32>
    %5 = arith.addf %2, %4 : vector<16x768xf32>
    %6 = arith.truncf %5 : vector<16x768xf32> to vector<16x768xbf16>
    %c0_5 = arith.constant 0 : index
    %c0_6 = arith.constant 0 : index
    %7 = vector.load %arg4[%c0_5, %c0_6] : memref<16x768xbf16, #tpu.memory_space<vmem>>, vector<16x768xbf16>
    tpu.vector_store %arg4[%c0_5, %c0_6], %6 {strides = array<i32>} : memref<16x768xbf16, #tpu.memory_space<vmem>>, vector<16x768xbf16>,
    return
  }
  func.func @transform_0(%arg0: i32) -> (i32, i32) {
    %c0_i32 = arith.constant 0 : i32
    %c0_i32_0 = arith.constant 0 : i32
    return %arg0, %c0_i32 : i32, i32
  }
  func.func @transform_1(%arg0: i32) -> (i32, i32) {
    %c0_i32 = arith.constant 0 : i32
    %c0_i32_0 = arith.constant 0 : i32
    %c0_i32_1 = arith.constant 0 : i32
    return %c0_i32, %c0_i32_0 : i32, i32
  }
  func.func @transform_2(%arg0: i32) -> (i32, i32) {
    %c0_i32 = arith.constant 0 : i32
    %c0_i32_0 = arith.constant 0 : i32
    %c0_i32_1 = arith.constant 0 : i32
    return %c0_i32, %c0_i32_0 : i32, i32
  }
  func.func @transform_3(%arg0: i32) -> (i32, i32) {
    %c0_i32 = arith.constant 0 : i32
    %c0_i32_0 = arith.constant 0 : i32
    return %arg0, %c0_i32 : i32, i32
  }
}

module attributes {stable_mosaic.version = 11 : i64} {
  func.func @_recur_kernel(%arg0: i32, %arg1: memref<16x384xbf16, #tpu.memory_space<vmem>>, %arg2: memref<16x384xbf16, #tpu.memory_space<vmem>>, %arg3: memref<128x768xbf16, #tpu.memory_space<vmem>>, %arg4: memref<1x128xf32, #tpu.memory_space<vmem>>, %arg5: memref<1x128xf32, #tpu.memory_space<vmem>>, %arg6: memref<16x128xbf16, #tpu.memory_space<vmem>>, %arg7: memref<16x128xbf16, #tpu.memory_space<vmem>>, %arg8: memref<16x128xf32, #tpu.memory_space<vmem>>) attributes {dimension_semantics = [#tpu.dimension_semantics<arbitrary>], iteration_bounds = array<i64: 4>, scalar_prefetch = 0 : i64, scratch_operands = 1 : i64, tpu.core_type = #tpu.core_type<tc>, window_params = [{transform_indices = @transform_0, window_bounds = array<i64: 16, 384>}, {transform_indices = @transform_1, window_bounds = array<i64: 16, 384>}, {pipeline_mode = #tpu.pipeline_mode<synchronous>, transform_indices = @transform_2, window_bounds = array<i64: 128, 768>}, {pipeline_mode = #tpu.pipeline_mode<synchronous>, transform_indices = @transform_3, window_bounds = array<i64: 1, 128>}, {pipeline_mode = #tpu.pipeline_mode<synchronous>, transform_indices = @transform_4, window_bounds = array<i64: 1, 128>}, {transform_indices = @transform_5, window_bounds = array<i64: 16, 128>}, {transform_indices = @transform_6, window_bounds = array<i64: 16, 128>}]} {
    %c0_i32 = arith.constant 0 : i32
    %0 = arith.cmpi eq, %arg0, %c0_i32 : i32
    %1 = arith.extui %0 : i1 to i32
    %c0_i32_0 = arith.constant 0 : i32
    %2 = arith.cmpi ne, %1, %c0_i32_0 : i32
    scf.if %2 {
      %cst_46 = arith.constant 0.000000e+00 : f32
      %171 = vector.broadcast %cst_46 : f32 to vector<16x128xf32>
      %c0_47 = arith.constant 0 : index
      %c0_48 = arith.constant 0 : index
      %172 = vector.load %arg8[%c0_47, %c0_48] : memref<16x128xf32, #tpu.memory_space<vmem>>, vector<16x128xf32>
      tpu.vector_store %arg8[%c0_47, %c0_48], %171 {strides = array<i32>} : memref<16x128xf32, #tpu.memory_space<vmem>>, vector<16x128xf32>,
    } else {
    }
    %c0 = arith.constant 0 : index
    %c0_1 = arith.constant 0 : index
    %3 = vector.load %arg4[%c0, %c0_1] : memref<1x128xf32, #tpu.memory_space<vmem>>, vector<1x128xf32>
    %4 = vector.shape_cast %3 : vector<1x128xf32> to vector<1x128xf32>
    %5 = vector.broadcast %4 : vector<1x128xf32> to vector<8x128xf32>
    %c0_2 = arith.constant 0 : index
    %c0_3 = arith.constant 0 : index
    %6 = vector.load %arg5[%c0_2, %c0_3] : memref<1x128xf32, #tpu.memory_space<vmem>>, vector<1x128xf32>
    %7 = vector.shape_cast %6 : vector<1x128xf32> to vector<1x128xf32>
    %8 = vector.broadcast %7 : vector<1x128xf32> to vector<8x128xf32>
    %c0_i32_4 = arith.constant 0 : i32
    %c0_5 = arith.constant 0 : index
    %c0_6 = arith.constant 0 : index
    %9 = vector.load %arg8[%c0_5, %c0_6] : memref<16x128xf32, #tpu.memory_space<vmem>>, vector<16x128xf32>
    %10 = arith.truncf %9 : vector<16x128xf32> to vector<16x128xbf16>
    %c0_7 = arith.constant 0 : index
    %c0_8 = arith.constant 0 : index
    %11 = vector.load %arg3[%c0_7, %c0_8] : memref<128x768xbf16, #tpu.memory_space<vmem>>, vector<128x768xbf16>
    %cst = arith.constant dense<0.000000e+00> : vector<16x768xf32>
    %12 = tpu.matmul %10, %11, %cst {dimension_numbers = #tpu.dot_dimension_numbers<[1], [0], [0], [1], [0, 0, 1, 1], [], []>} : vector<16x128xbf16>, vector<128x768xbf16>, vector<16x768xf32> -> vector<16x768xf32>
    %c8_i32 = arith.constant 8 : i32
    %13 = arith.muli %c0_i32_4, %c8_i32 : i32
    %14 = tpu.assume_multiple %13, 8 : i32
    %c1_i32 = arith.constant 1 : i32
    %15 = arith.subi %c1_i32, %c0_i32_4 : i32
    %c8_i32_9 = arith.constant 8 : i32
    %16 = arith.muli %15, %c8_i32_9 : i32
    %17 = tpu.assume_multiple %16, 8 : i32
    %18 = arith.index_cast %14 : i32 to index
    %c0_10 = arith.constant 0 : index
    %19 = vector.load %arg1[%18, %c0_10] : memref<16x384xbf16, #tpu.memory_space<vmem>>, vector<8x384xbf16>
    %20 = arith.extf %19 : vector<8x384xbf16> to vector<8x384xf32>
    %21 = arith.index_cast %17 : i32 to index
    %c0_11 = arith.constant 0 : index
    %22 = vector.load %arg2[%21, %c0_11] : memref<16x384xbf16, #tpu.memory_space<vmem>>, vector<8x384xbf16>
    %23 = arith.extf %22 : vector<8x384xbf16> to vector<8x384xf32>
    %24 = vector.extract_strided_slice %12 {offsets = [0, 0], sizes = [8, 384], strides = [1, 1]} : vector<16x768xf32> to vector<8x384xf32>
    %25 = vector.extract_strided_slice %12 {offsets = [8, 384], sizes = [8, 384], strides = [1, 1]} : vector<16x768xf32> to vector<8x384xf32>
    %26 = vector.extract_strided_slice %9 {offsets = [0, 0], sizes = [8, 128], strides = [1, 1]} : vector<16x128xf32> to vector<8x128xf32>
    %27 = vector.extract_strided_slice %9 {offsets = [8, 0], sizes = [8, 128], strides = [1, 1]} : vector<16x128xf32> to vector<8x128xf32>
    %28 = vector.extract_strided_slice %20 {offsets = [0, 0], sizes = [8, 128], strides = [1, 1]} : vector<8x384xf32> to vector<8x128xf32>
    %29 = vector.extract_strided_slice %24 {offsets = [0, 0], sizes = [8, 128], strides = [1, 1]} : vector<8x384xf32> to vector<8x128xf32>
    %30 = arith.addf %28, %29 : vector<8x128xf32>
    %31 = arith.negf %30 : vector<8x128xf32>
    %32 = math.exp %31 : vector<8x128xf32>
    %cst_12 = arith.constant 1.000000e+00 : f32
    %33 = vector.broadcast %cst_12 : f32 to vector<8x128xf32>
    %34 = arith.addf %33, %32 : vector<8x128xf32>
    %35 = arith.divf %33, %34 : vector<8x128xf32>
    %36 = vector.extract_strided_slice %20 {offsets = [0, 128], sizes = [8, 128], strides = [1, 1]} : vector<8x384xf32> to vector<8x128xf32>
    %37 = vector.extract_strided_slice %24 {offsets = [0, 128], sizes = [8, 128], strides = [1, 1]} : vector<8x384xf32> to vector<8x128xf32>
    %38 = arith.addf %36, %37 : vector<8x128xf32>
    %39 = arith.negf %38 : vector<8x128xf32>
    %40 = math.exp %39 : vector<8x128xf32>
    %cst_13 = arith.constant 1.000000e+00 : f32
    %41 = vector.broadcast %cst_13 : f32 to vector<8x128xf32>
    %42 = arith.addf %41, %40 : vector<8x128xf32>
    %43 = arith.divf %41, %42 : vector<8x128xf32>
    %44 = vector.extract_strided_slice %20 {offsets = [0, 256], sizes = [8, 128], strides = [1, 1]} : vector<8x384xf32> to vector<8x128xf32>
    %45 = vector.extract_strided_slice %24 {offsets = [0, 256], sizes = [8, 128], strides = [1, 1]} : vector<8x384xf32> to vector<8x128xf32>
    %46 = arith.addf %45, %5 : vector<8x128xf32>
    %47 = arith.mulf %35, %46 : vector<8x128xf32>
    %48 = arith.addf %44, %47 : vector<8x128xf32>
    %49 = math.tanh %48 : vector<8x128xf32>
    %cst_14 = arith.constant 1.000000e+00 : f32
    %50 = vector.broadcast %cst_14 : f32 to vector<8x128xf32>
    %51 = arith.subf %50, %43 : vector<8x128xf32>
    %52 = arith.mulf %51, %49 : vector<8x128xf32>
    %53 = arith.mulf %43, %26 : vector<8x128xf32>
    %54 = arith.addf %52, %53 : vector<8x128xf32>
    %55 = vector.extract_strided_slice %23 {offsets = [0, 0], sizes = [8, 128], strides = [1, 1]} : vector<8x384xf32> to vector<8x128xf32>
    %56 = vector.extract_strided_slice %25 {offsets = [0, 0], sizes = [8, 128], strides = [1, 1]} : vector<8x384xf32> to vector<8x128xf32>
    %57 = arith.addf %55, %56 : vector<8x128xf32>
    %58 = arith.negf %57 : vector<8x128xf32>
    %59 = math.exp %58 : vector<8x128xf32>
    %cst_15 = arith.constant 1.000000e+00 : f32
    %60 = vector.broadcast %cst_15 : f32 to vector<8x128xf32>
    %61 = arith.addf %60, %59 : vector<8x128xf32>
    %62 = arith.divf %60, %61 : vector<8x128xf32>
    %63 = vector.extract_strided_slice %23 {offsets = [0, 128], sizes = [8, 128], strides = [1, 1]} : vector<8x384xf32> to vector<8x128xf32>
    %64 = vector.extract_strided_slice %25 {offsets = [0, 128], sizes = [8, 128], strides = [1, 1]} : vector<8x384xf32> to vector<8x128xf32>
    %65 = arith.addf %63, %64 : vector<8x128xf32>
    %66 = arith.negf %65 : vector<8x128xf32>
    %67 = math.exp %66 : vector<8x128xf32>
    %cst_16 = arith.constant 1.000000e+00 : f32
    %68 = vector.broadcast %cst_16 : f32 to vector<8x128xf32>
    %69 = arith.addf %68, %67 : vector<8x128xf32>
    %70 = arith.divf %68, %69 : vector<8x128xf32>
    %71 = vector.extract_strided_slice %23 {offsets = [0, 256], sizes = [8, 128], strides = [1, 1]} : vector<8x384xf32> to vector<8x128xf32>
    %72 = vector.extract_strided_slice %25 {offsets = [0, 256], sizes = [8, 128], strides = [1, 1]} : vector<8x384xf32> to vector<8x128xf32>
    %73 = arith.addf %72, %8 : vector<8x128xf32>
    %74 = arith.mulf %62, %73 : vector<8x128xf32>
    %75 = arith.addf %71, %74 : vector<8x128xf32>
    %76 = math.tanh %75 : vector<8x128xf32>
    %cst_17 = arith.constant 1.000000e+00 : f32
    %77 = vector.broadcast %cst_17 : f32 to vector<8x128xf32>
    %78 = arith.subf %77, %70 : vector<8x128xf32>
    %79 = arith.mulf %78, %76 : vector<8x128xf32>
    %80 = arith.mulf %70, %27 : vector<8x128xf32>
    %81 = arith.addf %79, %80 : vector<8x128xf32>
    %c0_18 = arith.constant 0 : index
    %c0_19 = arith.constant 0 : index
    %82 = vector.load %arg8[%c0_18, %c0_19] : memref<16x128xf32, #tpu.memory_space<vmem>>, vector<8x128xf32>
    tpu.vector_store %arg8[%c0_18, %c0_19], %54 {strides = array<i32>} : memref<16x128xf32, #tpu.memory_space<vmem>>, vector<8x128xf32>,
    %c8 = arith.constant 8 : index
    %c0_20 = arith.constant 0 : index
    %83 = vector.load %arg8[%c8, %c0_20] : memref<16x128xf32, #tpu.memory_space<vmem>>, vector<8x128xf32>
    tpu.vector_store %arg8[%c8, %c0_20], %81 {strides = array<i32>} : memref<16x128xf32, #tpu.memory_space<vmem>>, vector<8x128xf32>,
    %84 = arith.truncf %54 : vector<8x128xf32> to vector<8x128xbf16>
    %85 = arith.index_cast %14 : i32 to index
    %c0_21 = arith.constant 0 : index
    %86 = vector.load %arg6[%85, %c0_21] : memref<16x128xbf16, #tpu.memory_space<vmem>>, vector<8x128xbf16>
    tpu.vector_store %arg6[%85, %c0_21], %84 {strides = array<i32>} : memref<16x128xbf16, #tpu.memory_space<vmem>>, vector<8x128xbf16>,
    %87 = arith.truncf %81 : vector<8x128xf32> to vector<8x128xbf16>
    %88 = arith.index_cast %17 : i32 to index
    %c0_22 = arith.constant 0 : index
    %89 = vector.load %arg7[%88, %c0_22] : memref<16x128xbf16, #tpu.memory_space<vmem>>, vector<8x128xbf16>
    tpu.vector_store %arg7[%88, %c0_22], %87 {strides = array<i32>} : memref<16x128xbf16, #tpu.memory_space<vmem>>, vector<8x128xbf16>,
    %c1_i32_23 = arith.constant 1 : i32
    %c0_24 = arith.constant 0 : index
    %c0_25 = arith.constant 0 : index
    %90 = vector.load %arg8[%c0_24, %c0_25] : memref<16x128xf32, #tpu.memory_space<vmem>>, vector<16x128xf32>
    %91 = arith.truncf %90 : vector<16x128xf32> to vector<16x128xbf16>
    %c0_26 = arith.constant 0 : index
    %c0_27 = arith.constant 0 : index
    %92 = vector.load %arg3[%c0_26, %c0_27] : memref<128x768xbf16, #tpu.memory_space<vmem>>, vector<128x768xbf16>
    %cst_28 = arith.constant dense<0.000000e+00> : vector<16x768xf32>
    %93 = tpu.matmul %91, %92, %cst_28 {dimension_numbers = #tpu.dot_dimension_numbers<[1], [0], [0], [1], [0, 0, 1, 1], [], []>} : vector<16x128xbf16>, vector<128x768xbf16>, vector<16x768xf32> -> vector<16x768xf32>
    %c8_i32_29 = arith.constant 8 : i32
    %94 = arith.muli %c1_i32_23, %c8_i32_29 : i32
    %95 = tpu.assume_multiple %94, 8 : i32
    %c1_i32_30 = arith.constant 1 : i32
    %96 = arith.subi %c1_i32_30, %c1_i32_23 : i32
    %c8_i32_31 = arith.constant 8 : i32
    %97 = arith.muli %96, %c8_i32_31 : i32
    %98 = tpu.assume_multiple %97, 8 : i32
    %99 = arith.index_cast %95 : i32 to index
    %c0_32 = arith.constant 0 : index
    %100 = vector.load %arg1[%99, %c0_32] : memref<16x384xbf16, #tpu.memory_space<vmem>>, vector<8x384xbf16>
    %101 = arith.extf %100 : vector<8x384xbf16> to vector<8x384xf32>
    %102 = arith.index_cast %98 : i32 to index
    %c0_33 = arith.constant 0 : index
    %103 = vector.load %arg2[%102, %c0_33] : memref<16x384xbf16, #tpu.memory_space<vmem>>, vector<8x384xbf16>
    %104 = arith.extf %103 : vector<8x384xbf16> to vector<8x384xf32>
    %105 = vector.extract_strided_slice %93 {offsets = [0, 0], sizes = [8, 384], strides = [1, 1]} : vector<16x768xf32> to vector<8x384xf32>
    %106 = vector.extract_strided_slice %93 {offsets = [8, 384], sizes = [8, 384], strides = [1, 1]} : vector<16x768xf32> to vector<8x384xf32>
    %107 = vector.extract_strided_slice %90 {offsets = [0, 0], sizes = [8, 128], strides = [1, 1]} : vector<16x128xf32> to vector<8x128xf32>
    %108 = vector.extract_strided_slice %90 {offsets = [8, 0], sizes = [8, 128], strides = [1, 1]} : vector<16x128xf32> to vector<8x128xf32>
    %109 = vector.extract_strided_slice %101 {offsets = [0, 0], sizes = [8, 128], strides = [1, 1]} : vector<8x384xf32> to vector<8x128xf32>
    %110 = vector.extract_strided_slice %105 {offsets = [0, 0], sizes = [8, 128], strides = [1, 1]} : vector<8x384xf32> to vector<8x128xf32>
    %111 = arith.addf %109, %110 : vector<8x128xf32>
    %112 = arith.negf %111 : vector<8x128xf32>
    %113 = math.exp %112 : vector<8x128xf32>
    %cst_34 = arith.constant 1.000000e+00 : f32
    %114 = vector.broadcast %cst_34 : f32 to vector<8x128xf32>
    %115 = arith.addf %114, %113 : vector<8x128xf32>
    %116 = arith.divf %114, %115 : vector<8x128xf32>
    %117 = vector.extract_strided_slice %101 {offsets = [0, 128], sizes = [8, 128], strides = [1, 1]} : vector<8x384xf32> to vector<8x128xf32>
    %118 = vector.extract_strided_slice %105 {offsets = [0, 128], sizes = [8, 128], strides = [1, 1]} : vector<8x384xf32> to vector<8x128xf32>
    %119 = arith.addf %117, %118 : vector<8x128xf32>
    %120 = arith.negf %119 : vector<8x128xf32>
    %121 = math.exp %120 : vector<8x128xf32>
    %cst_35 = arith.constant 1.000000e+00 : f32
    %122 = vector.broadcast %cst_35 : f32 to vector<8x128xf32>
    %123 = arith.addf %122, %121 : vector<8x128xf32>
    %124 = arith.divf %122, %123 : vector<8x128xf32>
    %125 = vector.extract_strided_slice %101 {offsets = [0, 256], sizes = [8, 128], strides = [1, 1]} : vector<8x384xf32> to vector<8x128xf32>
    %126 = vector.extract_strided_slice %105 {offsets = [0, 256], sizes = [8, 128], strides = [1, 1]} : vector<8x384xf32> to vector<8x128xf32>
    %127 = arith.addf %126, %5 : vector<8x128xf32>
    %128 = arith.mulf %116, %127 : vector<8x128xf32>
    %129 = arith.addf %125, %128 : vector<8x128xf32>
    %130 = math.tanh %129 : vector<8x128xf32>
    %cst_36 = arith.constant 1.000000e+00 : f32
    %131 = vector.broadcast %cst_36 : f32 to vector<8x128xf32>
    %132 = arith.subf %131, %124 : vector<8x128xf32>
    %133 = arith.mulf %132, %130 : vector<8x128xf32>
    %134 = arith.mulf %124, %107 : vector<8x128xf32>
    %135 = arith.addf %133, %134 : vector<8x128xf32>
    %136 = vector.extract_strided_slice %104 {offsets = [0, 0], sizes = [8, 128], strides = [1, 1]} : vector<8x384xf32> to vector<8x128xf32>
    %137 = vector.extract_strided_slice %106 {offsets = [0, 0], sizes = [8, 128], strides = [1, 1]} : vector<8x384xf32> to vector<8x128xf32>
    %138 = arith.addf %136, %137 : vector<8x128xf32>
    %139 = arith.negf %138 : vector<8x128xf32>
    %140 = math.exp %139 : vector<8x128xf32>
    %cst_37 = arith.constant 1.000000e+00 : f32
    %141 = vector.broadcast %cst_37 : f32 to vector<8x128xf32>
    %142 = arith.addf %141, %140 : vector<8x128xf32>
    %143 = arith.divf %141, %142 : vector<8x128xf32>
    %144 = vector.extract_strided_slice %104 {offsets = [0, 128], sizes = [8, 128], strides = [1, 1]} : vector<8x384xf32> to vector<8x128xf32>
    %145 = vector.extract_strided_slice %106 {offsets = [0, 128], sizes = [8, 128], strides = [1, 1]} : vector<8x384xf32> to vector<8x128xf32>
    %146 = arith.addf %144, %145 : vector<8x128xf32>
    %147 = arith.negf %146 : vector<8x128xf32>
    %148 = math.exp %147 : vector<8x128xf32>
    %cst_38 = arith.constant 1.000000e+00 : f32
    %149 = vector.broadcast %cst_38 : f32 to vector<8x128xf32>
    %150 = arith.addf %149, %148 : vector<8x128xf32>
    %151 = arith.divf %149, %150 : vector<8x128xf32>
    %152 = vector.extract_strided_slice %104 {offsets = [0, 256], sizes = [8, 128], strides = [1, 1]} : vector<8x384xf32> to vector<8x128xf32>
    %153 = vector.extract_strided_slice %106 {offsets = [0, 256], sizes = [8, 128], strides = [1, 1]} : vector<8x384xf32> to vector<8x128xf32>
    %154 = arith.addf %153, %8 : vector<8x128xf32>
    %155 = arith.mulf %143, %154 : vector<8x128xf32>
    %156 = arith.addf %152, %155 : vector<8x128xf32>
    %157 = math.tanh %156 : vector<8x128xf32>
    %cst_39 = arith.constant 1.000000e+00 : f32
    %158 = vector.broadcast %cst_39 : f32 to vector<8x128xf32>
    %159 = arith.subf %158, %151 : vector<8x128xf32>
    %160 = arith.mulf %159, %157 : vector<8x128xf32>
    %161 = arith.mulf %151, %108 : vector<8x128xf32>
    %162 = arith.addf %160, %161 : vector<8x128xf32>
    %c0_40 = arith.constant 0 : index
    %c0_41 = arith.constant 0 : index
    %163 = vector.load %arg8[%c0_40, %c0_41] : memref<16x128xf32, #tpu.memory_space<vmem>>, vector<8x128xf32>
    tpu.vector_store %arg8[%c0_40, %c0_41], %135 {strides = array<i32>} : memref<16x128xf32, #tpu.memory_space<vmem>>, vector<8x128xf32>,
    %c8_42 = arith.constant 8 : index
    %c0_43 = arith.constant 0 : index
    %164 = vector.load %arg8[%c8_42, %c0_43] : memref<16x128xf32, #tpu.memory_space<vmem>>, vector<8x128xf32>
    tpu.vector_store %arg8[%c8_42, %c0_43], %162 {strides = array<i32>} : memref<16x128xf32, #tpu.memory_space<vmem>>, vector<8x128xf32>,
    %165 = arith.truncf %135 : vector<8x128xf32> to vector<8x128xbf16>
    %166 = arith.index_cast %95 : i32 to index
    %c0_44 = arith.constant 0 : index
    %167 = vector.load %arg6[%166, %c0_44] : memref<16x128xbf16, #tpu.memory_space<vmem>>, vector<8x128xbf16>
    tpu.vector_store %arg6[%166, %c0_44], %165 {strides = array<i32>} : memref<16x128xbf16, #tpu.memory_space<vmem>>, vector<8x128xbf16>,
    %168 = arith.truncf %162 : vector<8x128xf32> to vector<8x128xbf16>
    %169 = arith.index_cast %98 : i32 to index
    %c0_45 = arith.constant 0 : index
    %170 = vector.load %arg7[%169, %c0_45] : memref<16x128xbf16, #tpu.memory_space<vmem>>, vector<8x128xbf16>
    tpu.vector_store %arg7[%169, %c0_45], %168 {strides = array<i32>} : memref<16x128xbf16, #tpu.memory_space<vmem>>, vector<8x128xbf16>,
    %c2_i32 = arith.constant 2 : i32
    return
  }
  func.func @transform_0(%arg0: i32) -> (i32, i32) {
    %c0_i32 = arith.constant 0 : i32
    %c0_i32_0 = arith.constant 0 : i32
    return %arg0, %c0_i32 : i32, i32
  }
  func.func @transform_1(%arg0: i32) -> (i32, i32) {
    %c3_i32 = arith.constant 3 : i32
    %0 = arith.subi %c3_i32, %arg0 : i32
    %c1_i32 = arith.constant 1 : i32
    %c0_i32 = arith.constant 0 : i32
    return %0, %c1_i32 : i32, i32
  }
  func.func @transform_2(%arg0: i32) -> (i32, i32) {
    %c0_i32 = arith.constant 0 : i32
    %c0_i32_0 = arith.constant 0 : i32
    %c0_i32_1 = arith.constant 0 : i32
    return %c0_i32, %c0_i32_0 : i32, i32
  }
  func.func @transform_3(%arg0: i32) -> (i32, i32) {
    %c0_i32 = arith.constant 0 : i32
    %c0_i32_0 = arith.constant 0 : i32
    %c0_i32_1 = arith.constant 0 : i32
    return %c0_i32, %c0_i32_0 : i32, i32
  }
  func.func @transform_4(%arg0: i32) -> (i32, i32) {
    %c0_i32 = arith.constant 0 : i32
    %c0_i32_0 = arith.constant 0 : i32
    %c0_i32_1 = arith.constant 0 : i32
    return %c0_i32, %c0_i32_0 : i32, i32
  }
  func.func @transform_5(%arg0: i32) -> (i32, i32) {
    %c0_i32 = arith.constant 0 : i32
    %c0_i32_0 = arith.constant 0 : i32
    return %arg0, %c0_i32 : i32, i32
  }
  func.func @transform_6(%arg0: i32) -> (i32, i32) {
    %c3_i32 = arith.constant 3 : i32
    %0 = arith.subi %c3_i32, %arg0 : i32
    %c0_i32 = arith.constant 0 : i32
    %c0_i32_0 = arith.constant 0 : i32
    return %0, %c0_i32 : i32, i32
  }
}

module attributes {stable_mosaic.version = 11 : i64} {
  func.func @_last_kernel(%arg0: i32, %arg1: memref<16x384xbf16, #tpu.memory_space<vmem>>, %arg2: memref<128x384xbf16, #tpu.memory_space<vmem>>, %arg3: memref<1x128xf32, #tpu.memory_space<vmem>>, %arg4: memref<8x128xbf16, #tpu.memory_space<vmem>>, %arg5: memref<8x128xbf16, #tpu.memory_space<vmem>>, %arg6: memref<128x384xbf16, #tpu.memory_space<vmem>>, %arg7: memref<128x384xbf16, #tpu.memory_space<vmem>>, %arg8: memref<1x384xf32, #tpu.memory_space<vmem>>, %arg9: memref<1x128xf32, #tpu.memory_space<vmem>>, %arg10: memref<256x1024xbf16, #tpu.memory_space<vmem>>, %arg11: memref<1x1024xf32, #tpu.memory_space<vmem>>, %arg12: memref<8x1024xf32, #tpu.memory_space<vmem>>, %arg13: memref<8x128xf32, #tpu.memory_space<vmem>>) attributes {dimension_semantics = [#tpu.dimension_semantics<arbitrary>], iteration_bounds = array<i64: 4>, scalar_prefetch = 0 : i64, scratch_operands = 1 : i64, tpu.core_type = #tpu.core_type<tc>, window_params = [{transform_indices = @transform_0, window_bounds = array<i64: 16, 384>}, {pipeline_mode = #tpu.pipeline_mode<synchronous>, transform_indices = @transform_1, window_bounds = array<i64: 128, 384>}, {pipeline_mode = #tpu.pipeline_mode<synchronous>, transform_indices = @transform_2, window_bounds = array<i64: 1, 128>}, {pipeline_mode = #tpu.pipeline_mode<synchronous>, transform_indices = @transform_3, window_bounds = array<i64: 8, 128>}, {pipeline_mode = #tpu.pipeline_mode<synchronous>, transform_indices = @transform_4, window_bounds = array<i64: 8, 128>}, {pipeline_mode = #tpu.pipeline_mode<synchronous>, transform_indices = @transform_5, window_bounds = array<i64: 128, 384>}, {pipeline_mode = #tpu.pipeline_mode<synchronous>, transform_indices = @transform_6, window_bounds = array<i64: 128, 384>}, {pipeline_mode = #tpu.pipeline_mode<synchronous>, transform_indices = @transform_7, window_bounds = array<i64: 1, 384>}, {pipeline_mode = #tpu.pipeline_mode<synchronous>, transform_indices = @transform_8, window_bounds = array<i64: 1, 128>}, {pipeline_mode = #tpu.pipeline_mode<synchronous>, transform_indices = @transform_9, window_bounds = array<i64: 256, 1024>}, {pipeline_mode = #tpu.pipeline_mode<synchronous>, transform_indices = @transform_10, window_bounds = array<i64: 1, 1024>}, {pipeline_mode = #tpu.pipeline_mode<synchronous>, transform_indices = @transform_11, window_bounds = array<i64: 8, 1024>}]} {
    %c0_i32 = arith.constant 0 : i32
    %0 = arith.cmpi eq, %arg0, %c0_i32 : i32
    %1 = arith.extui %0 : i1 to i32
    %c0_i32_0 = arith.constant 0 : i32
    %2 = arith.cmpi ne, %1, %c0_i32_0 : i32
    scf.if %2 {
      %cst_26 = arith.constant 0.000000e+00 : f32
      %83 = vector.broadcast %cst_26 : f32 to vector<8x128xf32>
      %c0_27 = arith.constant 0 : index
      %c0_28 = arith.constant 0 : index
      %84 = vector.load %arg13[%c0_27, %c0_28] : memref<8x128xf32, #tpu.memory_space<vmem>>, vector<8x128xf32>
      tpu.vector_store %arg13[%c0_27, %c0_28], %83 {strides = array<i32>} : memref<8x128xf32, #tpu.memory_space<vmem>>, vector<8x128xf32>,
    } else {
    }
    %c0 = arith.constant 0 : index
    %c0_1 = arith.constant 0 : index
    %3 = vector.load %arg3[%c0, %c0_1] : memref<1x128xf32, #tpu.memory_space<vmem>>, vector<1x128xf32>
    %4 = vector.shape_cast %3 : vector<1x128xf32> to vector<1x128xf32>
    %5 = vector.broadcast %4 : vector<1x128xf32> to vector<8x128xf32>
    %c0_i32_2 = arith.constant 0 : i32
    %c0_3 = arith.constant 0 : index
    %c0_4 = arith.constant 0 : index
    %6 = vector.load %arg13[%c0_3, %c0_4] : memref<8x128xf32, #tpu.memory_space<vmem>>, vector<8x128xf32>
    %7 = arith.truncf %6 : vector<8x128xf32> to vector<8x128xbf16>
    %c0_5 = arith.constant 0 : index
    %c0_6 = arith.constant 0 : index
    %8 = vector.load %arg2[%c0_5, %c0_6] : memref<128x384xbf16, #tpu.memory_space<vmem>>, vector<128x384xbf16>
    %cst = arith.constant dense<0.000000e+00> : vector<8x384xf32>
    %9 = tpu.matmul %7, %8, %cst {dimension_numbers = #tpu.dot_dimension_numbers<[1], [0], [0], [1], [0, 0, 1, 1], [], []>} : vector<8x128xbf16>, vector<128x384xbf16>, vector<8x384xf32> -> vector<8x384xf32>
    %c8_i32 = arith.constant 8 : i32
    %10 = arith.muli %c0_i32_2, %c8_i32 : i32
    %11 = tpu.assume_multiple %10, 8 : i32
    %12 = arith.index_cast %11 : i32 to index
    %c0_7 = arith.constant 0 : index
    %13 = vector.load %arg1[%12, %c0_7] : memref<16x384xbf16, #tpu.memory_space<vmem>>, vector<8x384xbf16>
    %14 = arith.extf %13 : vector<8x384xbf16> to vector<8x384xf32>
    %15 = vector.extract_strided_slice %14 {offsets = [0, 0], sizes = [8, 128], strides = [1, 1]} : vector<8x384xf32> to vector<8x128xf32>
    %16 = vector.extract_strided_slice %9 {offsets = [0, 0], sizes = [8, 128], strides = [1, 1]} : vector<8x384xf32> to vector<8x128xf32>
    %17 = arith.addf %15, %16 : vector<8x128xf32>
    %18 = arith.negf %17 : vector<8x128xf32>
    %19 = math.exp %18 : vector<8x128xf32>
    %cst_8 = arith.constant 1.000000e+00 : f32
    %20 = vector.broadcast %cst_8 : f32 to vector<8x128xf32>
    %21 = arith.addf %20, %19 : vector<8x128xf32>
    %22 = arith.divf %20, %21 : vector<8x128xf32>
    %23 = vector.extract_strided_slice %14 {offsets = [0, 128], sizes = [8, 128], strides = [1, 1]} : vector<8x384xf32> to vector<8x128xf32>
    %24 = vector.extract_strided_slice %9 {offsets = [0, 128], sizes = [8, 128], strides = [1, 1]} : vector<8x384xf32> to vector<8x128xf32>
    %25 = arith.addf %23, %24 : vector<8x128xf32>
    %26 = arith.negf %25 : vector<8x128xf32>
    %27 = math.exp %26 : vector<8x128xf32>
    %cst_9 = arith.constant 1.000000e+00 : f32
    %28 = vector.broadcast %cst_9 : f32 to vector<8x128xf32>
    %29 = arith.addf %28, %27 : vector<8x128xf32>
    %30 = arith.divf %28, %29 : vector<8x128xf32>
    %31 = vector.extract_strided_slice %14 {offsets = [0, 256], sizes = [8, 128], strides = [1, 1]} : vector<8x384xf32> to vector<8x128xf32>
    %32 = vector.extract_strided_slice %9 {offsets = [0, 256], sizes = [8, 128], strides = [1, 1]} : vector<8x384xf32> to vector<8x128xf32>
    %33 = arith.addf %32, %5 : vector<8x128xf32>
    %34 = arith.mulf %22, %33 : vector<8x128xf32>
    %35 = arith.addf %31, %34 : vector<8x128xf32>
    %36 = math.tanh %35 : vector<8x128xf32>
    %cst_10 = arith.constant 1.000000e+00 : f32
    %37 = vector.broadcast %cst_10 : f32 to vector<8x128xf32>
    %38 = arith.subf %37, %30 : vector<8x128xf32>
    %39 = arith.mulf %38, %36 : vector<8x128xf32>
    %40 = arith.mulf %30, %6 : vector<8x128xf32>
    %41 = arith.addf %39, %40 : vector<8x128xf32>
    %c0_11 = arith.constant 0 : index
    %c0_12 = arith.constant 0 : index
    %42 = vector.load %arg13[%c0_11, %c0_12] : memref<8x128xf32, #tpu.memory_space<vmem>>, vector<8x128xf32>
    tpu.vector_store %arg13[%c0_11, %c0_12], %41 {strides = array<i32>} : memref<8x128xf32, #tpu.memory_space<vmem>>, vector<8x128xf32>,
    %c1_i32 = arith.constant 1 : i32
    %c0_13 = arith.constant 0 : index
    %c0_14 = arith.constant 0 : index
    %43 = vector.load %arg13[%c0_13, %c0_14] : memref<8x128xf32, #tpu.memory_space<vmem>>, vector<8x128xf32>
    %44 = arith.truncf %43 : vector<8x128xf32> to vector<8x128xbf16>
    %c0_15 = arith.constant 0 : index
    %c0_16 = arith.constant 0 : index
    %45 = vector.load %arg2[%c0_15, %c0_16] : memref<128x384xbf16, #tpu.memory_space<vmem>>, vector<128x384xbf16>
    %cst_17 = arith.constant dense<0.000000e+00> : vector<8x384xf32>
    %46 = tpu.matmul %44, %45, %cst_17 {dimension_numbers = #tpu.dot_dimension_numbers<[1], [0], [0], [1], [0, 0, 1, 1], [], []>} : vector<8x128xbf16>, vector<128x384xbf16>, vector<8x384xf32> -> vector<8x384xf32>
    %c8_i32_18 = arith.constant 8 : i32
    %47 = arith.muli %c1_i32, %c8_i32_18 : i32
    %48 = tpu.assume_multiple %47, 8 : i32
    %49 = arith.index_cast %48 : i32 to index
    %c0_19 = arith.constant 0 : index
    %50 = vector.load %arg1[%49, %c0_19] : memref<16x384xbf16, #tpu.memory_space<vmem>>, vector<8x384xbf16>
    %51 = arith.extf %50 : vector<8x384xbf16> to vector<8x384xf32>
    %52 = vector.extract_strided_slice %51 {offsets = [0, 0], sizes = [8, 128], strides = [1, 1]} : vector<8x384xf32> to vector<8x128xf32>
    %53 = vector.extract_strided_slice %46 {offsets = [0, 0], sizes = [8, 128], strides = [1, 1]} : vector<8x384xf32> to vector<8x128xf32>
    %54 = arith.addf %52, %53 : vector<8x128xf32>
    %55 = arith.negf %54 : vector<8x128xf32>
    %56 = math.exp %55 : vector<8x128xf32>
    %cst_20 = arith.constant 1.000000e+00 : f32
    %57 = vector.broadcast %cst_20 : f32 to vector<8x128xf32>
    %58 = arith.addf %57, %56 : vector<8x128xf32>
    %59 = arith.divf %57, %58 : vector<8x128xf32>
    %60 = vector.extract_strided_slice %51 {offsets = [0, 128], sizes = [8, 128], strides = [1, 1]} : vector<8x384xf32> to vector<8x128xf32>
    %61 = vector.extract_strided_slice %46 {offsets = [0, 128], sizes = [8, 128], strides = [1, 1]} : vector<8x384xf32> to vector<8x128xf32>
    %62 = arith.addf %60, %61 : vector<8x128xf32>
    %63 = arith.negf %62 : vector<8x128xf32>
    %64 = math.exp %63 : vector<8x128xf32>
    %cst_21 = arith.constant 1.000000e+00 : f32
    %65 = vector.broadcast %cst_21 : f32 to vector<8x128xf32>
    %66 = arith.addf %65, %64 : vector<8x128xf32>
    %67 = arith.divf %65, %66 : vector<8x128xf32>
    %68 = vector.extract_strided_slice %51 {offsets = [0, 256], sizes = [8, 128], strides = [1, 1]} : vector<8x384xf32> to vector<8x128xf32>
    %69 = vector.extract_strided_slice %46 {offsets = [0, 256], sizes = [8, 128], strides = [1, 1]} : vector<8x384xf32> to vector<8x128xf32>
    %70 = arith.addf %69, %5 : vector<8x128xf32>
    %71 = arith.mulf %59, %70 : vector<8x128xf32>
    %72 = arith.addf %68, %71 : vector<8x128xf32>
    %73 = math.tanh %72 : vector<8x128xf32>
    %cst_22 = arith.constant 1.000000e+00 : f32
    %74 = vector.broadcast %cst_22 : f32 to vector<8x128xf32>
    %75 = arith.subf %74, %67 : vector<8x128xf32>
    %76 = arith.mulf %75, %73 : vector<8x128xf32>
    %77 = arith.mulf %67, %43 : vector<8x128xf32>
    %78 = arith.addf %76, %77 : vector<8x128xf32>
    %c0_23 = arith.constant 0 : index
    %c0_24 = arith.constant 0 : index
    %79 = vector.load %arg13[%c0_23, %c0_24] : memref<8x128xf32, #tpu.memory_space<vmem>>, vector<8x128xf32>
    tpu.vector_store %arg13[%c0_23, %c0_24], %78 {strides = array<i32>} : memref<8x128xf32, #tpu.memory_space<vmem>>, vector<8x128xf32>,
    %c2_i32 = arith.constant 2 : i32
    %c3_i32 = arith.constant 3 : i32
    %80 = arith.cmpi eq, %arg0, %c3_i32 : i32
    %81 = arith.extui %80 : i1 to i32
    %c0_i32_25 = arith.constant 0 : i32
    %82 = arith.cmpi ne, %81, %c0_i32_25 : i32
    scf.if %82 {
      %c0_26 = arith.constant 0 : index
      %c0_27 = arith.constant 0 : index
      %83 = vector.load %arg13[%c0_26, %c0_27] : memref<8x128xf32, #tpu.memory_space<vmem>>, vector<8x128xf32>
      %c0_28 = arith.constant 0 : index
      %c0_29 = arith.constant 0 : index
      %84 = vector.load %arg4[%c0_28, %c0_29] : memref<8x128xbf16, #tpu.memory_space<vmem>>, vector<8x128xbf16>
      %c0_30 = arith.constant 0 : index
      %c0_31 = arith.constant 0 : index
      %85 = vector.load %arg6[%c0_30, %c0_31] : memref<128x384xbf16, #tpu.memory_space<vmem>>, vector<128x384xbf16>
      %cst_32 = arith.constant dense<0.000000e+00> : vector<8x384xf32>
      %86 = tpu.matmul %84, %85, %cst_32 {dimension_numbers = #tpu.dot_dimension_numbers<[1], [0], [0], [1], [0, 0, 1, 1], [], []>} : vector<8x128xbf16>, vector<128x384xbf16>, vector<8x384xf32> -> vector<8x384xf32>
      %c0_33 = arith.constant 0 : index
      %c0_34 = arith.constant 0 : index
      %87 = vector.load %arg5[%c0_33, %c0_34] : memref<8x128xbf16, #tpu.memory_space<vmem>>, vector<8x128xbf16>
      %c0_35 = arith.constant 0 : index
      %c0_36 = arith.constant 0 : index
      %88 = vector.load %arg7[%c0_35, %c0_36] : memref<128x384xbf16, #tpu.memory_space<vmem>>, vector<128x384xbf16>
      %cst_37 = arith.constant dense<0.000000e+00> : vector<8x384xf32>
      %89 = tpu.matmul %87, %88, %cst_37 {dimension_numbers = #tpu.dot_dimension_numbers<[1], [0], [0], [1], [0, 0, 1, 1], [], []>} : vector<8x128xbf16>, vector<128x384xbf16>, vector<8x384xf32> -> vector<8x384xf32>
      %90 = arith.addf %86, %89 : vector<8x384xf32>
      %c0_38 = arith.constant 0 : index
      %c0_39 = arith.constant 0 : index
      %91 = vector.load %arg8[%c0_38, %c0_39] : memref<1x384xf32, #tpu.memory_space<vmem>>, vector<1x384xf32>
      %92 = vector.broadcast %91 : vector<1x384xf32> to vector<8x384xf32>
      %93 = arith.addf %90, %92 : vector<8x384xf32>
      %94 = vector.extract_strided_slice %93 {offsets = [0, 0], sizes = [8, 128], strides = [1, 1]} : vector<8x384xf32> to vector<8x128xf32>
      %95 = arith.negf %94 : vector<8x128xf32>
      %96 = math.exp %95 : vector<8x128xf32>
      %cst_40 = arith.constant 1.000000e+00 : f32
      %97 = vector.broadcast %cst_40 : f32 to vector<8x128xf32>
      %98 = arith.addf %97, %96 : vector<8x128xf32>
      %99 = arith.divf %97, %98 : vector<8x128xf32>
      %100 = vector.extract_strided_slice %93 {offsets = [0, 128], sizes = [8, 128], strides = [1, 1]} : vector<8x384xf32> to vector<8x128xf32>
      %101 = arith.negf %100 : vector<8x128xf32>
      %102 = math.exp %101 : vector<8x128xf32>
      %cst_41 = arith.constant 1.000000e+00 : f32
      %103 = vector.broadcast %cst_41 : f32 to vector<8x128xf32>
      %104 = arith.addf %103, %102 : vector<8x128xf32>
      %105 = arith.divf %103, %104 : vector<8x128xf32>
      %106 = vector.extract_strided_slice %93 {offsets = [0, 256], sizes = [8, 128], strides = [1, 1]} : vector<8x384xf32> to vector<8x128xf32>
      %c0_42 = arith.constant 0 : index
      %c0_43 = arith.constant 0 : index
      %107 = vector.load %arg9[%c0_42, %c0_43] : memref<1x128xf32, #tpu.memory_space<vmem>>, vector<1x128xf32>
      %108 = vector.broadcast %107 : vector<1x128xf32> to vector<8x128xf32>
      %109 = arith.mulf %99, %108 : vector<8x128xf32>
      %110 = arith.addf %106, %109 : vector<8x128xf32>
      %111 = math.tanh %110 : vector<8x128xf32>
      %cst_44 = arith.constant 1.000000e+00 : f32
      %112 = vector.broadcast %cst_44 : f32 to vector<8x128xf32>
      %113 = arith.subf %112, %105 : vector<8x128xf32>
      %114 = arith.mulf %113, %111 : vector<8x128xf32>
      %115 = arith.truncf %83 : vector<8x128xf32> to vector<8x128xbf16>
      %c0_45 = arith.constant 0 : index
      %c0_46 = arith.constant 0 : index
      %116 = vector.load %arg10[%c0_45, %c0_46] : memref<256x1024xbf16, #tpu.memory_space<vmem>>, vector<128x1024xbf16>
      %cst_47 = arith.constant dense<0.000000e+00> : vector<8x1024xf32>
      %117 = tpu.matmul %115, %116, %cst_47 {dimension_numbers = #tpu.dot_dimension_numbers<[1], [0], [0], [1], [0, 0, 1, 1], [], []>} : vector<8x128xbf16>, vector<128x1024xbf16>, vector<8x1024xf32> -> vector<8x1024xf32>
      %118 = arith.truncf %114 : vector<8x128xf32> to vector<8x128xbf16>
      %c128 = arith.constant 128 : index
      %c0_48 = arith.constant 0 : index
      %119 = vector.load %arg10[%c128, %c0_48] : memref<256x1024xbf16, #tpu.memory_space<vmem>>, vector<128x1024xbf16>
      %cst_49 = arith.constant dense<0.000000e+00> : vector<8x1024xf32>
      %120 = tpu.matmul %118, %119, %cst_49 {dimension_numbers = #tpu.dot_dimension_numbers<[1], [0], [0], [1], [0, 0, 1, 1], [], []>} : vector<8x128xbf16>, vector<128x1024xbf16>, vector<8x1024xf32> -> vector<8x1024xf32>
      %121 = arith.addf %117, %120 : vector<8x1024xf32>
      %c0_50 = arith.constant 0 : index
      %c0_51 = arith.constant 0 : index
      %122 = vector.load %arg11[%c0_50, %c0_51] : memref<1x1024xf32, #tpu.memory_space<vmem>>, vector<1x1024xf32>
      %123 = vector.broadcast %122 : vector<1x1024xf32> to vector<8x1024xf32>
      %124 = arith.addf %121, %123 : vector<8x1024xf32>
      %c0_52 = arith.constant 0 : index
      %c0_53 = arith.constant 0 : index
      %125 = vector.load %arg12[%c0_52, %c0_53] : memref<8x1024xf32, #tpu.memory_space<vmem>>, vector<8x1024xf32>
      tpu.vector_store %arg12[%c0_52, %c0_53], %124 {strides = array<i32>} : memref<8x1024xf32, #tpu.memory_space<vmem>>, vector<8x1024xf32>,
    } else {
    }
    return
  }
  func.func @transform_0(%arg0: i32) -> (i32, i32) {
    %c0_i32 = arith.constant 0 : i32
    %c0_i32_0 = arith.constant 0 : i32
    return %arg0, %c0_i32 : i32, i32
  }
  func.func @transform_1(%arg0: i32) -> (i32, i32) {
    %c0_i32 = arith.constant 0 : i32
    %c0_i32_0 = arith.constant 0 : i32
    %c0_i32_1 = arith.constant 0 : i32
    return %c0_i32, %c0_i32_0 : i32, i32
  }
  func.func @transform_2(%arg0: i32) -> (i32, i32) {
    %c0_i32 = arith.constant 0 : i32
    %c0_i32_0 = arith.constant 0 : i32
    %c0_i32_1 = arith.constant 0 : i32
    return %c0_i32, %c0_i32_0 : i32, i32
  }
  func.func @transform_3(%arg0: i32) -> (i32, i32) {
    %c0_i32 = arith.constant 0 : i32
    %c0_i32_0 = arith.constant 0 : i32
    %c0_i32_1 = arith.constant 0 : i32
    return %c0_i32, %c0_i32_0 : i32, i32
  }
  func.func @transform_4(%arg0: i32) -> (i32, i32) {
    %c0_i32 = arith.constant 0 : i32
    %c0_i32_0 = arith.constant 0 : i32
    %c0_i32_1 = arith.constant 0 : i32
    return %c0_i32, %c0_i32_0 : i32, i32
  }
  func.func @transform_5(%arg0: i32) -> (i32, i32) {
    %c0_i32 = arith.constant 0 : i32
    %c0_i32_0 = arith.constant 0 : i32
    %c0_i32_1 = arith.constant 0 : i32
    return %c0_i32, %c0_i32_0 : i32, i32
  }
  func.func @transform_6(%arg0: i32) -> (i32, i32) {
    %c0_i32 = arith.constant 0 : i32
    %c0_i32_0 = arith.constant 0 : i32
    %c0_i32_1 = arith.constant 0 : i32
    return %c0_i32, %c0_i32_0 : i32, i32
  }
  func.func @transform_7(%arg0: i32) -> (i32, i32) {
    %c0_i32 = arith.constant 0 : i32
    %c0_i32_0 = arith.constant 0 : i32
    %c0_i32_1 = arith.constant 0 : i32
    return %c0_i32, %c0_i32_0 : i32, i32
  }
  func.func @transform_8(%arg0: i32) -> (i32, i32) {
    %c0_i32 = arith.constant 0 : i32
    %c0_i32_0 = arith.constant 0 : i32
    %c0_i32_1 = arith.constant 0 : i32
    return %c0_i32, %c0_i32_0 : i32, i32
  }
  func.func @transform_9(%arg0: i32) -> (i32, i32) {
    %c0_i32 = arith.constant 0 : i32
    %c0_i32_0 = arith.constant 0 : i32
    %c0_i32_1 = arith.constant 0 : i32
    return %c0_i32, %c0_i32_0 : i32, i32
  }
  func.func @transform_10(%arg0: i32) -> (i32, i32) {
    %c0_i32 = arith.constant 0 : i32
    %c0_i32_0 = arith.constant 0 : i32
    %c0_i32_1 = arith.constant 0 : i32
    return %c0_i32, %c0_i32_0 : i32, i32
  }
  func.func @transform_11(%arg0: i32) -> (i32, i32) {
    %c0_i32 = arith.constant 0 : i32
    %c0_i32_0 = arith.constant 0 : i32
    %c0_i32_1 = arith.constant 0 : i32
    return %c0_i32, %c0_i32_0 : i32, i32
  }
}

module attributes {stable_mosaic.version = 11 : i64} {
  func.func @_proj_kernel(%arg0: i32, %arg1: memref<16x128xbf16, #tpu.memory_space<vmem>>, %arg2: memref<16x128xbf16, #tpu.memory_space<vmem>>, %arg3: memref<128x384xbf16, #tpu.memory_space<vmem>>, %arg4: memref<128x384xbf16, #tpu.memory_space<vmem>>, %arg5: memref<1x384xf32, #tpu.memory_space<vmem>>, %arg6: memref<16x384xbf16, #tpu.memory_space<vmem>>) attributes {dimension_semantics = [#tpu.dimension_semantics<parallel>], iteration_bounds = array<i64: 4>, scalar_prefetch = 0 : i64, scratch_operands = 0 : i64, tpu.core_type = #tpu.core_type<tc>, window_params = [{transform_indices = @transform_0, window_bounds = array<i64: 16, 128>}, {transform_indices = @transform_1, window_bounds = array<i64: 16, 128>}, {pipeline_mode = #tpu.pipeline_mode<synchronous>, transform_indices = @transform_2, window_bounds = array<i64: 128, 384>}, {pipeline_mode = #tpu.pipeline_mode<synchronous>, transform_indices = @transform_3, window_bounds = array<i64: 128, 384>}, {pipeline_mode = #tpu.pipeline_mode<synchronous>, transform_indices = @transform_4, window_bounds = array<i64: 1, 384>}, {transform_indices = @transform_5, window_bounds = array<i64: 16, 384>}]} {
    %c0 = arith.constant 0 : index
    %c0_0 = arith.constant 0 : index
    %0 = vector.load %arg1[%c0, %c0_0] : memref<16x128xbf16, #tpu.memory_space<vmem>>, vector<16x128xbf16>
    %c0_1 = arith.constant 0 : index
    %c0_2 = arith.constant 0 : index
    %1 = vector.load %arg3[%c0_1, %c0_2] : memref<128x384xbf16, #tpu.memory_space<vmem>>, vector<128x384xbf16>
    %cst = arith.constant dense<0.000000e+00> : vector<16x384xf32>
    %2 = tpu.matmul %0, %1, %cst {dimension_numbers = #tpu.dot_dimension_numbers<[1], [0], [0], [1], [0, 0, 1, 1], [], []>} : vector<16x128xbf16>, vector<128x384xbf16>, vector<16x384xf32> -> vector<16x384xf32>
    %c0_3 = arith.constant 0 : index
    %c0_4 = arith.constant 0 : index
    %3 = vector.load %arg2[%c0_3, %c0_4] : memref<16x128xbf16, #tpu.memory_space<vmem>>, vector<16x128xbf16>
    %c0_5 = arith.constant 0 : index
    %c0_6 = arith.constant 0 : index
    %4 = vector.load %arg4[%c0_5, %c0_6] : memref<128x384xbf16, #tpu.memory_space<vmem>>, vector<128x384xbf16>
    %cst_7 = arith.constant dense<0.000000e+00> : vector<16x384xf32>
    %5 = tpu.matmul %3, %4, %cst_7 {dimension_numbers = #tpu.dot_dimension_numbers<[1], [0], [0], [1], [0, 0, 1, 1], [], []>} : vector<16x128xbf16>, vector<128x384xbf16>, vector<16x384xf32> -> vector<16x384xf32>
    %6 = arith.addf %2, %5 : vector<16x384xf32>
    %c0_8 = arith.constant 0 : index
    %c0_9 = arith.constant 0 : index
    %7 = vector.load %arg5[%c0_8, %c0_9] : memref<1x384xf32, #tpu.memory_space<vmem>>, vector<1x384xf32>
    %8 = vector.broadcast %7 : vector<1x384xf32> to vector<16x384xf32>
    %9 = arith.addf %6, %8 : vector<16x384xf32>
    %10 = arith.truncf %9 : vector<16x384xf32> to vector<16x384xbf16>
    %c0_10 = arith.constant 0 : index
    %c0_11 = arith.constant 0 : index
    %11 = vector.load %arg6[%c0_10, %c0_11] : memref<16x384xbf16, #tpu.memory_space<vmem>>, vector<16x384xbf16>
    tpu.vector_store %arg6[%c0_10, %c0_11], %10 {strides = array<i32>} : memref<16x384xbf16, #tpu.memory_space<vmem>>, vector<16x384xbf16>,
    return
  }
  func.func @transform_0(%arg0: i32) -> (i32, i32) {
    %c0_i32 = arith.constant 0 : i32
    %c0_i32_0 = arith.constant 0 : i32
    return %arg0, %c0_i32 : i32, i32
  }
  func.func @transform_1(%arg0: i32) -> (i32, i32) {
    %c0_i32 = arith.constant 0 : i32
    %c0_i32_0 = arith.constant 0 : i32
    return %arg0, %c0_i32 : i32, i32
  }
  func.func @transform_2(%arg0: i32) -> (i32, i32) {
    %c0_i32 = arith.constant 0 : i32
    %c0_i32_0 = arith.constant 0 : i32
    %c0_i32_1 = arith.constant 0 : i32
    return %c0_i32, %c0_i32_0 : i32, i32
  }
  func.func @transform_3(%arg0: i32) -> (i32, i32) {
    %c0_i32 = arith.constant 0 : i32
    %c0_i32_0 = arith.constant 0 : i32
    %c0_i32_1 = arith.constant 0 : i32
    return %c0_i32, %c0_i32_0 : i32, i32
  }
  func.func @transform_4(%arg0: i32) -> (i32, i32) {
    %c0_i32 = arith.constant 0 : i32
    %c0_i32_0 = arith.constant 0 : i32
    %c0_i32_1 = arith.constant 0 : i32
    return %c0_i32, %c0_i32_0 : i32, i32
  }
  func.func @transform_5(%arg0: i32) -> (i32, i32) {
    %c0_i32 = arith.constant 0 : i32
    %c0_i32_0 = arith.constant 0 : i32
    return %arg0, %c0_i32 : i32, i32
  }
}

</mosaic_0001>

<llo_original>
// kernel: gru_rnn_forward.4
$region0: #{gru_rnn_forward.4}
  #allocation0 [shape = 'u32[]', space=smem, size = 0x4, offset = 0x4, fixed_abs, tag = 'smem constant byte address 0x4 - core index']
  #allocation1 [shape = 'u32[144,128]{1,0:T(1,128)}', space=vmem, size = 0x12000, scoped, tag = 'internal scratch']
  %s0 = inlined_call_operand.vmem [shape: bf16[64,16], index: 0, kind: input, shape index: {}]
  %s1 = inlined_call_operand.hbm [shape: bf16[16,768], index: 1, kind: input, shape index: {}]
  %s2 = inlined_call_operand.hbm [shape: f32[1,768], index: 2, kind: input, shape index: {}]
  %s3 = inlined_call_operand.vmem [shape: bf16[64,768], index: 3, kind: output, shape index: {}]
  %s4 = sld [smem:[#allocation0]]
  $region53: #{gru_rnn_forward.4} parent=0
    _
  %s6 = ssub.s32 1, %s4
  %s7 = scalar_select 0, %s6, %s4
  $region1: #{gru_rnn_forward.4} parent=0
    #allocation2 [shape = 'u8[24576]{0}', space=vmem, size = 0x6000, scoped, tag = 'input window, operand 1, single buffered']
    #allocation3 [shape = 's32[2]{0}', space=sflag, size = 0x8, scoped, tag = 'scoped memory for gru_rnn_forward.4']
    #allocation4 [shape = 'u8[3072]{0}', space=vmem, size = 0xc00, scoped, tag = 'input window, operand 2, single buffered']
    #allocation5 [shape = 's32[1]{0}', space=sflag, size = 0x4, scoped, tag = 'scoped memory for gru_rnn_forward.4']
    %8 = vsyncpa [#allocation3], 0
    %9 = vsyncpa [#allocation5], 0
    loop: start=0, step=1, limit=6
    $region2: #{gru_rnn_forward.4} parent=1 // loop_pre_header
      _
    $region3: #{gru_rnn_forward.4} parent=1 // loop_header
      %s11 = sphi 0, %s15
      %p12 = scmp.ge.s32.totalorder %s11, 6
      %s21 = sphi 0, %s23
      %s24 = sphi 0, %s21
      %s25 = sphi 0, %s24
      %s41 = sphi 0, %s25
      %s45 = sphi 0, %s45
      %s47 = sphi 0, %s45
      %s48 = sphi 0, %s47
      %s62 = sphi 0, %s48
      %s66 = sphi 0, %s66
      %s68 = sphi 0, %s66
      %s69 = sphi 0, %s68
      %s83 = sphi 0, %s69
      %s89 = sphi 0, %s91
      %s92 = sphi 0, %s89
      %s93 = sphi 0, %s92
      %s109 = sphi 0, %s93
    $region4: #{gru_rnn_forward.4} parent=1 // loop_header_branch
      %14 = sbr.rel (%p12) target = $region8
    $region5: #{gru_rnn_forward.4} parent=1 // loop_body
      %s16 = ssub.s32 %s11, 1
      %s17 = ssub.s32 %s11, 2
      %s18 = sadd.s32 %s11, 1
      %s19 = ssub.s32 %s11, %s18
      %p20 = scmp.eq.s32.totalorder %s19, 0
      %s22 = sadd.s32 %s21, 1
      %s23 = scalar_select %p20, %s21, %s22
      %p26 = pneg %p20
      %p27 = scmp.eq.s32.totalorder %s11, 3
      %p28 = por %p26, %p27
      %p29 = scmp.ne.s32.totalorder %s21, %s24
      %p30 = scmp.eq.s32.totalorder %s11, 0
      %p31 = por %p29, %p30
      %p32 = scmp.ne.s32.totalorder %s21, %s24
      %p33 = scmp.eq.s32.totalorder %s16, 3
      %p34 = por %p32, %p33
      %p35 = scmp.ne.s32.totalorder %s24, %s25
      %p36 = scmp.eq.s32.totalorder %s16, 0
      %p37 = por %p35, %p36
      %p38 = scmp.ne.s32.totalorder %s24, %s25
      %p39 = scmp.eq.s32.totalorder %s17, 3
      %p40 = por %p38, %p39
      %p42 = scmp.ne.s32.totalorder %s25, %s41
      %p43 = scmp.eq.s32.totalorder %s17, 0
      %p44 = por %p42, %p43
      %s46 = sadd.s32 %s45, 1
      %p49 = scmp.eq.s32.totalorder %s11, 3
      %p50 = scmp.ne.s32.totalorder %s45, %s47
      %p51 = scmp.eq.s32.totalorder %s11, 0
      %p52 = por %p50, %p51
      %p53 = scmp.ne.s32.totalorder %s45, %s47
      %p54 = scmp.eq.s32.totalorder %s16, 3
      %p55 = por %p53, %p54
      %p56 = scmp.ne.s32.totalorder %s47, %s48
      %p57 = scmp.eq.s32.totalorder %s16, 0
      %p58 = por %p56, %p57
      %p59 = scmp.ne.s32.totalorder %s47, %s48
      %p60 = scmp.eq.s32.totalorder %s17, 3
      %p61 = por %p59, %p60
      %p63 = scmp.ne.s32.totalorder %s48, %s62
      %p64 = scmp.eq.s32.totalorder %s17, 0
      %p65 = por %p63, %p64
      %s67 = sadd.s32 %s66, 1
      %p70 = scmp.eq.s32.totalorder %s11, 3
      %p71 = scmp.ne.s32.totalorder %s66, %s68
      %p72 = scmp.eq.s32.totalorder %s11, 0
      %p73 = por %p71, %p72
      %p74 = scmp.ne.s32.totalorder %s66, %s68
      %p75 = scmp.eq.s32.totalorder %s16, 3
      %p76 = por %p74, %p75
      %p77 = scmp.ne.s32.totalorder %s68, %s69
      %p78 = scmp.eq.s32.totalorder %s16, 0
      %p79 = por %p77, %p78
      %p80 = scmp.ne.s32.totalorder %s68, %s69
      %p81 = scmp.eq.s32.totalorder %s17, 3
      %p82 = por %p80, %p81
      %p84 = scmp.ne.s32.totalorder %s69, %s83
      %p85 = scmp.eq.s32.totalorder %s17, 0
      %p86 = por %p84, %p85
      %s87 = ssub.s32 %s11, %s18
      %p88 = scmp.eq.s32.totalorder %s87, 0
      %s90 = sadd.s32 %s89, 1
      %s91 = scalar_select %p88, %s89, %s90
      %p94 = pneg %p88
      %p95 = scmp.eq.s32.totalorder %s11, 3
      %p96 = por %p94, %p95
      %p97 = scmp.ne.s32.totalorder %s89, %s92
      %p98 = scmp.eq.s32.totalorder %s11, 0
      %p99 = por %p97, %p98
      %p100 = scmp.ne.s32.totalorder %s89, %s92
      %p101 = scmp.eq.s32.totalorder %s16, 3
      %p102 = por %p100, %p101
      %p103 = scmp.ne.s32.totalorder %s92, %s93
      %p104 = scmp.eq.s32.totalorder %s16, 0
      %p105 = por %p103, %p104
      %p106 = scmp.ne.s32.totalorder %s92, %s93
      %p107 = scmp.eq.s32.totalorder %s17, 3
      %p108 = por %p106, %p107
      %p110 = scmp.ne.s32.totalorder %s93, %s109
      %p111 = scmp.eq.s32.totalorder %s17, 0
      %p112 = por %p110, %p111
      %p113 = scmp.le.s32.totalorder 1, %s11
      %p114 = scmp.lt.s32.totalorder %s11, 5
      %p115 = pnand %p113, %p114
      %p116 = pneg %p115
      // Predicated region
      $region9: #{gru_rnn_forward.4} parent=5 // pred_check
        _
      $region10: #{gru_rnn_forward.4} parent=5 // pred_check_branch
        %118 = sbr.rel (%p115) target = $region12
      $region11: #{gru_rnn_forward.4} parent=5 // pred_region
        %s119 = ssub.s32 %s11, 1
        // Predicated region
        $region13: #{gru_rnn_forward.4} parent=11 // pred_check
          %p120 = pneg %p58
        $region14: #{gru_rnn_forward.4} parent=11 // pred_check_branch
          %122 = sbr.rel (%p120) target = $region16
        $region15: #{gru_rnn_forward.4} parent=11 // pred_region
          %s124 = ssub.s32 768, 768
          %125 = vsyncadd [#allocation3], %s124
          %s126 = sshll.u32 [#allocation2], 4
          %s127 = int_to_ptr.vmem [resolvable:$true] %s126
          %132 = dma.hbm_to_vmem [thread:$0]  %s1, 768, %s127, [#allocation3], 384, 384, 24
        $region16: #{gru_rnn_forward.4} parent=11 // pred_fallthru
          _
        // Predicated region
        $region17: #{gru_rnn_forward.4} parent=11 // pred_check
          %p133 = pneg %p79
        $region18: #{gru_rnn_forward.4} parent=11 // pred_check_branch
          %135 = sbr.rel (%p133) target = $region20
        $region19: #{gru_rnn_forward.4} parent=11 // pred_region
          %s137 = ssub.s32 96, 96
          %138 = vsyncadd [#allocation5], %s137
          %s140 = sshll.u32 [#allocation4], 4
          %s141 = int_to_ptr.vmem [resolvable:$true] %s140
          %143 = dma.hbm_to_vmem [thread:$0]  %s2, 96, %s141, [#allocation5]
        $region20: #{gru_rnn_forward.4} parent=11 // pred_fallthru
          _
      $region12: #{gru_rnn_forward.4} parent=5 // pred_fallthru
        _
      %p144 = scmp.lt.s32.totalorder %s11, 4
      // Predicated region
      $region21: #{gru_rnn_forward.4} parent=5 // pred_check
        %p145 = pneg %p144
      $region22: #{gru_rnn_forward.4} parent=5 // pred_check_branch
        %147 = sbr.rel (%p145) target = $region24
      $region23: #{gru_rnn_forward.4} parent=5 // pred_region
        // Predicated region
        $region25: #{gru_rnn_forward.4} parent=23 // pred_check
          %p148 = pneg %p31
        $region26: #{gru_rnn_forward.4} parent=23 // pred_check_branch
          %150 = sbr.rel (%p148) target = $region28
        $region27: #{gru_rnn_forward.4} parent=23 // pred_region
          %s151 = smul.u32 2, %s11
          %p152 = scmp.lt.s32.totalorder %s151, 7
          %s153 = scalar_select %p152, %s151, 7
          %s154 = smul.addr %s153, 4
          %s155 = scalar_lea.vmem %s0, %s154
          %s156 = smul.u32 2, %s11
        $region28: #{gru_rnn_forward.4} parent=23 // pred_fallthru
          _
      $region24: #{gru_rnn_forward.4} parent=5 // pred_fallthru
        _
      %p157 = scmp.le.s32.totalorder 1, %s11
      %p158 = scmp.lt.s32.totalorder %s11, 5
      %p159 = pnand %p157, %p158
      %p160 = pneg %p159
      // Predicated region
      $region29: #{gru_rnn_forward.4} parent=5 // pred_check
        _
      $region30: #{gru_rnn_forward.4} parent=5 // pred_check_branch
        %162 = sbr.rel (%p159) target = $region32
      $region31: #{gru_rnn_forward.4} parent=5 // pred_region
        %s163 = ssub.s32 %s11, 1
        // Predicated region
        $region33: #{gru_rnn_forward.4} parent=31 // pred_check
          %p164 = pneg %p58
        $region34: #{gru_rnn_forward.4} parent=31 // pred_check_branch
          %166 = sbr.rel (%p164) target = $region36
        $region35: #{gru_rnn_forward.4} parent=31 // pred_region
          %167 = dma.done [#allocation3], 768
        $region36: #{gru_rnn_forward.4} parent=31 // pred_fallthru
          _
        // Predicated region
        $region37: #{gru_rnn_forward.4} parent=31 // pred_check
          %p168 = pneg %p79
        $region38: #{gru_rnn_forward.4} parent=31 // pred_check_branch
          %170 = sbr.rel (%p168) target = $region40
        $region39: #{gru_rnn_forward.4} parent=31 // pred_region
          %171 = dma.done [#allocation5], 96
        $region40: #{gru_rnn_forward.4} parent=31 // pred_fallthru
          _
        %s172 = smul.u32 2, %s16
        %p173 = scmp.lt.s32.totalorder %s172, 7
        %s174 = scalar_select %p173, %s172, 7
        %s175 = smul.addr %s174, 4
        %s176 = scalar_lea.vmem %s0, %s175
        %p177 = pneg %p37
        %p178 = pneg %p34
        %p179 = pneg %p58
        %p180 = pneg %p55
        %p181 = pneg %p79
        %p182 = pneg %p76
        %p183 = pneg %p105
        %p184 = pneg %p102
        %s185 = smul.u32 2, %s16
        %p186 = scmp.lt.s32.totalorder %s185, 7
        %s187 = scalar_select %p186, %s185, 7
        %s188 = smul.addr %s187, 6
        %s189 = smul.addr %s188, 4
        %s190 = scalar_lea.vmem %s3, %s189
        %s191 = smul.u32 2, %s16
        %p192 = scmp.lt.s32.totalorder %s191, 7
        %s193 = scalar_select %p192, %s191, 7
        %s194 = smul.addr %s193, 4
        %s195 = scalar_lea.vmem %s0, %s194
        %s196 = smul.u32 2, %s16
        %s197 = smul.u32 2, %s16
        %p198 = scmp.lt.s32.totalorder %s197, 7
        %s199 = scalar_select %p198, %s197, 7
        %s200 = smul.addr %s199, 6
        %s201 = smul.addr %s200, 4
        %s202 = scalar_lea.vmem %s3, %s201
        %s203 = smul.u32 2, %s16
        %v205 = vld [vmem:[%s195] sm:$0xf]
        %v206 = vld [vmem:[%s195 + $0x4] sm:$0xf]
        %v207 = vld [vmem:[#allocation2] sm:$0xff]
        %v208 = vld [vmem:[#allocation2 + $0x8] sm:$0xff]
        %v209 = vld [vmem:[#allocation2 + $0x10] sm:$0xff]
        %v210 = vld [vmem:[#allocation2 + $0x18] sm:$0xff]
        %v211 = vld [vmem:[#allocation2 + $0x20] sm:$0xff]
        %v212 = vld [vmem:[#allocation2 + $0x28] sm:$0xff]
        %v213 = vld [vmem:[#allocation4] sm:$0x3f]
        %v215 = vlaneseq
        %v216 = vshrl.u32 %v215, 7
        %v217 = vsub.s32 0, %v216
        %v218 = vrot.slane %v213, %v217
        %v219 = vlaneseq
        %v220 = vshrl.u32 %v219, 7
        %v221 = vsub.s32 1, %v220
        %v222 = vrot.slane %v213, %v221
        %v223 = vlaneseq
        %v224 = vshrl.u32 %v223, 7
        %v225 = vsub.s32 2, %v224
        %v226 = vrot.slane %v213, %v225
        %v227 = vlaneseq
        %v228 = vshrl.u32 %v227, 7
        %v229 = vsub.s32 3, %v228
        %v230 = vrot.slane %v213, %v229
        %v231 = vlaneseq
        %v232 = vshrl.u32 %v231, 7
        %v233 = vsub.s32 4, %v232
        %v234 = vrot.slane %v213, %v233
        %v235 = vlaneseq
        %v236 = vshrl.u32 %v235, 7
        %v237 = vsub.s32 5, %v236
        %v238 = vrot.slane %v213, %v237
        %v247 = vunpack.c.l.b16 %v205
        %v248 = vunpack.c.l.b16 %v206
        %v249 = vpack.c.b16 %v248, %v247
        %v256 = vunpack.c.l.b16 %v207
        %v257 = vunpack.c.h.b16 %v207
        %v258 = vunpack.c.l.b16 %v208
        %v259 = vunpack.c.h.b16 %v208
        %v260 = vunpack.c.l.b16 %v209
        %v261 = vunpack.c.h.b16 %v209
        %v262 = vunpack.c.l.b16 %v210
        %v263 = vunpack.c.h.b16 %v210
        %v264 = vunpack.c.l.b16 %v211
        %v265 = vunpack.c.h.b16 %v211
        %v266 = vunpack.c.l.b16 %v212
        %v267 = vunpack.c.h.b16 %v212
        %v268 = vpack.c.b16 %v262, %v256
        %v269 = vpack.c.b16 %v263, %v257
        %v270 = vpack.c.b16 %v264, %v258
        %v271 = vpack.c.b16 %v265, %v259
        %v272 = vpack.c.b16 %v266, %v260
        %v273 = vpack.c.b16 %v267, %v261
        %vm280 = vcmask 130048
        %v282 = vsel %vm280, %v249, 0
        %284 = vmatprep.subr.bf16.mxu0 0
        %285 = vmatpush1.bf16.msra.mxu0 0
        %286 = vmatprep.subr.bf16.mxu0 0
        %287 = vmatpush1.bf16.msra.mxu0 0
        %288 = vmatprep.subr.bf16.mxu0 0
        %289 = vmatpush1.bf16.msra.mxu0 0
        %290 = vmatprep.subr.bf16.mxu0 0
        %291 = vmatpush1.bf16.msra.mxu0 0
        %292 = vmatprep.subr.bf16.mxu0 0
        %293 = vmatpush1.bf16.msra.mxu0 0
        %294 = vmatprep.subr.bf16.mxu0 0
        %295 = vmatpush1.bf16.msra.mxu0 0
        %296 = vmatprep.subr.bf16.mxu0 0
        %297 = vmatpush1.bf16.msra.mxu0 0
        %298 = vmatprep.subr.bf16.mxu0 %v269
        %299 = vmatpush1.bf16.msra.mxu0 %v268
        %300 = vmatprep.subr.bf16.mxu0 0
        %301 = vmatpush2.bf16.msra.mxu0 0
        %302 = vmatprep.subr.bf16.mxu0 0
        %303 = vmatpush2.bf16.msra.mxu0 0
        %304 = vmatprep.subr.bf16.mxu0 0
        %305 = vmatpush2.bf16.msra.mxu0 0
        %306 = vmatprep.subr.bf16.mxu0 0
        %307 = vmatpush2.bf16.msra.mxu0 0
        %308 = vmatprep.subr.bf16.mxu0 0
        %309 = vmatpush2.bf16.msra.mxu0 0
        %310 = vmatprep.subr.bf16.mxu0 0
        %311 = vmatpush2.bf16.msra.mxu0 0
        %312 = vmatprep.subr.bf16.mxu0 0
        %313 = vmatpush2.bf16.msra.mxu0 0
        %314 = vmatprep.subr.bf16.mxu0 0
        %315 = vmatpush2.bf16.msra.mxu0 0
        %316 = vmatprep.mubr.bf16.mxu0 0
        %317 = vmatmul.mubr.bf16.gmra.mxu0 %v282
        %v318 = vpop.f32.mrf.mxu0
        %v319 = vadd.f32 %v218, %v318
        %v320 = vpop.f32.mrf.mxu0
        %v321 = vadd.f32 %v222, %v320
        %v322 = vpop.f32.mrf.mxu0
        %v323 = vadd.f32 %v218, %v322
        %v324 = vpop.f32.mrf.mxu0
        %v325 = vadd.f32 %v222, %v324
        %326 = vdwg.mxu0
        %327 = vmatprep.subr.bf16.mxu0 0
        %328 = vmatpush1.bf16.msra.mxu0 0
        %329 = vmatprep.subr.bf16.mxu0 0
        %330 = vmatpush1.bf16.msra.mxu0 0
        %331 = vmatprep.subr.bf16.mxu0 0
        %332 = vmatpush1.bf16.msra.mxu0 0
        %333 = vmatprep.subr.bf16.mxu0 0
        %334 = vmatpush1.bf16.msra.mxu0 0
        %335 = vmatprep.subr.bf16.mxu0 0
        %336 = vmatpush1.bf16.msra.mxu0 0
        %337 = vmatprep.subr.bf16.mxu0 0
        %338 = vmatpush1.bf16.msra.mxu0 0
        %339 = vmatprep.subr.bf16.mxu0 0
        %340 = vmatpush1.bf16.msra.mxu0 0
        %341 = vmatprep.subr.bf16.mxu0 %v271
        %342 = vmatpush1.bf16.msra.mxu0 %v270
        %343 = vmatprep.subr.bf16.mxu0 0
        %344 = vmatpush2.bf16.msra.mxu0 0
        %345 = vmatprep.subr.bf16.mxu0 0
        %346 = vmatpush2.bf16.msra.mxu0 0
        %347 = vmatprep.subr.bf16.mxu0 0
        %348 = vmatpush2.bf16.msra.mxu0 0
        %349 = vmatprep.subr.bf16.mxu0 0
        %350 = vmatpush2.bf16.msra.mxu0 0
        %351 = vmatprep.subr.bf16.mxu0 0
        %352 = vmatpush2.bf16.msra.mxu0 0
        %353 = vmatprep.subr.bf16.mxu0 0
        %354 = vmatpush2.bf16.msra.mxu0 0
        %355 = vmatprep.subr.bf16.mxu0 0
        %356 = vmatpush2.bf16.msra.mxu0 0
        %357 = vmatprep.subr.bf16.mxu0 0
        %358 = vmatpush2.bf16.msra.mxu0 0
        %359 = vmatprep.mubr.bf16.mxu0 0
        %360 = vmatmul.mubr.bf16.gmra.mxu0 %v282
        %v361 = vpop.f32.mrf.mxu0
        %v362 = vadd.f32 %v226, %v361
        %v363 = vpop.f32.mrf.mxu0
        %v364 = vadd.f32 %v230, %v363
        %v365 = vpop.f32.mrf.mxu0
        %v366 = vadd.f32 %v226, %v365
        %v367 = vpop.f32.mrf.mxu0
        %v368 = vadd.f32 %v230, %v367
        %369 = vdwg.mxu0
        %370 = vmatprep.subr.bf16.mxu0 0
        %371 = vmatpush1.bf16.msra.mxu0 0
        %372 = vmatprep.subr.bf16.mxu0 0
        %373 = vmatpush1.bf16.msra.mxu0 0
        %374 = vmatprep.subr.bf16.mxu0 0
        %375 = vmatpush1.bf16.msra.mxu0 0
        %376 = vmatprep.subr.bf16.mxu0 0
        %377 = vmatpush1.bf16.msra.mxu0 0
        %378 = vmatprep.subr.bf16.mxu0 0
        %379 = vmatpush1.bf16.msra.mxu0 0
        %380 = vmatprep.subr.bf16.mxu0 0
        %381 = vmatpush1.bf16.msra.mxu0 0
        %382 = vmatprep.subr.bf16.mxu0 0
        %383 = vmatpush1.bf16.msra.mxu0 0
        %384 = vmatprep.subr.bf16.mxu0 %v273
        %385 = vmatpush1.bf16.msra.mxu0 %v272
        %386 = vmatprep.subr.bf16.mxu0 0
        %387 = vmatpush2.bf16.msra.mxu0 0
        %388 = vmatprep.subr.bf16.mxu0 0
        %389 = vmatpush2.bf16.msra.mxu0 0
        %390 = vmatprep.subr.bf16.mxu0 0
        %391 = vmatpush2.bf16.msra.mxu0 0
        %392 = vmatprep.subr.bf16.mxu0 0
        %393 = vmatpush2.bf16.msra.mxu0 0
        %394 = vmatprep.subr.bf16.mxu0 0
        %395 = vmatpush2.bf16.msra.mxu0 0
        %396 = vmatprep.subr.bf16.mxu0 0
        %397 = vmatpush2.bf16.msra.mxu0 0
        %398 = vmatprep.subr.bf16.mxu0 0
        %399 = vmatpush2.bf16.msra.mxu0 0
        %400 = vmatprep.subr.bf16.mxu0 0
        %401 = vmatpush2.bf16.msra.mxu0 0
        %402 = vmatprep.mubr.bf16.mxu0 0
        %403 = vmatmul.mubr.bf16.gmra.mxu0 %v282
        %v404 = vpop.f32.mrf.mxu0
        %v405 = vadd.f32 %v234, %v404
        %v406 = vpop.f32.mrf.mxu0
        %v407 = vadd.f32 %v238, %v406
        %v408 = vpop.f32.mrf.mxu0
        %v409 = vadd.f32 %v234, %v408
        %v410 = vpop.f32.mrf.mxu0
        %v411 = vadd.f32 %v238, %v410
        %412 = vdwg.mxu0
        %v413 = vpack.c.bf16 %v323, %v319
        %v414 = vpack.c.bf16 %v325, %v321
        %v415 = vpack.c.bf16 %v366, %v362
        %v416 = vpack.c.bf16 %v368, %v364
        %v417 = vpack.c.bf16 %v409, %v405
        %v418 = vpack.c.bf16 %v411, %v407
        %v425 = vunpack.c.l.b16 %v413
        %v426 = vunpack.c.l.b16 %v414
        %v427 = vunpack.c.l.b16 %v415
        %v428 = vunpack.c.l.b16 %v416
        %v429 = vunpack.c.l.b16 %v417
        %v430 = vunpack.c.l.b16 %v418
        %v431 = vunpack.c.h.b16 %v413
        %v432 = vunpack.c.h.b16 %v414
        %v433 = vunpack.c.h.b16 %v415
        %v434 = vunpack.c.h.b16 %v416
        %v435 = vunpack.c.h.b16 %v417
        %v436 = vunpack.c.h.b16 %v418
        %v437 = vpack.c.b16 %v426, %v425
        %v438 = vpack.c.b16 %v428, %v427
        %v439 = vpack.c.b16 %v430, %v429
        %v440 = vpack.c.b16 %v432, %v431
        %v441 = vpack.c.b16 %v434, %v433
        %v442 = vpack.c.b16 %v436, %v435
        %449 = vst [vmem:[%s202] sm:$0xff] %v437
        %450 = vst [vmem:[%s202 + $0x8] sm:$0xff] %v438
        %451 = vst [vmem:[%s202 + $0x10] sm:$0xff] %v439
        %452 = vst [vmem:[%s202 + $0x18] sm:$0xff] %v440
        %453 = vst [vmem:[%s202 + $0x20] sm:$0xff] %v441
        %454 = vst [vmem:[%s202 + $0x28] sm:$0xff] %v442
        %s455 = smul.u32 2, %s16
        %p456 = scmp.lt.s32.totalorder %s455, 7
        %s457 = scalar_select %p456, %s455, 7
        %s458 = smul.addr %s457, 6
        %s459 = smul.addr %s458, 4
        %s460 = scalar_lea.vmem %s3, %s459
        // Predicated region
        $region41: #{gru_rnn_forward.4} parent=31 // pred_check
          %p461 = pneg %p102
        $region42: #{gru_rnn_forward.4} parent=31 // pred_check_branch
          %463 = sbr.rel (%p461) target = $region44
        $region43: #{gru_rnn_forward.4} parent=31 // pred_region
          %s464 = smul.u32 2, %s16
        $region44: #{gru_rnn_forward.4} parent=31 // pred_fallthru
          _
      $region32: #{gru_rnn_forward.4} parent=5 // pred_fallthru
        _
      %p465 = scmp.le.s32.totalorder 2, %s11
      // Predicated region
      $region45: #{gru_rnn_forward.4} parent=5 // pred_check
        %p466 = pneg %p465
      $region46: #{gru_rnn_forward.4} parent=5 // pred_check_branch
        %468 = sbr.rel (%p466) target = $region48
      $region47: #{gru_rnn_forward.4} parent=5 // pred_region
        %s469 = ssub.s32 %s11, 2
        // Predicated region
        $region49: #{gru_rnn_forward.4} parent=47 // pred_check
          %p470 = pneg %p108
        $region50: #{gru_rnn_forward.4} parent=47 // pred_check_branch
          %472 = sbr.rel (%p470) target = $region52
        $region51: #{gru_rnn_forward.4} parent=47 // pred_region
          %s473 = smul.u32 2, %s17
          %p474 = scmp.lt.s32.totalorder %s473, 7
          %s475 = scalar_select %p474, %s473, 7
          %s476 = smul.addr %s475, 6
          %s477 = smul.addr %s476, 4
          %s478 = scalar_lea.vmem %s3, %s477
        $region52: #{gru_rnn_forward.4} parent=47 // pred_fallthru
          _
      $region48: #{gru_rnn_forward.4} parent=5 // pred_fallthru
        _
    $region6: #{gru_rnn_forward.4} parent=1 // loop_footer
      %s15 = sadd.s32 1, %s11
    $region7: #{gru_rnn_forward.4} parent=1 // loop_footer_branch
      %10 = sbr.rel target = $region3
    $region8: #{gru_rnn_forward.4} parent=1 // loop_exit
      _
    %479 = vsyncpa [#allocation3], 1
    %s480 = scalar_lea.sflag [#allocation3], 1
    %481 = vsyncpa %s480, 1
    %482 = vsyncpa [#allocation5], 1

// kernel: gru_rnn_forward.5
$region0: #{gru_rnn_forward.5}
  #allocation0 [shape = 'u32[]', space=smem, size = 0x4, offset = 0x4, fixed_abs, tag = 'smem constant byte address 0x4 - core index']
  #allocation1 [shape = 'u32[144,128]{1,0:T(1,128)}', space=vmem, size = 0x12000, scoped, tag = 'internal scratch']
  #allocation2 [shape = 'f32[16,128]{1,0:T(8,128)}', space=vmem, size = 0x2000, scoped, tag = 'scratch operand']
  %s0 = inlined_call_operand.vmem [shape: bf16[64,768], index: 0, kind: input, shape index: {}, may-alias: {0,1}]
  %s1 = inlined_call_operand.vmem [shape: bf16[64,768], index: 1, kind: input, shape index: {}, may-alias: {0,1}]
  %s2 = inlined_call_operand.hbm [shape: bf16[128,768], index: 2, kind: input, shape index: {}]
  %s3 = inlined_call_operand.hbm [shape: f32[1,128], index: 3, kind: input, shape index: {}]
  %s4 = inlined_call_operand.hbm [shape: f32[1,128], index: 4, kind: input, shape index: {}]
  %s5 = inlined_call_operand.vmem [shape: bf16[64,128], index: 5, kind: output, shape index: {0}]
  %s6 = inlined_call_operand.vmem [shape: bf16[64,128], index: 6, kind: output, shape index: {1}]
  %7 = xla_tuple %s5, %s6
  %s8 = sld [smem:[#allocation0]]
  $region129: #{gru_rnn_forward.5} parent=0
    _
  %s10 = ssub.s32 1, %s8
  %s11 = scalar_select 0, %s10, %s8
  $region1: #{gru_rnn_forward.5} parent=0
    #allocation3 [shape = 'u8[24576]{0}', space=vmem, size = 0x6000, scoped, tag = 'input window, operand 0']
    #allocation4 [shape = 'u8[24576]{0}', space=vmem, size = 0x6000, scoped, tag = 'input window, operand 1']
    #allocation5 [shape = 'u8[196608]{0}', space=vmem, size = 0x30000, scoped, tag = 'input window, operand 2, single buffered']
    #allocation6 [shape = 's32[2]{0}', space=sflag, size = 0x8, scoped, tag = 'scoped memory for gru_rnn_forward.5']
    #allocation7 [shape = 'u8[512]{0}', space=vmem, size = 0x400, scoped, tag = 'input window, operand 3, single buffered']
    #allocation8 [shape = 's32[1]{0}', space=sflag, size = 0x4, scoped, tag = 'scoped memory for gru_rnn_forward.5']
    #allocation9 [shape = 'u8[512]{0}', space=vmem, size = 0x400, scoped, tag = 'input window, operand 4, single buffered']
    %12 = vsyncpa [#allocation6], 0
    %13 = vsyncpa [#allocation8], 0
    loop: start=0, step=1, limit=6
    $region2: #{gru_rnn_forward.5} parent=1 // loop_pre_header
      _
    $region3: #{gru_rnn_forward.5} parent=1 // loop_header
      %s15 = sphi 0, %s19
      %p16 = scmp.ge.s32.totalorder %s15, 6
      %s25 = sphi 0, %s27
      %s28 = sphi 0, %s25
      %s29 = sphi 0, %s28
      %s45 = sphi 0, %s29
      %s53 = sphi 0, %s55
      %s56 = sphi 0, %s53
      %s57 = sphi 0, %s56
      %s73 = sphi 0, %s57
      %s77 = sphi 0, %s77
      %s79 = sphi 0, %s77
      %s80 = sphi 0, %s79
      %s94 = sphi 0, %s80
      %s98 = sphi 0, %s98
      %s100 = sphi 0, %s98
      %s101 = sphi 0, %s100
      %s115 = sphi 0, %s101
      %s119 = sphi 0, %s119
      %s121 = sphi 0, %s119
      %s122 = sphi 0, %s121
      %s136 = sphi 0, %s122
      %s142 = sphi 0, %s144
      %s145 = sphi 0, %s142
      %s146 = sphi 0, %s145
      %s162 = sphi 0, %s146
      %s170 = sphi 0, %s172
      %s173 = sphi 0, %s170
      %s174 = sphi 0, %s173
      %s190 = sphi 0, %s174
    $region4: #{gru_rnn_forward.5} parent=1 // loop_header_branch
      %18 = sbr.rel (%p16) target = $region8
    $region5: #{gru_rnn_forward.5} parent=1 // loop_body
      %s20 = ssub.s32 %s15, 1
      %s21 = ssub.s32 %s15, 2
      %s22 = sadd.s32 %s15, 1
      %s23 = ssub.s32 %s15, %s22
      %p24 = scmp.eq.s32.totalorder %s23, 0
      %s26 = sadd.s32 %s25, 1
      %s27 = scalar_select %p24, %s25, %s26
      %p30 = pneg %p24
      %p31 = scmp.eq.s32.totalorder %s15, 3
      %p32 = por %p30, %p31
      %p33 = scmp.ne.s32.totalorder %s25, %s28
      %p34 = scmp.eq.s32.totalorder %s15, 0
      %p35 = por %p33, %p34
      %p36 = scmp.ne.s32.totalorder %s25, %s28
      %p37 = scmp.eq.s32.totalorder %s20, 3
      %p38 = por %p36, %p37
      %p39 = scmp.ne.s32.totalorder %s28, %s29
      %p40 = scmp.eq.s32.totalorder %s20, 0
      %p41 = por %p39, %p40
      %p42 = scmp.ne.s32.totalorder %s28, %s29
      %p43 = scmp.eq.s32.totalorder %s21, 3
      %p44 = por %p42, %p43
      %p46 = scmp.ne.s32.totalorder %s29, %s45
      %p47 = scmp.eq.s32.totalorder %s21, 0
      %p48 = por %p46, %p47
      %s49 = ssub.s32 3, %s15
      %s50 = ssub.s32 3, %s22
      %s51 = ssub.s32 %s49, %s50
      %p52 = scmp.eq.s32.totalorder %s51, 0
      %s54 = sadd.s32 %s53, 1
      %s55 = scalar_select %p52, %s53, %s54
      %p58 = pneg %p52
      %p59 = scmp.eq.s32.totalorder %s15, 3
      %p60 = por %p58, %p59
      %p61 = scmp.ne.s32.totalorder %s53, %s56
      %p62 = scmp.eq.s32.totalorder %s15, 0
      %p63 = por %p61, %p62
      %p64 = scmp.ne.s32.totalorder %s53, %s56
      %p65 = scmp.eq.s32.totalorder %s20, 3
      %p66 = por %p64, %p65
      %p67 = scmp.ne.s32.totalorder %s56, %s57
      %p68 = scmp.eq.s32.totalorder %s20, 0
      %p69 = por %p67, %p68
      %p70 = scmp.ne.s32.totalorder %s56, %s57
      %p71 = scmp.eq.s32.totalorder %s21, 3
      %p72 = por %p70, %p71
      %p74 = scmp.ne.s32.totalorder %s57, %s73
      %p75 = scmp.eq.s32.totalorder %s21, 0
      %p76 = por %p74, %p75
      %s78 = sadd.s32 %s77, 1
      %p81 = scmp.eq.s32.totalorder %s15, 3
      %p82 = scmp.ne.s32.totalorder %s77, %s79
      %p83 = scmp.eq.s32.totalorder %s15, 0
      %p84 = por %p82, %p83
      %p85 = scmp.ne.s32.totalorder %s77, %s79
      %p86 = scmp.eq.s32.totalorder %s20, 3
      %p87 = por %p85, %p86
      %p88 = scmp.ne.s32.totalorder %s79, %s80
      %p89 = scmp.eq.s32.totalorder %s20, 0
      %p90 = por %p88, %p89
      %p91 = scmp.ne.s32.totalorder %s79, %s80
      %p92 = scmp.eq.s32.totalorder %s21, 3
      %p93 = por %p91, %p92
      %p95 = scmp.ne.s32.totalorder %s80, %s94
      %p96 = scmp.eq.s32.totalorder %s21, 0
      %p97 = por %p95, %p96
      %s99 = sadd.s32 %s98, 1
      %p102 = scmp.eq.s32.totalorder %s15, 3
      %p103 = scmp.ne.s32.totalorder %s98, %s100
      %p104 = scmp.eq.s32.totalorder %s15, 0
      %p105 = por %p103, %p104
      %p106 = scmp.ne.s32.totalorder %s98, %s100
      %p107 = scmp.eq.s32.totalorder %s20, 3
      %p108 = por %p106, %p107
      %p109 = scmp.ne.s32.totalorder %s100, %s101
      %p110 = scmp.eq.s32.totalorder %s20, 0
      %p111 = por %p109, %p110
      %p112 = scmp.ne.s32.totalorder %s100, %s101
      %p113 = scmp.eq.s32.totalorder %s21, 3
      %p114 = por %p112, %p113
      %p116 = scmp.ne.s32.totalorder %s101, %s115
      %p117 = scmp.eq.s32.totalorder %s21, 0
      %p118 = por %p116, %p117
      %s120 = sadd.s32 %s119, 1
      %p123 = scmp.eq.s32.totalorder %s15, 3
      %p124 = scmp.ne.s32.totalorder %s119, %s121
      %p125 = scmp.eq.s32.totalorder %s15, 0
      %p126 = por %p124, %p125
      %p127 = scmp.ne.s32.totalorder %s119, %s121
      %p128 = scmp.eq.s32.totalorder %s20, 3
      %p129 = por %p127, %p128
      %p130 = scmp.ne.s32.totalorder %s121, %s122
      %p131 = scmp.eq.s32.totalorder %s20, 0
      %p132 = por %p130, %p131
      %p133 = scmp.ne.s32.totalorder %s121, %s122
      %p134 = scmp.eq.s32.totalorder %s21, 3
      %p135 = por %p133, %p134
      %p137 = scmp.ne.s32.totalorder %s122, %s136
      %p138 = scmp.eq.s32.totalorder %s21, 0
      %p139 = por %p137, %p138
      %s140 = ssub.s32 %s15, %s22
      %p141 = scmp.eq.s32.totalorder %s140, 0
      %s143 = sadd.s32 %s142, 1
      %s144 = scalar_select %p141, %s142, %s143
      %p147 = pneg %p141
      %p148 = scmp.eq.s32.totalorder %s15, 3
      %p149 = por %p147, %p148
      %p150 = scmp.ne.s32.totalorder %s142, %s145
      %p151 = scmp.eq.s32.totalorder %s15, 0
      %p152 = por %p150, %p151
      %p153 = scmp.ne.s32.totalorder %s142, %s145
      %p154 = scmp.eq.s32.totalorder %s20, 3
      %p155 = por %p153, %p154
      %p156 = scmp.ne.s32.totalorder %s145, %s146
      %p157 = scmp.eq.s32.totalorder %s20, 0
      %p158 = por %p156, %p157
      %p159 = scmp.ne.s32.totalorder %s145, %s146
      %p160 = scmp.eq.s32.totalorder %s21, 3
      %p161 = por %p159, %p160
      %p163 = scmp.ne.s32.totalorder %s146, %s162
      %p164 = scmp.eq.s32.totalorder %s21, 0
      %p165 = por %p163, %p164
      %s166 = ssub.s32 3, %s15
      %s167 = ssub.s32 3, %s22
      %s168 = ssub.s32 %s166, %s167
      %p169 = scmp.eq.s32.totalorder %s168, 0
      %s171 = sadd.s32 %s170, 1
      %s172 = scalar_select %p169, %s170, %s171
      %p175 = pneg %p169
      %p176 = scmp.eq.s32.totalorder %s15, 3
      %p177 = por %p175, %p176
      %p178 = scmp.ne.s32.totalorder %s170, %s173
      %p179 = scmp.eq.s32.totalorder %s15, 0
      %p180 = por %p178, %p179
      %p181 = scmp.ne.s32.totalorder %s170, %s173
      %p182 = scmp.eq.s32.totalorder %s20, 3
      %p183 = por %p181, %p182
      %p184 = scmp.ne.s32.totalorder %s173, %s174
      %p185 = scmp.eq.s32.totalorder %s20, 0
      %p186 = por %p184, %p185
      %p187 = scmp.ne.s32.totalorder %s173, %s174
      %p188 = scmp.eq.s32.totalorder %s21, 3
      %p189 = por %p187, %p188
      %p191 = scmp.ne.s32.totalorder %s174, %s190
      %p192 = scmp.eq.s32.totalorder %s21, 0
      %p193 = por %p191, %p192
      %p194 = scmp.le.s32.totalorder 1, %s15
      %p195 = scmp.lt.s32.totalorder %s15, 5
      %p196 = pnand %p194, %p195
      %p197 = pneg %p196
      // Predicated region
      $region9: #{gru_rnn_forward.5} parent=5 // pred_check
        _
      $region10: #{gru_rnn_forward.5} parent=5 // pred_check_branch
        %199 = sbr.rel (%p196) target = $region12
      $region11: #{gru_rnn_forward.5} parent=5 // pred_region
        %s200 = ssub.s32 %s15, 1
        // Predicated region
        $region13: #{gru_rnn_forward.5} parent=11 // pred_check
          %p201 = pneg %p90
        $region14: #{gru_rnn_forward.5} parent=11 // pred_check_branch
          %203 = sbr.rel (%p201) target = $region16
        $region15: #{gru_rnn_forward.5} parent=11 // pred_region
          %s205 = ssub.s32 6144, 6144
          %206 = vsyncadd [#allocation6], %s205
          %s207 = sshll.u32 [#allocation5], 4
          %s208 = int_to_ptr.vmem [resolvable:$true] %s207
          %213 = dma.hbm_to_vmem [thread:$0]  %s2, 6144, %s208, [#allocation6], 384, 384, 24
        $region16: #{gru_rnn_forward.5} parent=11 // pred_fallthru
          _
        // Predicated region
        $region17: #{gru_rnn_forward.5} parent=11 // pred_check
          %p214 = pneg %p111
        $region18: #{gru_rnn_forward.5} parent=11 // pred_check_branch
          %216 = sbr.rel (%p214) target = $region20
        $region19: #{gru_rnn_forward.5} parent=11 // pred_region
          %s218 = ssub.s32 16, 16
          %219 = vsyncadd [#allocation8], %s218
          %s221 = sshll.u32 [#allocation7], 4
          %s222 = int_to_ptr.vmem [resolvable:$true] %s221
          %224 = dma.hbm_to_vmem [thread:$0]  %s3, 16, %s222, [#allocation8]
        $region20: #{gru_rnn_forward.5} parent=11 // pred_fallthru
          _
        // Predicated region
        $region21: #{gru_rnn_forward.5} parent=11 // pred_check
          %p225 = pneg %p132
        $region22: #{gru_rnn_forward.5} parent=11 // pred_check_branch
          %227 = sbr.rel (%p225) target = $region24
        $region23: #{gru_rnn_forward.5} parent=11 // pred_region
          %s229 = ssub.s32 16, 16
          %230 = vsyncadd [#allocation8], %s229
          %s232 = sshll.u32 [#allocation9], 4
          %s233 = int_to_ptr.vmem [resolvable:$true] %s232
          %235 = dma.hbm_to_vmem [thread:$0]  %s4, 16, %s233, [#allocation8]
        $region24: #{gru_rnn_forward.5} parent=11 // pred_fallthru
          _
      $region12: #{gru_rnn_forward.5} parent=5 // pred_fallthru
        _
      %p236 = scmp.lt.s32.totalorder %s15, 4
      // Predicated region
      $region25: #{gru_rnn_forward.5} parent=5 // pred_check
        %p237 = pneg %p236
      $region26: #{gru_rnn_forward.5} parent=5 // pred_check_branch
        %239 = sbr.rel (%p237) target = $region28
      $region27: #{gru_rnn_forward.5} parent=5 // pred_region
        // Predicated region
        $region29: #{gru_rnn_forward.5} parent=27 // pred_check
          %p240 = pneg %p35
        $region30: #{gru_rnn_forward.5} parent=27 // pred_check_branch
          %242 = sbr.rel (%p240) target = $region32
        $region31: #{gru_rnn_forward.5} parent=27 // pred_region
          %s243 = sand.u32 %s25, 1
          %s244 = sand.u32 %s25, 1
          %s245 = smul.addr %s244, 24
          %s246 = scalar_lea.vmem [#allocation3], %s245
          %s247 = smul.u32 2, %s15
          %s248 = smul.addr %s247, 6
          %s249 = smul.addr %s248, 4
          %s250 = scalar_lea.vmem %s0, %s249
          // Predicated region
          $region33: #{gru_rnn_forward.5} parent=31 // pred_check
            _
          $region34: #{gru_rnn_forward.5} parent=31 // pred_check_branch
            %252 = sbr.rel (0) target = $region36
          $region35: #{gru_rnn_forward.5} parent=31 // pred_region
            // Predicated region
            $region37: #{gru_rnn_forward.5} parent=35 // pred_check
              _
            $region38: #{gru_rnn_forward.5} parent=35 // pred_check_branch
              %254 = sbr.rel (0) target = $region40
            $region39: #{gru_rnn_forward.5} parent=35 // pred_region
              %s255 = scalar_lea.vmem %s250, 8
              %s256 = scalar_lea.vmem %s246, 8 [#allocation3]
              loop: start=0, step=1, limit=1
              $region41: #{gru_rnn_forward.5} parent=39 // loop_pre_header
                _
              $region42: #{gru_rnn_forward.5} parent=39 // loop_header
                %s258 = sphi 0, %s262
                %p259 = scmp.ge.s32.totalorder %s258, 1
                %s263 = sphi %s250, %s250
                %s264 = sphi %s246, %s246
              $region43: #{gru_rnn_forward.5} parent=39 // loop_header_branch
                %261 = sbr.rel (%p259) target = $region47
              $region44: #{gru_rnn_forward.5} parent=39 // loop_body
                %v265 = vld [vmem:[%s263] sm:$0xff]
                %266 = vst [vmem:[%s264] sm:$0xff] %v265
                %v267 = vld [vmem:[%s263 + $0x18] sm:$0xff]
                %268 = vst [vmem:[%s264 + $0xc] sm:$0xff] %v267
              $region45: #{gru_rnn_forward.5} parent=39 // loop_footer
                %s262 = sadd.s32 1, %s258
              $region46: #{gru_rnn_forward.5} parent=39 // loop_footer_branch
                %257 = sbr.rel target = $region42
              $region47: #{gru_rnn_forward.5} parent=39 // loop_exit
                _
              %s270 = ssub.s32 16, 1
              loop: start=0, step=1, limit=1
              $region48: #{gru_rnn_forward.5} parent=39 // loop_pre_header
                _
              $region49: #{gru_rnn_forward.5} parent=39 // loop_header
                %s272 = sphi 0, %s276
                %p273 = scmp.ge.s32.totalorder %s272, 1
                %s277 = sphi %s255, %s255
                %s278 = sphi %s256, %s256
              $region50: #{gru_rnn_forward.5} parent=39 // loop_header_branch
                %275 = sbr.rel (%p273) target = $region54
              $region51: #{gru_rnn_forward.5} parent=39 // loop_body
                %v279 = vld [vmem:[%s277] sm:%s270]
                %280 = vst [vmem:[%s278] sm:%s270] %v279
                %v281 = vld [vmem:[%s277 + $0x18] sm:%s270]
                %282 = vst [vmem:[%s278 + $0xc] sm:%s270] %v281
              $region52: #{gru_rnn_forward.5} parent=39 // loop_footer
                %s276 = sadd.s32 1, %s272
              $region53: #{gru_rnn_forward.5} parent=39 // loop_footer_branch
                %271 = sbr.rel target = $region49
              $region54: #{gru_rnn_forward.5} parent=39 // loop_exit
                _
            $region40: #{gru_rnn_forward.5} parent=35 // pred_fallthru
              _
          $region36: #{gru_rnn_forward.5} parent=31 // pred_fallthru
            _
          %283 = vnop
        $region32: #{gru_rnn_forward.5} parent=27 // pred_fallthru
          _
        // Predicated region
        $region55: #{gru_rnn_forward.5} parent=27 // pred_check
          %p284 = pneg %p63
        $region56: #{gru_rnn_forward.5} parent=27 // pred_check_branch
          %286 = sbr.rel (%p284) target = $region58
        $region57: #{gru_rnn_forward.5} parent=27 // pred_region
          %s287 = sand.u32 %s53, 1
          %s288 = sand.u32 %s53, 1
          %s289 = smul.addr %s288, 24
          %s290 = scalar_lea.vmem [#allocation4], %s289
          %s291 = ssub.s32 3, %s15
          %s292 = smul.u32 2, %s291
          %s293 = smul.addr %s292, 6
          %s294 = sadd.s32 3, %s293
          %s295 = smul.addr %s294, 4
          %s296 = scalar_lea.vmem %s1, %s295
          // Predicated region
          $region59: #{gru_rnn_forward.5} parent=57 // pred_check
            _
          $region60: #{gru_rnn_forward.5} parent=57 // pred_check_branch
            %298 = sbr.rel (0) target = $region62
          $region61: #{gru_rnn_forward.5} parent=57 // pred_region
            // Predicated region
            $region63: #{gru_rnn_forward.5} parent=61 // pred_check
              _
            $region64: #{gru_rnn_forward.5} parent=61 // pred_check_branch
              %300 = sbr.rel (0) target = $region66
            $region65: #{gru_rnn_forward.5} parent=61 // pred_region
              %s301 = scalar_lea.vmem %s296, 8
              %s302 = scalar_lea.vmem %s290, 8 [#allocation4]
              loop: start=0, step=1, limit=1
              $region67: #{gru_rnn_forward.5} parent=65 // loop_pre_header
                _
              $region68: #{gru_rnn_forward.5} parent=65 // loop_header
                %s304 = sphi 0, %s308
                %p305 = scmp.ge.s32.totalorder %s304, 1
                %s309 = sphi %s296, %s296
                %s310 = sphi %s290, %s290
              $region69: #{gru_rnn_forward.5} parent=65 // loop_header_branch
                %307 = sbr.rel (%p305) target = $region73
              $region70: #{gru_rnn_forward.5} parent=65 // loop_body
                %v311 = vld [vmem:[%s309] sm:$0xff]
                %312 = vst [vmem:[%s310] sm:$0xff] %v311
                %v313 = vld [vmem:[%s309 + $0x18] sm:$0xff]
                %314 = vst [vmem:[%s310 + $0xc] sm:$0xff] %v313
              $region71: #{gru_rnn_forward.5} parent=65 // loop_footer
                %s308 = sadd.s32 1, %s304
              $region72: #{gru_rnn_forward.5} parent=65 // loop_footer_branch
                %303 = sbr.rel target = $region68
              $region73: #{gru_rnn_forward.5} parent=65 // loop_exit
                _
              %s316 = ssub.s32 16, 1
              loop: start=0, step=1, limit=1
              $region74: #{gru_rnn_forward.5} parent=65 // loop_pre_header
                _
              $region75: #{gru_rnn_forward.5} parent=65 // loop_header
                %s318 = sphi 0, %s322
                %p319 = scmp.ge.s32.totalorder %s318, 1
                %s323 = sphi %s301, %s301
                %s324 = sphi %s302, %s302
              $region76: #{gru_rnn_forward.5} parent=65 // loop_header_branch
                %321 = sbr.rel (%p319) target = $region80
              $region77: #{gru_rnn_forward.5} parent=65 // loop_body
                %v325 = vld [vmem:[%s323] sm:%s316]
                %326 = vst [vmem:[%s324] sm:%s316] %v325
                %v327 = vld [vmem:[%s323 + $0x18] sm:%s316]
                %328 = vst [vmem:[%s324 + $0xc] sm:%s316] %v327
              $region78: #{gru_rnn_forward.5} parent=65 // loop_footer
                %s322 = sadd.s32 1, %s318
              $region79: #{gru_rnn_forward.5} parent=65 // loop_footer_branch
                %317 = sbr.rel target = $region75
              $region80: #{gru_rnn_forward.5} parent=65 // loop_exit
                _
            $region66: #{gru_rnn_forward.5} parent=61 // pred_fallthru
              _
          $region62: #{gru_rnn_forward.5} parent=57 // pred_fallthru
            _
          %329 = vnop
        $region58: #{gru_rnn_forward.5} parent=27 // pred_fallthru
          _
      $region28: #{gru_rnn_forward.5} parent=5 // pred_fallthru
        _
      %p330 = scmp.le.s32.totalorder 1, %s15
      %p331 = scmp.lt.s32.totalorder %s15, 5
      %p332 = pnand %p330, %p331
      %p333 = pneg %p332
      // Predicated region
      $region81: #{gru_rnn_forward.5} parent=5 // pred_check
        _
      $region82: #{gru_rnn_forward.5} parent=5 // pred_check_branch
        %335 = sbr.rel (%p332) target = $region84
      $region83: #{gru_rnn_forward.5} parent=5 // pred_region
        %s336 = ssub.s32 %s15, 1
        %s337 = sand.u32 %s28, 1
        %s338 = sand.u32 %s28, 1
        %s339 = smul.addr %s338, 24
        %s340 = scalar_lea.vmem [#allocation3], %s339
        // Predicated region
        $region85: #{gru_rnn_forward.5} parent=83 // pred_check
          %p341 = pneg %p41
        $region86: #{gru_rnn_forward.5} parent=83 // pred_check_branch
          %343 = sbr.rel (%p341) target = $region88
        $region87: #{gru_rnn_forward.5} parent=83 // pred_region
          _
        $region88: #{gru_rnn_forward.5} parent=83 // pred_fallthru
          _
        %s344 = sand.u32 %s56, 1
        %s345 = sand.u32 %s56, 1
        %s346 = smul.addr %s345, 24
        %s347 = scalar_lea.vmem [#allocation4], %s346
        // Predicated region
        $region89: #{gru_rnn_forward.5} parent=83 // pred_check
          %p348 = pneg %p69
        $region90: #{gru_rnn_forward.5} parent=83 // pred_check_branch
          %350 = sbr.rel (%p348) target = $region92
        $region91: #{gru_rnn_forward.5} parent=83 // pred_region
          _
        $region92: #{gru_rnn_forward.5} parent=83 // pred_fallthru
          _
        // Predicated region
        $region93: #{gru_rnn_forward.5} parent=83 // pred_check
          %p351 = pneg %p90
        $region94: #{gru_rnn_forward.5} parent=83 // pred_check_branch
          %353 = sbr.rel (%p351) target = $region96
        $region95: #{gru_rnn_forward.5} parent=83 // pred_region
          %354 = dma.done [#allocation6], 6144
        $region96: #{gru_rnn_forward.5} parent=83 // pred_fallthru
          _
        // Predicated region
        $region97: #{gru_rnn_forward.5} parent=83 // pred_check
          %p355 = pneg %p111
        $region98: #{gru_rnn_forward.5} parent=83 // pred_check_branch
          %357 = sbr.rel (%p355) target = $region100
        $region99: #{gru_rnn_forward.5} parent=83 // pred_region
          %358 = dma.done [#allocation8], 16
        $region100: #{gru_rnn_forward.5} parent=83 // pred_fallthru
          _
        // Predicated region
        $region101: #{gru_rnn_forward.5} parent=83 // pred_check
          %p359 = pneg %p132
        $region102: #{gru_rnn_forward.5} parent=83 // pred_check_branch
          %361 = sbr.rel (%p359) target = $region104
        $region103: #{gru_rnn_forward.5} parent=83 // pred_region
          %362 = dma.done [#allocation8], 16
        $region104: #{gru_rnn_forward.5} parent=83 // pred_fallthru
          _
        %s363 = sand.u32 %s28, 1
        %s364 = sand.u32 %s28, 1
        %s365 = smul.addr %s364, 24
        %s366 = scalar_lea.vmem [#allocation3], %s365
        %p367 = pneg %p41
        %p368 = pneg %p38
        %s369 = sand.u32 %s56, 1
        %s370 = sand.u32 %s56, 1
        %s371 = smul.addr %s370, 24
        %s372 = scalar_lea.vmem [#allocation4], %s371
        %p373 = pneg %p69
        %p374 = pneg %p66
        %p375 = pneg %p90
        %p376 = pneg %p87
        %p377 = pneg %p111
        %p378 = pneg %p108
        %p379 = pneg %p132
        %p380 = pneg %p129
        %p381 = pneg %p158
        %p382 = pneg %p155
        %s383 = smul.u32 2, %s20
        %p384 = scmp.lt.s32.totalorder %s383, 7
        %s385 = scalar_select %p384, %s383, 7
        %s386 = smul.addr %s385, 4
        %s387 = scalar_lea.vmem %s5, %s386
        %p388 = pneg %p186
        %p389 = pneg %p183
        %s390 = ssub.s32 3, %s20
        %s391 = smul.u32 2, %s390
        %p392 = scmp.lt.s32.totalorder %s391, 7
        %s393 = scalar_select %p392, %s391, 7
        %s394 = smul.addr %s393, 4
        %s395 = scalar_lea.vmem %s6, %s394
        %s396 = smul.u32 2, %s20
        %s397 = ssub.s32 3, %s20
        %s398 = smul.u32 2, %s397
        %s399 = smul.u32 2, %s20
        %p400 = scmp.lt.s32.totalorder %s399, 7
        %s401 = scalar_select %p400, %s399, 7
        %s402 = smul.addr %s401, 4
        %s403 = scalar_lea.vmem %s5, %s402
        %s404 = smul.u32 2, %s20
        %s405 = ssub.s32 3, %s20
        %s406 = smul.u32 2, %s405
        %p407 = scmp.lt.s32.totalorder %s406, 7
        %s408 = scalar_select %p407, %s406, 7
        %s409 = smul.addr %s408, 4
        %s410 = scalar_lea.vmem %s6, %s409
        %s411 = ssub.s32 3, %s20
        %s412 = smul.u32 2, %s411
        %p414 = scmp.eq.s32.totalorder %s20, 0
        // Predicated region
        $region105: #{gru_rnn_forward.5} parent=83 // pred_check
          %p415 = pneg %p414
        $region106: #{gru_rnn_forward.5} parent=83 // pred_check_branch
          %417 = sbr.rel (%p415) target = $region108
        $region107: #{gru_rnn_forward.5} parent=83 // pred_region
          %418 = vst [vmem:[#allocation2] sm:$0xff] 0.0
          %419 = vst [vmem:[#allocation2 + $0x8] sm:$0xff] 0.0
        $region108: #{gru_rnn_forward.5} parent=83 // pred_fallthru
          _
        %v420 = vld [vmem:[#allocation7] sm:$0x1]
        %v422 = vlaneseq
        %v423 = vshrl.u32 %v422, 7
        %v424 = vsub.s32 0, %v423
        %v425 = vrot.slane %v420, %v424
        %v427 = vld [vmem:[#allocation9] sm:$0x1]
        %v429 = vlaneseq
        %v430 = vshrl.u32 %v429, 7
        %v431 = vsub.s32 0, %v430
        %v432 = vrot.slane %v427, %v431
        %v434 = vld [vmem:[#allocation2] sm:$0xff]
        %v435 = vld [vmem:[#allocation2 + $0x8] sm:$0xff]
        %v436 = vpack.c.bf16 %v435, %v434
        %v437 = vld [vmem:[#allocation5] sm:$0xff]
        %v438 = vld [vmem:[#allocation5 + $0x8] sm:$0xff]
        %v439 = vld [vmem:[#allocation5 + $0x10] sm:$0xff]
        %v440 = vld [vmem:[#allocation5 + $0x18] sm:$0xff]
        %v441 = vld [vmem:[#allocation5 + $0x20] sm:$0xff]
        %v442 = vld [vmem:[#allocation5 + $0x28] sm:$0xff]
        %v443 = vld [vmem:[#allocation5 + $0x30] sm:$0xff]
        %v444 = vld [vmem:[#allocation5 + $0x38] sm:$0xff]
        %v445 = vld [vmem:[#allocation5 + $0x40] sm:$0xff]
        %v446 = vld [vmem:[#allocation5 + $0x48] sm:$0xff]
        %v447 = vld [vmem:[#allocation5 + $0x50] sm:$0xff]
        %v448 = vld [vmem:[#allocation5 + $0x58] sm:$0xff]
        %v449 = vld [vmem:[#allocation5 + $0x60] sm:$0xff]
        %v450 = vld [vmem:[#allocation5 + $0x68] sm:$0xff]
        %v451 = vld [vmem:[#allocation5 + $0x70] sm:$0xff]
        %v452 = vld [vmem:[#allocation5 + $0x78] sm:$0xff]
        %v453 = vld [vmem:[#allocation5 + $0x80] sm:$0xff]
        %v454 = vld [vmem:[#allocation5 + $0x88] sm:$0xff]
        %v455 = vld [vmem:[#allocation5 + $0x90] sm:$0xff]
        %v456 = vld [vmem:[#allocation5 + $0x98] sm:$0xff]
        %v457 = vld [vmem:[#allocation5 + $0xa0] sm:$0xff]
        %v458 = vld [vmem:[#allocation5 + $0xa8] sm:$0xff]
        %v459 = vld [vmem:[#allocation5 + $0xb0] sm:$0xff]
        %v460 = vld [vmem:[#allocation5 + $0xb8] sm:$0xff]
        %v461 = vld [vmem:[#allocation5 + $0xc0] sm:$0xff]
        %v462 = vld [vmem:[#allocation5 + $0xc8] sm:$0xff]
        %v463 = vld [vmem:[#allocation5 + $0xd0] sm:$0xff]
        %v464 = vld [vmem:[#allocation5 + $0xd8] sm:$0xff]
        %v465 = vld [vmem:[#allocation5 + $0xe0] sm:$0xff]
        %v466 = vld [vmem:[#allocation5 + $0xe8] sm:$0xff]
        %v467 = vld [vmem:[#allocation5 + $0xf0] sm:$0xff]
        %v468 = vld [vmem:[#allocation5 + $0xf8] sm:$0xff]
        %v469 = vld [vmem:[#allocation5 + $0x100] sm:$0xff]
        %v470 = vld [vmem:[#allocation5 + $0x108] sm:$0xff]
        %v471 = vld [vmem:[#allocation5 + $0x110] sm:$0xff]
        %v472 = vld [vmem:[#allocation5 + $0x118] sm:$0xff]
        %v473 = vld [vmem:[#allocation5 + $0x120] sm:$0xff]
        %v474 = vld [vmem:[#allocation5 + $0x128] sm:$0xff]
        %v475 = vld [vmem:[#allocation5 + $0x130] sm:$0xff]
        %v476 = vld [vmem:[#allocation5 + $0x138] sm:$0xff]
        %v477 = vld [vmem:[#allocation5 + $0x140] sm:$0xff]
        %v478 = vld [vmem:[#allocation5 + $0x148] sm:$0xff]
        %v479 = vld [vmem:[#allocation5 + $0x150] sm:$0xff]
        %v480 = vld [vmem:[#allocation5 + $0x158] sm:$0xff]
        %v481 = vld [vmem:[#allocation5 + $0x160] sm:$0xff]
        %v482 = vld [vmem:[#allocation5 + $0x168] sm:$0xff]
        %v483 = vld [vmem:[#allocation5 + $0x170] sm:$0xff]
        %v484 = vld [vmem:[#allocation5 + $0x178] sm:$0xff]
        %v533 = vunpack.c.l.b16 %v437
        %v534 = vunpack.c.h.b16 %v437
        %v535 = vunpack.c.l.b16 %v438
        %v536 = vunpack.c.h.b16 %v438
        %v537 = vunpack.c.l.b16 %v439
        %v538 = vunpack.c.h.b16 %v439
        %v539 = vunpack.c.l.b16 %v440
        %v540 = vunpack.c.h.b16 %v440
        %v541 = vunpack.c.l.b16 %v441
        %v542 = vunpack.c.h.b16 %v441
        %v543 = vunpack.c.l.b16 %v442
        %v544 = vunpack.c.h.b16 %v442
        %v545 = vunpack.c.l.b16 %v443
        %v546 = vunpack.c.h.b16 %v443
        %v547 = vunpack.c.l.b16 %v444
        %v548 = vunpack.c.h.b16 %v444
        %v549 = vunpack.c.l.b16 %v445
        %v550 = vunpack.c.h.b16 %v445
        %v551 = vunpack.c.l.b16 %v446
        %v552 = vunpack.c.h.b16 %v446
        %v553 = vunpack.c.l.b16 %v447
        %v554 = vunpack.c.h.b16 %v447
        %v555 = vunpack.c.l.b16 %v448
        %v556 = vunpack.c.h.b16 %v448
        %v557 = vunpack.c.l.b16 %v449
        %v558 = vunpack.c.h.b16 %v449
        %v559 = vunpack.c.l.b16 %v450
        %v560 = vunpack.c.h.b16 %v450
        %v561 = vunpack.c.l.b16 %v451
        %v562 = vunpack.c.h.b16 %v451
        %v563 = vunpack.c.l.b16 %v452
        %v564 = vunpack.c.h.b16 %v452
        %v565 = vunpack.c.l.b16 %v453
        %v566 = vunpack.c.h.b16 %v453
        %v567 = vunpack.c.l.b16 %v454
        %v568 = vunpack.c.h.b16 %v454
        %v569 = vunpack.c.l.b16 %v455
        %v570 = vunpack.c.h.b16 %v455
        %v571 = vunpack.c.l.b16 %v456
        %v572 = vunpack.c.h.b16 %v456
        %v573 = vunpack.c.l.b16 %v457
        %v574 = vunpack.c.h.b16 %v457
        %v575 = vunpack.c.l.b16 %v458
        %v576 = vunpack.c.h.b16 %v458
        %v577 = vunpack.c.l.b16 %v459
        %v578 = vunpack.c.h.b16 %v459
        %v579 = vunpack.c.l.b16 %v460
        %v580 = vunpack.c.h.b16 %v460
        %v581 = vunpack.c.l.b16 %v461
        %v582 = vunpack.c.h.b16 %v461
        %v583 = vunpack.c.l.b16 %v462
        %v584 = vunpack.c.h.b16 %v462
        %v585 = vunpack.c.l.b16 %v463
        %v586 = vunpack.c.h.b16 %v463
        %v587 = vunpack.c.l.b16 %v464
        %v588 = vunpack.c.h.b16 %v464
        %v589 = vunpack.c.l.b16 %v465
        %v590 = vunpack.c.h.b16 %v465
        %v591 = vunpack.c.l.b16 %v466
        %v592 = vunpack.c.h.b16 %v466
        %v593 = vunpack.c.l.b16 %v467
        %v594 = vunpack.c.h.b16 %v467
        %v595 = vunpack.c.l.b16 %v468
        %v596 = vunpack.c.h.b16 %v468
        %v597 = vunpack.c.l.b16 %v469
        %v598 = vunpack.c.h.b16 %v469
        %v599 = vunpack.c.l.b16 %v470
        %v600 = vunpack.c.h.b16 %v470
        %v601 = vunpack.c.l.b16 %v471
        %v602 = vunpack.c.h.b16 %v471
        %v603 = vunpack.c.l.b16 %v472
        %v604 = vunpack.c.h.b16 %v472
        %v605 = vunpack.c.l.b16 %v473
        %v606 = vunpack.c.h.b16 %v473
        %v607 = vunpack.c.l.b16 %v474
        %v608 = vunpack.c.h.b16 %v474
        %v609 = vunpack.c.l.b16 %v475
        %v610 = vunpack.c.h.b16 %v475
        %v611 = vunpack.c.l.b16 %v476
        %v612 = vunpack.c.h.b16 %v476
        %v613 = vunpack.c.l.b16 %v477
        %v614 = vunpack.c.h.b16 %v477
        %v615 = vunpack.c.l.b16 %v478
        %v616 = vunpack.c.h.b16 %v478
        %v617 = vunpack.c.l.b16 %v479
        %v618 = vunpack.c.h.b16 %v479
        %v619 = vunpack.c.l.b16 %v480
        %v620 = vunpack.c.h.b16 %v480
        %v621 = vunpack.c.l.b16 %v481
        %v622 = vunpack.c.h.b16 %v481
        %v623 = vunpack.c.l.b16 %v482
        %v624 = vunpack.c.h.b16 %v482
        %v625 = vunpack.c.l.b16 %v483
        %v626 = vunpack.c.h.b16 %v483
        %v627 = vunpack.c.l.b16 %v484
        %v628 = vunpack.c.h.b16 %v484
        %v629 = vpack.c.b16 %v539, %v533
        %v630 = vpack.c.b16 %v540, %v534
        %v631 = vpack.c.b16 %v541, %v535
        %v632 = vpack.c.b16 %v542, %v536
        %v633 = vpack.c.b16 %v543, %v537
        %v634 = vpack.c.b16 %v544, %v538
        %v635 = vpack.c.b16 %v551, %v545
        %v636 = vpack.c.b16 %v552, %v546
        %v637 = vpack.c.b16 %v553, %v547
        %v638 = vpack.c.b16 %v554, %v548
        %v639 = vpack.c.b16 %v555, %v549
        %v640 = vpack.c.b16 %v556, %v550
        %v641 = vpack.c.b16 %v563, %v557
        %v642 = vpack.c.b16 %v564, %v558
        %v643 = vpack.c.b16 %v565, %v559
        %v644 = vpack.c.b16 %v566, %v560
        %v645 = vpack.c.b16 %v567, %v561
        %v646 = vpack.c.b16 %v568, %v562
        %v647 = vpack.c.b16 %v575, %v569
        %v648 = vpack.c.b16 %v576, %v570
        %v649 = vpack.c.b16 %v577, %v571
        %v650 = vpack.c.b16 %v578, %v572
        %v651 = vpack.c.b16 %v579, %v573
        %v652 = vpack.c.b16 %v580, %v574
        %v653 = vpack.c.b16 %v587, %v581
        %v654 = vpack.c.b16 %v588, %v582
        %v655 = vpack.c.b16 %v589, %v583
        %v656 = vpack.c.b16 %v590, %v584
        %v657 = vpack.c.b16 %v591, %v585
        %v658 = vpack.c.b16 %v592, %v586
        %v659 = vpack.c.b16 %v599, %v593
        %v660 = vpack.c.b16 %v600, %v594
        %v661 = vpack.c.b16 %v601, %v595
        %v662 = vpack.c.b16 %v602, %v596
        %v663 = vpack.c.b16 %v603, %v597
        %v664 = vpack.c.b16 %v604, %v598
        %v665 = vpack.c.b16 %v611, %v605
        %v666 = vpack.c.b16 %v612, %v606
        %v667 = vpack.c.b16 %v613, %v607
        %v668 = vpack.c.b16 %v614, %v608
        %v669 = vpack.c.b16 %v615, %v609
        %v670 = vpack.c.b16 %v616, %v610
        %v671 = vpack.c.b16 %v623, %v617
        %v672 = vpack.c.b16 %v624, %v618
        %v673 = vpack.c.b16 %v625, %v619
        %v674 = vpack.c.b16 %v626, %v620
        %v675 = vpack.c.b16 %v627, %v621
        %v676 = vpack.c.b16 %v628, %v622
        %725 = vmatprep.subr.bf16.mxu0 %v672
        %726 = vmatpush1.bf16.msra.mxu0 %v671
        %727 = vmatprep.subr.bf16.mxu0 %v666
        %728 = vmatpush1.bf16.msra.mxu0 %v665
        %729 = vmatprep.subr.bf16.mxu0 %v660
        %730 = vmatpush1.bf16.msra.mxu0 %v659
        %731 = vmatprep.subr.bf16.mxu0 %v654
        %732 = vmatpush1.bf16.msra.mxu0 %v653
        %733 = vmatprep.subr.bf16.mxu0 %v648
        %734 = vmatpush1.bf16.msra.mxu0 %v647
        %735 = vmatprep.subr.bf16.mxu0 %v642
        %736 = vmatpush1.bf16.msra.mxu0 %v641
        %737 = vmatprep.subr.bf16.mxu0 %v636
        %738 = vmatpush1.bf16.msra.mxu0 %v635
        %739 = vmatprep.subr.bf16.mxu0 %v630
        %740 = vmatpush1.bf16.msra.mxu0 %v629
        %741 = vmatprep.subr.bf16.mxu0 0
        %742 = vmatpush2.bf16.msra.mxu0 0
        %743 = vmatprep.subr.bf16.mxu0 0
        %744 = vmatpush2.bf16.msra.mxu0 0
        %745 = vmatprep.subr.bf16.mxu0 0
        %746 = vmatpush2.bf16.msra.mxu0 0
        %747 = vmatprep.subr.bf16.mxu0 0
        %748 = vmatpush2.bf16.msra.mxu0 0
        %749 = vmatprep.subr.bf16.mxu0 0
        %750 = vmatpush2.bf16.msra.mxu0 0
        %751 = vmatprep.subr.bf16.mxu0 0
        %752 = vmatpush2.bf16.msra.mxu0 0
        %753 = vmatprep.subr.bf16.mxu0 0
        %754 = vmatpush2.bf16.msra.mxu0 0
        %755 = vmatprep.subr.bf16.mxu0 0
        %756 = vmatpush2.bf16.msra.mxu0 0
        %757 = vmatprep.mubr.bf16.mxu0 0
        %758 = vmatmul.mubr.bf16.gmra.mxu0 %v436
        %v759 = vpop.f32.mrf.mxu0
        %v760 = vadd.f32 0.0, %v759
        %v761 = vpop.f32.mrf.mxu0
        %v762 = vadd.f32 0.0, %v761
        %v763 = vpop.f32.mrf.mxu0
        %v764 = vpop.f32.mrf.mxu0
        %765 = vdwg.mxu0
        %766 = vmatprep.subr.bf16.mxu0 %v674
        %767 = vmatpush1.bf16.msra.mxu0 %v673
        %768 = vmatprep.subr.bf16.mxu0 %v668
        %769 = vmatpush1.bf16.msra.mxu0 %v667
        %770 = vmatprep.subr.bf16.mxu0 %v662
        %771 = vmatpush1.bf16.msra.mxu0 %v661
        %772 = vmatprep.subr.bf16.mxu0 %v656
        %773 = vmatpush1.bf16.msra.mxu0 %v655
        %774 = vmatprep.subr.bf16.mxu0 %v650
        %775 = vmatpush1.bf16.msra.mxu0 %v649
        %776 = vmatprep.subr.bf16.mxu0 %v644
        %777 = vmatpush1.bf16.msra.mxu0 %v643
        %778 = vmatprep.subr.bf16.mxu0 %v638
        %779 = vmatpush1.bf16.msra.mxu0 %v637
        %780 = vmatprep.subr.bf16.mxu0 %v632
        %781 = vmatpush1.bf16.msra.mxu0 %v631
        %782 = vmatprep.subr.bf16.mxu0 0
        %783 = vmatpush2.bf16.msra.mxu0 0
        %784 = vmatprep.subr.bf16.mxu0 0
        %785 = vmatpush2.bf16.msra.mxu0 0
        %786 = vmatprep.subr.bf16.mxu0 0
        %787 = vmatpush2.bf16.msra.mxu0 0
        %788 = vmatprep.subr.bf16.mxu0 0
        %789 = vmatpush2.bf16.msra.mxu0 0
        %790 = vmatprep.subr.bf16.mxu0 0
        %791 = vmatpush2.bf16.msra.mxu0 0
        %792 = vmatprep.subr.bf16.mxu0 0
        %793 = vmatpush2.bf16.msra.mxu0 0
        %794 = vmatprep.subr.bf16.mxu0 0
        %795 = vmatpush2.bf16.msra.mxu0 0
        %796 = vmatprep.subr.bf16.mxu0 0
        %797 = vmatpush2.bf16.msra.mxu0 0
        %798 = vmatprep.mubr.bf16.mxu0 0
        %799 = vmatmul.mubr.bf16.gmra.mxu0 %v436
        %v800 = vpop.f32.mrf.mxu0
        %v801 = vadd.f32 0.0, %v800
        %v802 = vpop.f32.mrf.mxu0
        %v803 = vpop.f32.mrf.mxu0
        %v804 = vpop.f32.mrf.mxu0
        %v805 = vadd.f32 0.0, %v804
        %806 = vdwg.mxu0
        %807 = vmatprep.subr.bf16.mxu0 %v676
        %808 = vmatpush1.bf16.msra.mxu0 %v675
        %809 = vmatprep.subr.bf16.mxu0 %v670
        %810 = vmatpush1.bf16.msra.mxu0 %v669
        %811 = vmatprep.subr.bf16.mxu0 %v664
        %812 = vmatpush1.bf16.msra.mxu0 %v663
        %813 = vmatprep.subr.bf16.mxu0 %v658
        %814 = vmatpush1.bf16.msra.mxu0 %v657
        %815 = vmatprep.subr.bf16.mxu0 %v652
        %816 = vmatpush1.bf16.msra.mxu0 %v651
        %817 = vmatprep.subr.bf16.mxu0 %v646
        %818 = vmatpush1.bf16.msra.mxu0 %v645
        %819 = vmatprep.subr.bf16.mxu0 %v640
        %820 = vmatpush1.bf16.msra.mxu0 %v639
        %821 = vmatprep.subr.bf16.mxu0 %v634
        %822 = vmatpush1.bf16.msra.mxu0 %v633
        %823 = vmatprep.subr.bf16.mxu0 0
        %824 = vmatpush2.bf16.msra.mxu0 0
        %825 = vmatprep.subr.bf16.mxu0 0
        %826 = vmatpush2.bf16.msra.mxu0 0
        %827 = vmatprep.subr.bf16.mxu0 0
        %828 = vmatpush2.bf16.msra.mxu0 0
        %829 = vmatprep.subr.bf16.mxu0 0
        %830 = vmatpush2.bf16.msra.mxu0 0
        %831 = vmatprep.subr.bf16.mxu0 0
        %832 = vmatpush2.bf16.msra.mxu0 0
        %833 = vmatprep.subr.bf16.mxu0 0
        %834 = vmatpush2.bf16.msra.mxu0 0
        %835 = vmatprep.subr.bf16.mxu0 0
        %836 = vmatpush2.bf16.msra.mxu0 0
        %837 = vmatprep.subr.bf16.mxu0 0
        %838 = vmatpush2.bf16.msra.mxu0 0
        %839 = vmatprep.mubr.bf16.mxu0 0
        %840 = vmatmul.mubr.bf16.gmra.mxu0 %v436
        %v841 = vpop.f32.mrf.mxu0
        %v842 = vpop.f32.mrf.mxu0
        %v843 = vpop.f32.mrf.mxu0
        %v844 = vadd.f32 0.0, %v843
        %v845 = vpop.f32.mrf.mxu0
        %v846 = vadd.f32 0.0, %v845
        %847 = vdwg.mxu0
        %s848 = smul.u32 0, 3
        %s849 = smul.addr %s848, 4
        %s850 = scalar_lea.vmem %s340, %s849 [#allocation3]
        %v851 = vld [vmem:[%s850] sm:$0xff]
        %v852 = vld [vmem:[%s850 + $0x8] sm:$0xf]
        %v853 = vunpack.c.l.bf16 %v851
        %v854 = vunpack.c.h.bf16 %v851
        %v855 = vunpack.c.l.bf16 %v852
        %s856 = smul.u32 1, 3
        %s857 = smul.addr %s856, 4
        %s858 = scalar_lea.vmem %s347, %s857 [#allocation4]
        %v859 = vld [vmem:[%s858] sm:$0xff]
        %v860 = vld [vmem:[%s858 + $0x8] sm:$0xf]
        %v861 = vunpack.c.l.bf16 %v859
        %v862 = vunpack.c.h.bf16 %v859
        %v863 = vunpack.c.l.bf16 %v860
        %v864 = vadd.f32 %v853, %v760
        %v865 = vxor.u32 %v864, 2147483648
        %v866 = vmul.f32 %v865, 1.442695
        %v867 = vpow.pop %v866
        %v868 = vadd.f32 %v867, 1.0
        %v869 = vrcp.pop %v868
        %v870 = vmul.f32 1.0, %v869
        %v871 = vadd.f32 %v854, %v762
        %v872 = vxor.u32 %v871, 2147483648
        %v873 = vmul.f32 %v872, 1.442695
        %v874 = vpow.pop %v873
        %v875 = vadd.f32 %v874, 1.0
        %v876 = vrcp.pop %v875
        %v877 = vmul.f32 1.0, %v876
        %v878 = vadd.f32 %v801, %v425
        %v879 = vmul.f32 %v870, %v878
        %v880 = vadd.f32 %v855, %v879
        %v881 = vtanh.pop %v880
        %v882 = vsub.f32 1.0, %v877
        %v883 = vmul.f32 %v882, %v881
        %v884 = vmul.f32 %v877, %v434
        %v885 = vadd.f32 %v883, %v884
        %v886 = vadd.f32 %v861, %v805
        %v887 = vxor.u32 %v886, 2147483648
        %v888 = vmul.f32 %v887, 1.442695
        %v889 = vpow.pop %v888
        %v890 = vadd.f32 %v889, 1.0
        %v891 = vrcp.pop %v890
        %v892 = vmul.f32 1.0, %v891
        %v893 = vadd.f32 %v862, %v844
        %v894 = vxor.u32 %v893, 2147483648
        %v895 = vmul.f32 %v894, 1.442695
        %v896 = vpow.pop %v895
        %v897 = vadd.f32 %v896, 1.0
        %v898 = vrcp.pop %v897
        %v899 = vmul.f32 1.0, %v898
        %v900 = vadd.f32 %v846, %v432
        %v901 = vmul.f32 %v892, %v900
        %v902 = vadd.f32 %v863, %v901
        %v903 = vtanh.pop %v902
        %v904 = vsub.f32 1.0, %v899
        %v905 = vmul.f32 %v904, %v903
        %v906 = vmul.f32 %v899, %v435
        %v907 = vadd.f32 %v905, %v906
        %908 = vst [vmem:[#allocation2] sm:$0xff] %v885
        %909 = vst [vmem:[#allocation2 + $0x8] sm:$0xff] %v907
        %v910 = vpack.c.bf16 %v885, %v885
        %911 = vst [vmem:[%s403] sm:$0xf] %v910
        %v912 = vpack.c.bf16 %v907, %v907
        %s913 = scalar_lea.vmem %s410, 4
        %914 = vst [vmem:[%s913] sm:$0xf] %v912
        %v915 = vld [vmem:[#allocation2] sm:$0xff]
        %v916 = vld [vmem:[#allocation2 + $0x8] sm:$0xff]
        %v917 = vpack.c.bf16 %v916, %v915
        %v918 = vld [vmem:[#allocation5] sm:$0xff]
        %v919 = vld [vmem:[#allocation5 + $0x8] sm:$0xff]
        %v920 = vld [vmem:[#allocation5 + $0x10] sm:$0xff]
        %v921 = vld [vmem:[#allocation5 + $0x18] sm:$0xff]
        %v922 = vld [vmem:[#allocation5 + $0x20] sm:$0xff]
        %v923 = vld [vmem:[#allocation5 + $0x28] sm:$0xff]
        %v924 = vld [vmem:[#allocation5 + $0x30] sm:$0xff]
        %v925 = vld [vmem:[#allocation5 + $0x38] sm:$0xff]
        %v926 = vld [vmem:[#allocation5 + $0x40] sm:$0xff]
        %v927 = vld [vmem:[#allocation5 + $0x48] sm:$0xff]
        %v928 = vld [vmem:[#allocation5 + $0x50] sm:$0xff]
        %v929 = vld [vmem:[#allocation5 + $0x58] sm:$0xff]
        %v930 = vld [vmem:[#allocation5 + $0x60] sm:$0xff]
        %v931 = vld [vmem:[#allocation5 + $0x68] sm:$0xff]
        %v932 = vld [vmem:[#allocation5 + $0x70] sm:$0xff]
        %v933 = vld [vmem:[#allocation5 + $0x78] sm:$0xff]
        %v934 = vld [vmem:[#allocation5 + $0x80] sm:$0xff]
        %v935 = vld [vmem:[#allocation5 + $0x88] sm:$0xff]
        %v936 = vld [vmem:[#allocation5 + $0x90] sm:$0xff]
        %v937 = vld [vmem:[#allocation5 + $0x98] sm:$0xff]
        %v938 = vld [vmem:[#allocation5 + $0xa0] sm:$0xff]
        %v939 = vld [vmem:[#allocation5 + $0xa8] sm:$0xff]
        %v940 = vld [vmem:[#allocation5 + $0xb0] sm:$0xff]
        %v941 = vld [vmem:[#allocation5 + $0xb8] sm:$0xff]
        %v942 = vld [vmem:[#allocation5 + $0xc0] sm:$0xff]
        %v943 = vld [vmem:[#allocation5 + $0xc8] sm:$0xff]
        %v944 = vld [vmem:[#allocation5 + $0xd0] sm:$0xff]
        %v945 = vld [vmem:[#allocation5 + $0xd8] sm:$0xff]
        %v946 = vld [vmem:[#allocation5 + $0xe0] sm:$0xff]
        %v947 = vld [vmem:[#allocation5 + $0xe8] sm:$0xff]
        %v948 = vld [vmem:[#allocation5 + $0xf0] sm:$0xff]
        %v949 = vld [vmem:[#allocation5 + $0xf8] sm:$0xff]
        %v950 = vld [vmem:[#allocation5 + $0x100] sm:$0xff]
        %v951 = vld [vmem:[#allocation5 + $0x108] sm:$0xff]
        %v952 = vld [vmem:[#allocation5 + $0x110] sm:$0xff]
        %v953 = vld [vmem:[#allocation5 + $0x118] sm:$0xff]
        %v954 = vld [vmem:[#allocation5 + $0x120] sm:$0xff]
        %v955 = vld [vmem:[#allocation5 + $0x128] sm:$0xff]
        %v956 = vld [vmem:[#allocation5 + $0x130] sm:$0xff]
        %v957 = vld [vmem:[#allocation5 + $0x138] sm:$0xff]
        %v958 = vld [vmem:[#allocation5 + $0x140] sm:$0xff]
        %v959 = vld [vmem:[#allocation5 + $0x148] sm:$0xff]
        %v960 = vld [vmem:[#allocation5 + $0x150] sm:$0xff]
        %v961 = vld [vmem:[#allocation5 + $0x158] sm:$0xff]
        %v962 = vld [vmem:[#allocation5 + $0x160] sm:$0xff]
        %v963 = vld [vmem:[#allocation5 + $0x168] sm:$0xff]
        %v964 = vld [vmem:[#allocation5 + $0x170] sm:$0xff]
        %v965 = vld [vmem:[#allocation5 + $0x178] sm:$0xff]
        %v1014 = vunpack.c.l.b16 %v918
        %v1015 = vunpack.c.h.b16 %v918
        %v1016 = vunpack.c.l.b16 %v919
        %v1017 = vunpack.c.h.b16 %v919
        %v1018 = vunpack.c.l.b16 %v920
        %v1019 = vunpack.c.h.b16 %v920
        %v1020 = vunpack.c.l.b16 %v921
        %v1021 = vunpack.c.h.b16 %v921
        %v1022 = vunpack.c.l.b16 %v922
        %v1023 = vunpack.c.h.b16 %v922
        %v1024 = vunpack.c.l.b16 %v923
        %v1025 = vunpack.c.h.b16 %v923
        %v1026 = vunpack.c.l.b16 %v924
        %v1027 = vunpack.c.h.b16 %v924
        %v1028 = vunpack.c.l.b16 %v925
        %v1029 = vunpack.c.h.b16 %v925
        %v1030 = vunpack.c.l.b16 %v926
        %v1031 = vunpack.c.h.b16 %v926
        %v1032 = vunpack.c.l.b16 %v927
        %v1033 = vunpack.c.h.b16 %v927
        %v1034 = vunpack.c.l.b16 %v928
        %v1035 = vunpack.c.h.b16 %v928
        %v1036 = vunpack.c.l.b16 %v929
        %v1037 = vunpack.c.h.b16 %v929
        %v1038 = vunpack.c.l.b16 %v930
        %v1039 = vunpack.c.h.b16 %v930
        %v1040 = vunpack.c.l.b16 %v931
        %v1041 = vunpack.c.h.b16 %v931
        %v1042 = vunpack.c.l.b16 %v932
        %v1043 = vunpack.c.h.b16 %v932
        %v1044 = vunpack.c.l.b16 %v933
        %v1045 = vunpack.c.h.b16 %v933
        %v1046 = vunpack.c.l.b16 %v934
        %v1047 = vunpack.c.h.b16 %v934
        %v1048 = vunpack.c.l.b16 %v935
        %v1049 = vunpack.c.h.b16 %v935
        %v1050 = vunpack.c.l.b16 %v936
        %v1051 = vunpack.c.h.b16 %v936
        %v1052 = vunpack.c.l.b16 %v937
        %v1053 = vunpack.c.h.b16 %v937
        %v1054 = vunpack.c.l.b16 %v938
        %v1055 = vunpack.c.h.b16 %v938
        %v1056 = vunpack.c.l.b16 %v939
        %v1057 = vunpack.c.h.b16 %v939
        %v1058 = vunpack.c.l.b16 %v940
        %v1059 = vunpack.c.h.b16 %v940
        %v1060 = vunpack.c.l.b16 %v941
        %v1061 = vunpack.c.h.b16 %v941
        %v1062 = vunpack.c.l.b16 %v942
        %v1063 = vunpack.c.h.b16 %v942
        %v1064 = vunpack.c.l.b16 %v943
        %v1065 = vunpack.c.h.b16 %v943
        %v1066 = vunpack.c.l.b16 %v944
        %v1067 = vunpack.c.h.b16 %v944
        %v1068 = vunpack.c.l.b16 %v945
        %v1069 = vunpack.c.h.b16 %v945
        %v1070 = vunpack.c.l.b16 %v946
        %v1071 = vunpack.c.h.b16 %v946
        %v1072 = vunpack.c.l.b16 %v947
        %v1073 = vunpack.c.h.b16 %v947
        %v1074 = vunpack.c.l.b16 %v948
        %v1075 = vunpack.c.h.b16 %v948
        %v1076 = vunpack.c.l.b16 %v949
        %v1077 = vunpack.c.h.b16 %v949
        %v1078 = vunpack.c.l.b16 %v950
        %v1079 = vunpack.c.h.b16 %v950
        %v1080 = vunpack.c.l.b16 %v951
        %v1081 = vunpack.c.h.b16 %v951
        %v1082 = vunpack.c.l.b16 %v952
        %v1083 = vunpack.c.h.b16 %v952
        %v1084 = vunpack.c.l.b16 %v953
        %v1085 = vunpack.c.h.b16 %v953
        %v1086 = vunpack.c.l.b16 %v954
        %v1087 = vunpack.c.h.b16 %v954
        %v1088 = vunpack.c.l.b16 %v955
        %v1089 = vunpack.c.h.b16 %v955
        %v1090 = vunpack.c.l.b16 %v956
        %v1091 = vunpack.c.h.b16 %v956
        %v1092 = vunpack.c.l.b16 %v957
        %v1093 = vunpack.c.h.b16 %v957
        %v1094 = vunpack.c.l.b16 %v958
        %v1095 = vunpack.c.h.b16 %v958
        %v1096 = vunpack.c.l.b16 %v959
        %v1097 = vunpack.c.h.b16 %v959
        %v1098 = vunpack.c.l.b16 %v960
        %v1099 = vunpack.c.h.b16 %v960
        %v1100 = vunpack.c.l.b16 %v961
        %v1101 = vunpack.c.h.b16 %v961
        %v1102 = vunpack.c.l.b16 %v962
        %v1103 = vunpack.c.h.b16 %v962
        %v1104 = vunpack.c.l.b16 %v963
        %v1105 = vunpack.c.h.b16 %v963
        %v1106 = vunpack.c.l.b16 %v964
        %v1107 = vunpack.c.h.b16 %v964
        %v1108 = vunpack.c.l.b16 %v965
        %v1109 = vunpack.c.h.b16 %v965
        %v1110 = vpack.c.b16 %v1020, %v1014
        %v1111 = vpack.c.b16 %v1021, %v1015
        %v1112 = vpack.c.b16 %v1022, %v1016
        %v1113 = vpack.c.b16 %v1023, %v1017
        %v1114 = vpack.c.b16 %v1024, %v1018
        %v1115 = vpack.c.b16 %v1025, %v1019
        %v1116 = vpack.c.b16 %v1032, %v1026
        %v1117 = vpack.c.b16 %v1033, %v1027
        %v1118 = vpack.c.b16 %v1034, %v1028
        %v1119 = vpack.c.b16 %v1035, %v1029
        %v1120 = vpack.c.b16 %v1036, %v1030
        %v1121 = vpack.c.b16 %v1037, %v1031
        %v1122 = vpack.c.b16 %v1044, %v1038
        %v1123 = vpack.c.b16 %v1045, %v1039
        %v1124 = vpack.c.b16 %v1046, %v1040
        %v1125 = vpack.c.b16 %v1047, %v1041
        %v1126 = vpack.c.b16 %v1048, %v1042
        %v1127 = vpack.c.b16 %v1049, %v1043
        %v1128 = vpack.c.b16 %v1056, %v1050
        %v1129 = vpack.c.b16 %v1057, %v1051
        %v1130 = vpack.c.b16 %v1058, %v1052
        %v1131 = vpack.c.b16 %v1059, %v1053
        %v1132 = vpack.c.b16 %v1060, %v1054
        %v1133 = vpack.c.b16 %v1061, %v1055
        %v1134 = vpack.c.b16 %v1068, %v1062
        %v1135 = vpack.c.b16 %v1069, %v1063
        %v1136 = vpack.c.b16 %v1070, %v1064
        %v1137 = vpack.c.b16 %v1071, %v1065
        %v1138 = vpack.c.b16 %v1072, %v1066
        %v1139 = vpack.c.b16 %v1073, %v1067
        %v1140 = vpack.c.b16 %v1080, %v1074
        %v1141 = vpack.c.b16 %v1081, %v1075
        %v1142 = vpack.c.b16 %v1082, %v1076
        %v1143 = vpack.c.b16 %v1083, %v1077
        %v1144 = vpack.c.b16 %v1084, %v1078
        %v1145 = vpack.c.b16 %v1085, %v1079
        %v1146 = vpack.c.b16 %v1092, %v1086
        %v1147 = vpack.c.b16 %v1093, %v1087
        %v1148 = vpack.c.b16 %v1094, %v1088
        %v1149 = vpack.c.b16 %v1095, %v1089
        %v1150 = vpack.c.b16 %v1096, %v1090
        %v1151 = vpack.c.b16 %v1097, %v1091
        %v1152 = vpack.c.b16 %v1104, %v1098
        %v1153 = vpack.c.b16 %v1105, %v1099
        %v1154 = vpack.c.b16 %v1106, %v1100
        %v1155 = vpack.c.b16 %v1107, %v1101
        %v1156 = vpack.c.b16 %v1108, %v1102
        %v1157 = vpack.c.b16 %v1109, %v1103
        %1206 = vmatprep.subr.bf16.mxu0 %v1153
        %1207 = vmatpush1.bf16.msra.mxu0 %v1152
        %1208 = vmatprep.subr.bf16.mxu0 %v1147
        %1209 = vmatpush1.bf16.msra.mxu0 %v1146
        %1210 = vmatprep.subr.bf16.mxu0 %v1141
        %1211 = vmatpush1.bf16.msra.mxu0 %v1140
        %1212 = vmatprep.subr.bf16.mxu0 %v1135
        %1213 = vmatpush1.bf16.msra.mxu0 %v1134
        %1214 = vmatprep.subr.bf16.mxu0 %v1129
        %1215 = vmatpush1.bf16.msra.mxu0 %v1128
        %1216 = vmatprep.subr.bf16.mxu0 %v1123
        %1217 = vmatpush1.bf16.msra.mxu0 %v1122
        %1218 = vmatprep.subr.bf16.mxu0 %v1117
        %1219 = vmatpush1.bf16.msra.mxu0 %v1116
        %1220 = vmatprep.subr.bf16.mxu0 %v1111
        %1221 = vmatpush1.bf16.msra.mxu0 %v1110
        %1222 = vmatprep.subr.bf16.mxu0 0
        %1223 = vmatpush2.bf16.msra.mxu0 0
        %1224 = vmatprep.subr.bf16.mxu0 0
        %1225 = vmatpush2.bf16.msra.mxu0 0
        %1226 = vmatprep.subr.bf16.mxu0 0
        %1227 = vmatpush2.bf16.msra.mxu0 0
        %1228 = vmatprep.subr.bf16.mxu0 0
        %1229 = vmatpush2.bf16.msra.mxu0 0
        %1230 = vmatprep.subr.bf16.mxu0 0
        %1231 = vmatpush2.bf16.msra.mxu0 0
        %1232 = vmatprep.subr.bf16.mxu0 0
        %1233 = vmatpush2.bf16.msra.mxu0 0
        %1234 = vmatprep.subr.bf16.mxu0 0
        %1235 = vmatpush2.bf16.msra.mxu0 0
        %1236 = vmatprep.subr.bf16.mxu0 0
        %1237 = vmatpush2.bf16.msra.mxu0 0
        %1238 = vmatprep.mubr.bf16.mxu0 0
        %1239 = vmatmul.mubr.bf16.gmra.mxu0 %v917
        %v1240 = vpop.f32.mrf.mxu0
        %v1241 = vadd.f32 0.0, %v1240
        %v1242 = vpop.f32.mrf.mxu0
        %v1243 = vadd.f32 0.0, %v1242
        %v1244 = vpop.f32.mrf.mxu0
        %v1245 = vpop.f32.mrf.mxu0
        %1246 = vdwg.mxu0
        %1247 = vmatprep.subr.bf16.mxu0 %v1155
        %1248 = vmatpush1.bf16.msra.mxu0 %v1154
        %1249 = vmatprep.subr.bf16.mxu0 %v1149
        %1250 = vmatpush1.bf16.msra.mxu0 %v1148
        %1251 = vmatprep.subr.bf16.mxu0 %v1143
        %1252 = vmatpush1.bf16.msra.mxu0 %v1142
        %1253 = vmatprep.subr.bf16.mxu0 %v1137
        %1254 = vmatpush1.bf16.msra.mxu0 %v1136
        %1255 = vmatprep.subr.bf16.mxu0 %v1131
        %1256 = vmatpush1.bf16.msra.mxu0 %v1130
        %1257 = vmatprep.subr.bf16.mxu0 %v1125
        %1258 = vmatpush1.bf16.msra.mxu0 %v1124
        %1259 = vmatprep.subr.bf16.mxu0 %v1119
        %1260 = vmatpush1.bf16.msra.mxu0 %v1118
        %1261 = vmatprep.subr.bf16.mxu0 %v1113
        %1262 = vmatpush1.bf16.msra.mxu0 %v1112
        %1263 = vmatprep.subr.bf16.mxu0 0
        %1264 = vmatpush2.bf16.msra.mxu0 0
        %1265 = vmatprep.subr.bf16.mxu0 0
        %1266 = vmatpush2.bf16.msra.mxu0 0
        %1267 = vmatprep.subr.bf16.mxu0 0
        %1268 = vmatpush2.bf16.msra.mxu0 0
        %1269 = vmatprep.subr.bf16.mxu0 0
        %1270 = vmatpush2.bf16.msra.mxu0 0
        %1271 = vmatprep.subr.bf16.mxu0 0
        %1272 = vmatpush2.bf16.msra.mxu0 0
        %1273 = vmatprep.subr.bf16.mxu0 0
        %1274 = vmatpush2.bf16.msra.mxu0 0
        %1275 = vmatprep.subr.bf16.mxu0 0
        %1276 = vmatpush2.bf16.msra.mxu0 0
        %1277 = vmatprep.subr.bf16.mxu0 0
        %1278 = vmatpush2.bf16.msra.mxu0 0
        %1279 = vmatprep.mubr.bf16.mxu0 0
        %1280 = vmatmul.mubr.bf16.gmra.mxu0 %v917
        %v1281 = vpop.f32.mrf.mxu0
        %v1282 = vadd.f32 0.0, %v1281
        %v1283 = vpop.f32.mrf.mxu0
        %v1284 = vpop.f32.mrf.mxu0
        %v1285 = vpop.f32.mrf.mxu0
        %v1286 = vadd.f32 0.0, %v1285
        %1287 = vdwg.mxu0
        %1288 = vmatprep.subr.bf16.mxu0 %v1157
        %1289 = vmatpush1.bf16.msra.mxu0 %v1156
        %1290 = vmatprep.subr.bf16.mxu0 %v1151
        %1291 = vmatpush1.bf16.msra.mxu0 %v1150
        %1292 = vmatprep.subr.bf16.mxu0 %v1145
        %1293 = vmatpush1.bf16.msra.mxu0 %v1144
        %1294 = vmatprep.subr.bf16.mxu0 %v1139
        %1295 = vmatpush1.bf16.msra.mxu0 %v1138
        %1296 = vmatprep.subr.bf16.mxu0 %v1133
        %1297 = vmatpush1.bf16.msra.mxu0 %v1132
        %1298 = vmatprep.subr.bf16.mxu0 %v1127
        %1299 = vmatpush1.bf16.msra.mxu0 %v1126
        %1300 = vmatprep.subr.bf16.mxu0 %v1121
        %1301 = vmatpush1.bf16.msra.mxu0 %v1120
        %1302 = vmatprep.subr.bf16.mxu0 %v1115
        %1303 = vmatpush1.bf16.msra.mxu0 %v1114
        %1304 = vmatprep.subr.bf16.mxu0 0
        %1305 = vmatpush2.bf16.msra.mxu0 0
        %1306 = vmatprep.subr.bf16.mxu0 0
        %1307 = vmatpush2.bf16.msra.mxu0 0
        %1308 = vmatprep.subr.bf16.mxu0 0
        %1309 = vmatpush2.bf16.msra.mxu0 0
        %1310 = vmatprep.subr.bf16.mxu0 0
        %1311 = vmatpush2.bf16.msra.mxu0 0
        %1312 = vmatprep.subr.bf16.mxu0 0
        %1313 = vmatpush2.bf16.msra.mxu0 0
        %1314 = vmatprep.subr.bf16.mxu0 0
        %1315 = vmatpush2.bf16.msra.mxu0 0
        %1316 = vmatprep.subr.bf16.mxu0 0
        %1317 = vmatpush2.bf16.msra.mxu0 0
        %1318 = vmatprep.subr.bf16.mxu0 0
        %1319 = vmatpush2.bf16.msra.mxu0 0
        %1320 = vmatprep.mubr.bf16.mxu0 0
        %1321 = vmatmul.mubr.bf16.gmra.mxu0 %v917
        %v1322 = vpop.f32.mrf.mxu0
        %v1323 = vpop.f32.mrf.mxu0
        %v1324 = vpop.f32.mrf.mxu0
        %v1325 = vadd.f32 0.0, %v1324
        %v1326 = vpop.f32.mrf.mxu0
        %v1327 = vadd.f32 0.0, %v1326
        %1328 = vdwg.mxu0
        %s1329 = smul.addr %s856, 4
        %s1330 = scalar_lea.vmem %s340, %s1329 [#allocation3]
        %v1331 = vld [vmem:[%s1330] sm:$0xff]
        %v1332 = vld [vmem:[%s1330 + $0x8] sm:$0xf]
        %v1333 = vunpack.c.l.bf16 %v1331
        %v1334 = vunpack.c.h.bf16 %v1331
        %v1335 = vunpack.c.l.bf16 %v1332
        %s1336 = smul.addr %s848, 4
        %s1337 = scalar_lea.vmem %s347, %s1336 [#allocation4]
        %v1338 = vld [vmem:[%s1337] sm:$0xff]
        %v1339 = vld [vmem:[%s1337 + $0x8] sm:$0xf]
        %v1340 = vunpack.c.l.bf16 %v1338
        %v1341 = vunpack.c.h.bf16 %v1338
        %v1342 = vunpack.c.l.bf16 %v1339
        %v1343 = vadd.f32 %v1333, %v1241
        %v1344 = vxor.u32 %v1343, 2147483648
        %v1345 = vmul.f32 %v1344, 1.442695
        %v1346 = vpow.pop %v1345
        %v1347 = vadd.f32 %v1346, 1.0
        %v1348 = vrcp.pop %v1347
        %v1349 = vmul.f32 1.0, %v1348
        %v1350 = vadd.f32 %v1334, %v1243
        %v1351 = vxor.u32 %v1350, 2147483648
        %v1352 = vmul.f32 %v1351, 1.442695
        %v1353 = vpow.pop %v1352
        %v1354 = vadd.f32 %v1353, 1.0
        %v1355 = vrcp.pop %v1354
        %v1356 = vmul.f32 1.0, %v1355
        %v1357 = vadd.f32 %v1282, %v425
        %v1358 = vmul.f32 %v1349, %v1357
        %v1359 = vadd.f32 %v1335, %v1358
        %v1360 = vtanh.pop %v1359
        %v1361 = vsub.f32 1.0, %v1356
        %v1362 = vmul.f32 %v1361, %v1360
        %v1363 = vmul.f32 %v1356, %v915
        %v1364 = vadd.f32 %v1362, %v1363
        %v1365 = vadd.f32 %v1340, %v1286
        %v1366 = vxor.u32 %v1365, 2147483648
        %v1367 = vmul.f32 %v1366, 1.442695
        %v1368 = vpow.pop %v1367
        %v1369 = vadd.f32 %v1368, 1.0
        %v1370 = vrcp.pop %v1369
        %v1371 = vmul.f32 1.0, %v1370
        %v1372 = vadd.f32 %v1341, %v1325
        %v1373 = vxor.u32 %v1372, 2147483648
        %v1374 = vmul.f32 %v1373, 1.442695
        %v1375 = vpow.pop %v1374
        %v1376 = vadd.f32 %v1375, 1.0
        %v1377 = vrcp.pop %v1376
        %v1378 = vmul.f32 1.0, %v1377
        %v1379 = vadd.f32 %v1327, %v432
        %v1380 = vmul.f32 %v1371, %v1379
        %v1381 = vadd.f32 %v1342, %v1380
        %v1382 = vtanh.pop %v1381
        %v1383 = vsub.f32 1.0, %v1378
        %v1384 = vmul.f32 %v1383, %v1382
        %v1385 = vmul.f32 %v1378, %v916
        %v1386 = vadd.f32 %v1384, %v1385
        %1387 = vst [vmem:[#allocation2] sm:$0xff] %v1364
        %1388 = vst [vmem:[#allocation2 + $0x8] sm:$0xff] %v1386
        %v1389 = vpack.c.bf16 %v1364, %v1364
        %s1390 = scalar_lea.vmem %s403, 4
        %1391 = vst [vmem:[%s1390] sm:$0xf] %v1389
        %v1392 = vpack.c.bf16 %v1386, %v1386
        %1393 = vst [vmem:[%s410] sm:$0xf] %v1392
        %s1394 = smul.u32 2, %s20
        %p1395 = scmp.lt.s32.totalorder %s1394, 7
        %s1396 = scalar_select %p1395, %s1394, 7
        %s1397 = smul.addr %s1396, 4
        %s1398 = scalar_lea.vmem %s5, %s1397
        %s1399 = ssub.s32 3, %s20
        %s1400 = smul.u32 2, %s1399
        %p1401 = scmp.lt.s32.totalorder %s1400, 7
        %s1402 = scalar_select %p1401, %s1400, 7
        %s1403 = smul.addr %s1402, 4
        %s1404 = scalar_lea.vmem %s6, %s1403
        // Predicated region
        $region109: #{gru_rnn_forward.5} parent=83 // pred_check
          %p1405 = pneg %p155
        $region110: #{gru_rnn_forward.5} parent=83 // pred_check_branch
          %1407 = sbr.rel (%p1405) target = $region112
        $region111: #{gru_rnn_forward.5} parent=83 // pred_region
          %s1408 = smul.u32 2, %s20
        $region112: #{gru_rnn_forward.5} parent=83 // pred_fallthru
          _
        // Predicated region
        $region113: #{gru_rnn_forward.5} parent=83 // pred_check
          %p1409 = pneg %p183
        $region114: #{gru_rnn_forward.5} parent=83 // pred_check_branch
          %1411 = sbr.rel (%p1409) target = $region116
        $region115: #{gru_rnn_forward.5} parent=83 // pred_region
          %s1412 = ssub.s32 3, %s20
          %s1413 = smul.u32 2, %s1412
        $region116: #{gru_rnn_forward.5} parent=83 // pred_fallthru
          _
      $region84: #{gru_rnn_forward.5} parent=5 // pred_fallthru
        _
      %p1414 = scmp.le.s32.totalorder 2, %s15
      // Predicated region
      $region117: #{gru_rnn_forward.5} parent=5 // pred_check
        %p1415 = pneg %p1414
      $region118: #{gru_rnn_forward.5} parent=5 // pred_check_branch
        %1417 = sbr.rel (%p1415) target = $region120
      $region119: #{gru_rnn_forward.5} parent=5 // pred_region
        %s1418 = ssub.s32 %s15, 2
        // Predicated region
        $region121: #{gru_rnn_forward.5} parent=119 // pred_check
          %p1419 = pneg %p161
        $region122: #{gru_rnn_forward.5} parent=119 // pred_check_branch
          %1421 = sbr.rel (%p1419) target = $region124
        $region123: #{gru_rnn_forward.5} parent=119 // pred_region
          %s1422 = smul.u32 2, %s21
          %p1423 = scmp.lt.s32.totalorder %s1422, 7
          %s1424 = scalar_select %p1423, %s1422, 7
          %s1425 = smul.addr %s1424, 4
          %s1426 = scalar_lea.vmem %s5, %s1425
        $region124: #{gru_rnn_forward.5} parent=119 // pred_fallthru
          _
        // Predicated region
        $region125: #{gru_rnn_forward.5} parent=119 // pred_check
          %p1427 = pneg %p189
        $region126: #{gru_rnn_forward.5} parent=119 // pred_check_branch
          %1429 = sbr.rel (%p1427) target = $region128
        $region127: #{gru_rnn_forward.5} parent=119 // pred_region
          %s1430 = ssub.s32 3, %s21
          %s1431 = smul.u32 2, %s1430
          %p1432 = scmp.lt.s32.totalorder %s1431, 7
          %s1433 = scalar_select %p1432, %s1431, 7
          %s1434 = smul.addr %s1433, 4
          %s1435 = scalar_lea.vmem %s6, %s1434
        $region128: #{gru_rnn_forward.5} parent=119 // pred_fallthru
          _
      $region120: #{gru_rnn_forward.5} parent=5 // pred_fallthru
        _
    $region6: #{gru_rnn_forward.5} parent=1 // loop_footer
      %s19 = sadd.s32 1, %s15
    $region7: #{gru_rnn_forward.5} parent=1 // loop_footer_branch
      %14 = sbr.rel target = $region3
    $region8: #{gru_rnn_forward.5} parent=1 // loop_exit
      _
    %1436 = vsyncpa [#allocation6], 1
    %s1437 = scalar_lea.sflag [#allocation6], 1
    %1438 = vsyncpa %s1437, 1
    %1439 = vsyncpa [#allocation8], 1

// kernel: gru_rnn_forward.6
$region0: #{gru_rnn_forward.6}
  #allocation0 [shape = 'u32[]', space=smem, size = 0x4, offset = 0x4, fixed_abs, tag = 'smem constant byte address 0x4 - core index']
  #allocation1 [shape = 'u32[144,128]{1,0:T(1,128)}', space=vmem, size = 0x12000, scoped, tag = 'internal scratch']
  %s0 = inlined_call_operand.vmem [shape: bf16[64,128], index: 0, kind: input, shape index: {}]
  %s1 = inlined_call_operand.vmem [shape: bf16[64,128], index: 1, kind: input, shape index: {}]
  %s2 = inlined_call_operand.vmem [shape: bf16[128,384], index: 2, kind: input, shape index: {}]
  %s3 = inlined_call_operand.hbm [shape: bf16[128,384], index: 3, kind: input, shape index: {}]
  %s4 = inlined_call_operand.vmem [shape: f32[1,384], index: 4, kind: input, shape index: {}]
  %s5 = inlined_call_operand.vmem [shape: bf16[64,384], index: 5, kind: output, shape index: {}]
  %s6 = sld [smem:[#allocation0]]
  $region57: #{gru_rnn_forward.6} parent=0
    _
  %s8 = ssub.s32 1, %s6
  %s9 = scalar_select 0, %s8, %s6
  $region1: #{gru_rnn_forward.6} parent=0
    #allocation2 [shape = 'u8[98304]{0}', space=vmem, size = 0x18000, scoped, tag = 'input window, operand 3, single buffered']
    #allocation3 [shape = 's32[2]{0}', space=sflag, size = 0x8, scoped, tag = 'scoped memory for gru_rnn_forward.6']
    %10 = vsyncpa [#allocation3], 0
    loop: start=0, step=1, limit=6
    $region2: #{gru_rnn_forward.6} parent=1 // loop_pre_header
      _
    $region3: #{gru_rnn_forward.6} parent=1 // loop_header
      %s12 = sphi 0, %s16
      %p13 = scmp.ge.s32.totalorder %s12, 6
      %s22 = sphi 0, %s24
      %s25 = sphi 0, %s22
      %s26 = sphi 0, %s25
      %s42 = sphi 0, %s26
      %s48 = sphi 0, %s50
      %s51 = sphi 0, %s48
      %s52 = sphi 0, %s51
      %s68 = sphi 0, %s52
      %s72 = sphi 0, %s72
      %s74 = sphi 0, %s72
      %s75 = sphi 0, %s74
      %s89 = sphi 0, %s75
      %s93 = sphi 0, %s93
      %s95 = sphi 0, %s93
      %s96 = sphi 0, %s95
      %s110 = sphi 0, %s96
      %s114 = sphi 0, %s114
      %s116 = sphi 0, %s114
      %s117 = sphi 0, %s116
      %s131 = sphi 0, %s117
      %s137 = sphi 0, %s139
      %s140 = sphi 0, %s137
      %s141 = sphi 0, %s140
      %s157 = sphi 0, %s141
    $region4: #{gru_rnn_forward.6} parent=1 // loop_header_branch
      %15 = sbr.rel (%p13) target = $region8
    $region5: #{gru_rnn_forward.6} parent=1 // loop_body
      %s17 = ssub.s32 %s12, 1
      %s18 = ssub.s32 %s12, 2
      %s19 = sadd.s32 %s12, 1
      %s20 = ssub.s32 %s12, %s19
      %p21 = scmp.eq.s32.totalorder %s20, 0
      %s23 = sadd.s32 %s22, 1
      %s24 = scalar_select %p21, %s22, %s23
      %p27 = pneg %p21
      %p28 = scmp.eq.s32.totalorder %s12, 3
      %p29 = por %p27, %p28
      %p30 = scmp.ne.s32.totalorder %s22, %s25
      %p31 = scmp.eq.s32.totalorder %s12, 0
      %p32 = por %p30, %p31
      %p33 = scmp.ne.s32.totalorder %s22, %s25
      %p34 = scmp.eq.s32.totalorder %s17, 3
      %p35 = por %p33, %p34
      %p36 = scmp.ne.s32.totalorder %s25, %s26
      %p37 = scmp.eq.s32.totalorder %s17, 0
      %p38 = por %p36, %p37
      %p39 = scmp.ne.s32.totalorder %s25, %s26
      %p40 = scmp.eq.s32.totalorder %s18, 3
      %p41 = por %p39, %p40
      %p43 = scmp.ne.s32.totalorder %s26, %s42
      %p44 = scmp.eq.s32.totalorder %s18, 0
      %p45 = por %p43, %p44
      %s46 = ssub.s32 %s12, %s19
      %p47 = scmp.eq.s32.totalorder %s46, 0
      %s49 = sadd.s32 %s48, 1
      %s50 = scalar_select %p47, %s48, %s49
      %p53 = pneg %p47
      %p54 = scmp.eq.s32.totalorder %s12, 3
      %p55 = por %p53, %p54
      %p56 = scmp.ne.s32.totalorder %s48, %s51
      %p57 = scmp.eq.s32.totalorder %s12, 0
      %p58 = por %p56, %p57
      %p59 = scmp.ne.s32.totalorder %s48, %s51
      %p60 = scmp.eq.s32.totalorder %s17, 3
      %p61 = por %p59, %p60
      %p62 = scmp.ne.s32.totalorder %s51, %s52
      %p63 = scmp.eq.s32.totalorder %s17, 0
      %p64 = por %p62, %p63
      %p65 = scmp.ne.s32.totalorder %s51, %s52
      %p66 = scmp.eq.s32.totalorder %s18, 3
      %p67 = por %p65, %p66
      %p69 = scmp.ne.s32.totalorder %s52, %s68
      %p70 = scmp.eq.s32.totalorder %s18, 0
      %p71 = por %p69, %p70
      %s73 = sadd.s32 %s72, 1
      %p76 = scmp.eq.s32.totalorder %s12, 3
      %p77 = scmp.ne.s32.totalorder %s72, %s74
      %p78 = scmp.eq.s32.totalorder %s12, 0
      %p79 = por %p77, %p78
      %p80 = scmp.ne.s32.totalorder %s72, %s74
      %p81 = scmp.eq.s32.totalorder %s17, 3
      %p82 = por %p80, %p81
      %p83 = scmp.ne.s32.totalorder %s74, %s75
      %p84 = scmp.eq.s32.totalorder %s17, 0
      %p85 = por %p83, %p84
      %p86 = scmp.ne.s32.totalorder %s74, %s75
      %p87 = scmp.eq.s32.totalorder %s18, 3
      %p88 = por %p86, %p87
      %p90 = scmp.ne.s32.totalorder %s75, %s89
      %p91 = scmp.eq.s32.totalorder %s18, 0
      %p92 = por %p90, %p91
      %s94 = sadd.s32 %s93, 1
      %p97 = scmp.eq.s32.totalorder %s12, 3
      %p98 = scmp.ne.s32.totalorder %s93, %s95
      %p99 = scmp.eq.s32.totalorder %s12, 0
      %p100 = por %p98, %p99
      %p101 = scmp.ne.s32.totalorder %s93, %s95
      %p102 = scmp.eq.s32.totalorder %s17, 3
      %p103 = por %p101, %p102
      %p104 = scmp.ne.s32.totalorder %s95, %s96
      %p105 = scmp.eq.s32.totalorder %s17, 0
      %p106 = por %p104, %p105
      %p107 = scmp.ne.s32.totalorder %s95, %s96
      %p108 = scmp.eq.s32.totalorder %s18, 3
      %p109 = por %p107, %p108
      %p111 = scmp.ne.s32.totalorder %s96, %s110
      %p112 = scmp.eq.s32.totalorder %s18, 0
      %p113 = por %p111, %p112
      %s115 = sadd.s32 %s114, 1
      %p118 = scmp.eq.s32.totalorder %s12, 3
      %p119 = scmp.ne.s32.totalorder %s114, %s116
      %p120 = scmp.eq.s32.totalorder %s12, 0
      %p121 = por %p119, %p120
      %p122 = scmp.ne.s32.totalorder %s114, %s116
      %p123 = scmp.eq.s32.totalorder %s17, 3
      %p124 = por %p122, %p123
      %p125 = scmp.ne.s32.totalorder %s116, %s117
      %p126 = scmp.eq.s32.totalorder %s17, 0
      %p127 = por %p125, %p126
      %p128 = scmp.ne.s32.totalorder %s116, %s117
      %p129 = scmp.eq.s32.totalorder %s18, 3
      %p130 = por %p128, %p129
      %p132 = scmp.ne.s32.totalorder %s117, %s131
      %p133 = scmp.eq.s32.totalorder %s18, 0
      %p134 = por %p132, %p133
      %s135 = ssub.s32 %s12, %s19
      %p136 = scmp.eq.s32.totalorder %s135, 0
      %s138 = sadd.s32 %s137, 1
      %s139 = scalar_select %p136, %s137, %s138
      %p142 = pneg %p136
      %p143 = scmp.eq.s32.totalorder %s12, 3
      %p144 = por %p142, %p143
      %p145 = scmp.ne.s32.totalorder %s137, %s140
      %p146 = scmp.eq.s32.totalorder %s12, 0
      %p147 = por %p145, %p146
      %p148 = scmp.ne.s32.totalorder %s137, %s140
      %p149 = scmp.eq.s32.totalorder %s17, 3
      %p150 = por %p148, %p149
      %p151 = scmp.ne.s32.totalorder %s140, %s141
      %p152 = scmp.eq.s32.totalorder %s17, 0
      %p153 = por %p151, %p152
      %p154 = scmp.ne.s32.totalorder %s140, %s141
      %p155 = scmp.eq.s32.totalorder %s18, 3
      %p156 = por %p154, %p155
      %p158 = scmp.ne.s32.totalorder %s141, %s157
      %p159 = scmp.eq.s32.totalorder %s18, 0
      %p160 = por %p158, %p159
      %p161 = scmp.le.s32.totalorder 1, %s12
      %p162 = scmp.lt.s32.totalorder %s12, 5
      %p163 = pnand %p161, %p162
      %p164 = pneg %p163
      // Predicated region
      $region9: #{gru_rnn_forward.6} parent=5 // pred_check
        _
      $region10: #{gru_rnn_forward.6} parent=5 // pred_check_branch
        %166 = sbr.rel (%p163) target = $region12
      $region11: #{gru_rnn_forward.6} parent=5 // pred_region
        %s167 = ssub.s32 %s12, 1
        // Predicated region
        $region13: #{gru_rnn_forward.6} parent=11 // pred_check
          %p168 = pneg %p85
        $region14: #{gru_rnn_forward.6} parent=11 // pred_check_branch
          %170 = sbr.rel (%p168) target = $region16
        $region15: #{gru_rnn_forward.6} parent=11 // pred_region
          _
        $region16: #{gru_rnn_forward.6} parent=11 // pred_fallthru
          _
        // Predicated region
        $region17: #{gru_rnn_forward.6} parent=11 // pred_check
          %p171 = pneg %p106
        $region18: #{gru_rnn_forward.6} parent=11 // pred_check_branch
          %173 = sbr.rel (%p171) target = $region20
        $region19: #{gru_rnn_forward.6} parent=11 // pred_region
          %s175 = ssub.s32 3072, 3072
          %176 = vsyncadd [#allocation3], %s175
          %s177 = sshll.u32 [#allocation2], 4
          %s178 = int_to_ptr.vmem [resolvable:$true] %s177
          %183 = dma.hbm_to_vmem [thread:$0]  %s3, 3072, %s178, [#allocation3], 192, 192, 12
        $region20: #{gru_rnn_forward.6} parent=11 // pred_fallthru
          _
        // Predicated region
        $region21: #{gru_rnn_forward.6} parent=11 // pred_check
          %p184 = pneg %p127
        $region22: #{gru_rnn_forward.6} parent=11 // pred_check_branch
          %186 = sbr.rel (%p184) target = $region24
        $region23: #{gru_rnn_forward.6} parent=11 // pred_region
          _
        $region24: #{gru_rnn_forward.6} parent=11 // pred_fallthru
          _
      $region12: #{gru_rnn_forward.6} parent=5 // pred_fallthru
        _
      %p187 = scmp.lt.s32.totalorder %s12, 4
      // Predicated region
      $region25: #{gru_rnn_forward.6} parent=5 // pred_check
        %p188 = pneg %p187
      $region26: #{gru_rnn_forward.6} parent=5 // pred_check_branch
        %190 = sbr.rel (%p188) target = $region28
      $region27: #{gru_rnn_forward.6} parent=5 // pred_region
        // Predicated region
        $region29: #{gru_rnn_forward.6} parent=27 // pred_check
          %p191 = pneg %p32
        $region30: #{gru_rnn_forward.6} parent=27 // pred_check_branch
          %193 = sbr.rel (%p191) target = $region32
        $region31: #{gru_rnn_forward.6} parent=27 // pred_region
          %s194 = smul.u32 2, %s12
          %p195 = scmp.lt.s32.totalorder %s194, 7
          %s196 = scalar_select %p195, %s194, 7
          %s197 = smul.addr %s196, 4
          %s198 = scalar_lea.vmem %s0, %s197
          %s199 = smul.u32 2, %s12
        $region32: #{gru_rnn_forward.6} parent=27 // pred_fallthru
          _
        // Predicated region
        $region33: #{gru_rnn_forward.6} parent=27 // pred_check
          %p200 = pneg %p58
        $region34: #{gru_rnn_forward.6} parent=27 // pred_check_branch
          %202 = sbr.rel (%p200) target = $region36
        $region35: #{gru_rnn_forward.6} parent=27 // pred_region
          %s203 = smul.u32 2, %s12
          %p204 = scmp.lt.s32.totalorder %s203, 7
          %s205 = scalar_select %p204, %s203, 7
          %s206 = smul.addr %s205, 4
          %s207 = scalar_lea.vmem %s1, %s206
          %s208 = smul.u32 2, %s12
        $region36: #{gru_rnn_forward.6} parent=27 // pred_fallthru
          _
      $region28: #{gru_rnn_forward.6} parent=5 // pred_fallthru
        _
      %p209 = scmp.le.s32.totalorder 1, %s12
      %p210 = scmp.lt.s32.totalorder %s12, 5
      %p211 = pnand %p209, %p210
      %p212 = pneg %p211
      // Predicated region
      $region37: #{gru_rnn_forward.6} parent=5 // pred_check
        _
      $region38: #{gru_rnn_forward.6} parent=5 // pred_check_branch
        %214 = sbr.rel (%p211) target = $region40
      $region39: #{gru_rnn_forward.6} parent=5 // pred_region
        %s215 = ssub.s32 %s12, 1
        // Predicated region
        $region41: #{gru_rnn_forward.6} parent=39 // pred_check
          %p216 = pneg %p106
        $region42: #{gru_rnn_forward.6} parent=39 // pred_check_branch
          %218 = sbr.rel (%p216) target = $region44
        $region43: #{gru_rnn_forward.6} parent=39 // pred_region
          %219 = dma.done [#allocation3], 3072
        $region44: #{gru_rnn_forward.6} parent=39 // pred_fallthru
          _
        %s220 = smul.u32 2, %s17
        %p221 = scmp.lt.s32.totalorder %s220, 7
        %s222 = scalar_select %p221, %s220, 7
        %s223 = smul.addr %s222, 4
        %s224 = scalar_lea.vmem %s0, %s223
        %p225 = pneg %p38
        %p226 = pneg %p35
        %s227 = smul.u32 2, %s17
        %p228 = scmp.lt.s32.totalorder %s227, 7
        %s229 = scalar_select %p228, %s227, 7
        %s230 = smul.addr %s229, 4
        %s231 = scalar_lea.vmem %s1, %s230
        %p232 = pneg %p64
        %p233 = pneg %p61
        %p234 = pneg %p85
        %p235 = pneg %p82
        %p236 = pneg %p106
        %p237 = pneg %p103
        %p238 = pneg %p127
        %p239 = pneg %p124
        %p240 = pneg %p153
        %p241 = pneg %p150
        %s242 = smul.u32 2, %s17
        %p243 = scmp.lt.s32.totalorder %s242, 7
        %s244 = scalar_select %p243, %s242, 7
        %s245 = smul.addr %s244, 3
        %s246 = smul.addr %s245, 4
        %s247 = scalar_lea.vmem %s5, %s246
        %s248 = smul.u32 2, %s17
        %p249 = scmp.lt.s32.totalorder %s248, 7
        %s250 = scalar_select %p249, %s248, 7
        %s251 = smul.addr %s250, 4
        %s252 = scalar_lea.vmem %s0, %s251
        %s253 = smul.u32 2, %s17
        %s254 = smul.u32 2, %s17
        %p255 = scmp.lt.s32.totalorder %s254, 7
        %s256 = scalar_select %p255, %s254, 7
        %s257 = smul.addr %s256, 4
        %s258 = scalar_lea.vmem %s1, %s257
        %s259 = smul.u32 2, %s17
        %s260 = smul.u32 2, %s17
        %p261 = scmp.lt.s32.totalorder %s260, 7
        %s262 = scalar_select %p261, %s260, 7
        %s263 = smul.addr %s262, 3
        %s264 = smul.addr %s263, 4
        %s265 = scalar_lea.vmem %s5, %s264
        %s266 = smul.u32 2, %s17
        %v268 = vld [vmem:[%s252] sm:$0xf]
        %v269 = vld [vmem:[%s252 + $0x4] sm:$0xf]
        %v270 = vld [vmem:[%s2] sm:$0xff]
        %v271 = vld [vmem:[%s2 + $0x8] sm:$0xf]
        %v272 = vld [vmem:[%s2 + $0xc] sm:$0xff]
        %v273 = vld [vmem:[%s2 + $0x14] sm:$0xf]
        %v274 = vld [vmem:[%s2 + $0x18] sm:$0xff]
        %v275 = vld [vmem:[%s2 + $0x20] sm:$0xf]
        %v276 = vld [vmem:[%s2 + $0x24] sm:$0xff]
        %v277 = vld [vmem:[%s2 + $0x2c] sm:$0xf]
        %v278 = vld [vmem:[%s2 + $0x30] sm:$0xff]
        %v279 = vld [vmem:[%s2 + $0x38] sm:$0xf]
        %v280 = vld [vmem:[%s2 + $0x3c] sm:$0xff]
        %v281 = vld [vmem:[%s2 + $0x44] sm:$0xf]
        %v282 = vld [vmem:[%s2 + $0x48] sm:$0xff]
        %v283 = vld [vmem:[%s2 + $0x50] sm:$0xf]
        %v284 = vld [vmem:[%s2 + $0x54] sm:$0xff]
        %v285 = vld [vmem:[%s2 + $0x5c] sm:$0xf]
        %v286 = vld [vmem:[%s2 + $0x60] sm:$0xff]
        %v287 = vld [vmem:[%s2 + $0x68] sm:$0xf]
        %v288 = vld [vmem:[%s2 + $0x6c] sm:$0xff]
        %v289 = vld [vmem:[%s2 + $0x74] sm:$0xf]
        %v290 = vld [vmem:[%s2 + $0x78] sm:$0xff]
        %v291 = vld [vmem:[%s2 + $0x80] sm:$0xf]
        %v292 = vld [vmem:[%s2 + $0x84] sm:$0xff]
        %v293 = vld [vmem:[%s2 + $0x8c] sm:$0xf]
        %v294 = vld [vmem:[%s2 + $0x90] sm:$0xff]
        %v295 = vld [vmem:[%s2 + $0x98] sm:$0xf]
        %v296 = vld [vmem:[%s2 + $0x9c] sm:$0xff]
        %v297 = vld [vmem:[%s2 + $0xa4] sm:$0xf]
        %v298 = vld [vmem:[%s2 + $0xa8] sm:$0xff]
        %v299 = vld [vmem:[%s2 + $0xb0] sm:$0xf]
        %v300 = vld [vmem:[%s2 + $0xb4] sm:$0xff]
        %v301 = vld [vmem:[%s2 + $0xbc] sm:$0xf]
        %v302 = vld [vmem:[%s258] sm:$0xf]
        %v303 = vld [vmem:[%s258 + $0x4] sm:$0xf]
        %v304 = vld [vmem:[#allocation2] sm:$0xff]
        %v305 = vld [vmem:[#allocation2 + $0x8] sm:$0xf]
        %v306 = vld [vmem:[#allocation2 + $0xc] sm:$0xff]
        %v307 = vld [vmem:[#allocation2 + $0x14] sm:$0xf]
        %v308 = vld [vmem:[#allocation2 + $0x18] sm:$0xff]
        %v309 = vld [vmem:[#allocation2 + $0x20] sm:$0xf]
        %v310 = vld [vmem:[#allocation2 + $0x24] sm:$0xff]
        %v311 = vld [vmem:[#allocation2 + $0x2c] sm:$0xf]
        %v312 = vld [vmem:[#allocation2 + $0x30] sm:$0xff]
        %v313 = vld [vmem:[#allocation2 + $0x38] sm:$0xf]
        %v314 = vld [vmem:[#allocation2 + $0x3c] sm:$0xff]
        %v315 = vld [vmem:[#allocation2 + $0x44] sm:$0xf]
        %v316 = vld [vmem:[#allocation2 + $0x48] sm:$0xff]
        %v317 = vld [vmem:[#allocation2 + $0x50] sm:$0xf]
        %v318 = vld [vmem:[#allocation2 + $0x54] sm:$0xff]
        %v319 = vld [vmem:[#allocation2 + $0x5c] sm:$0xf]
        %v320 = vld [vmem:[#allocation2 + $0x60] sm:$0xff]
        %v321 = vld [vmem:[#allocation2 + $0x68] sm:$0xf]
        %v322 = vld [vmem:[#allocation2 + $0x6c] sm:$0xff]
        %v323 = vld [vmem:[#allocation2 + $0x74] sm:$0xf]
        %v324 = vld [vmem:[#allocation2 + $0x78] sm:$0xff]
        %v325 = vld [vmem:[#allocation2 + $0x80] sm:$0xf]
        %v326 = vld [vmem:[#allocation2 + $0x84] sm:$0xff]
        %v327 = vld [vmem:[#allocation2 + $0x8c] sm:$0xf]
        %v328 = vld [vmem:[#allocation2 + $0x90] sm:$0xff]
        %v329 = vld [vmem:[#allocation2 + $0x98] sm:$0xf]
        %v330 = vld [vmem:[#allocation2 + $0x9c] sm:$0xff]
        %v331 = vld [vmem:[#allocation2 + $0xa4] sm:$0xf]
        %v332 = vld [vmem:[#allocation2 + $0xa8] sm:$0xff]
        %v333 = vld [vmem:[#allocation2 + $0xb0] sm:$0xf]
        %v334 = vld [vmem:[#allocation2 + $0xb4] sm:$0xff]
        %v335 = vld [vmem:[#allocation2 + $0xbc] sm:$0xf]
        %v338 = vunpack.c.l.b16 %v302
        %v339 = vunpack.c.l.b16 %v303
        %v340 = vpack.c.b16 %v339, %v338
        %v374 = vunpack.c.l.b16 %v304
        %v375 = vunpack.c.h.b16 %v304
        %v376 = vunpack.c.l.b16 %v305
        %v377 = vunpack.c.l.b16 %v306
        %v378 = vunpack.c.h.b16 %v306
        %v379 = vunpack.c.l.b16 %v307
        %v380 = vunpack.c.l.b16 %v308
        %v381 = vunpack.c.h.b16 %v308
        %v382 = vunpack.c.l.b16 %v309
        %v383 = vunpack.c.l.b16 %v310
        %v384 = vunpack.c.h.b16 %v310
        %v385 = vunpack.c.l.b16 %v311
        %v386 = vunpack.c.l.b16 %v312
        %v387 = vunpack.c.h.b16 %v312
        %v388 = vunpack.c.l.b16 %v313
        %v389 = vunpack.c.l.b16 %v314
        %v390 = vunpack.c.h.b16 %v314
        %v391 = vunpack.c.l.b16 %v315
        %v392 = vunpack.c.l.b16 %v316
        %v393 = vunpack.c.h.b16 %v316
        %v394 = vunpack.c.l.b16 %v317
        %v395 = vunpack.c.l.b16 %v318
        %v396 = vunpack.c.h.b16 %v318
        %v397 = vunpack.c.l.b16 %v319
        %v398 = vunpack.c.l.b16 %v320
        %v399 = vunpack.c.h.b16 %v320
        %v400 = vunpack.c.l.b16 %v321
        %v401 = vunpack.c.l.b16 %v322
        %v402 = vunpack.c.h.b16 %v322
        %v403 = vunpack.c.l.b16 %v323
        %v404 = vunpack.c.l.b16 %v324
        %v405 = vunpack.c.h.b16 %v324
        %v406 = vunpack.c.l.b16 %v325
        %v407 = vunpack.c.l.b16 %v326
        %v408 = vunpack.c.h.b16 %v326
        %v409 = vunpack.c.l.b16 %v327
        %v410 = vunpack.c.l.b16 %v328
        %v411 = vunpack.c.h.b16 %v328
        %v412 = vunpack.c.l.b16 %v329
        %v413 = vunpack.c.l.b16 %v330
        %v414 = vunpack.c.h.b16 %v330
        %v415 = vunpack.c.l.b16 %v331
        %v416 = vunpack.c.l.b16 %v332
        %v417 = vunpack.c.h.b16 %v332
        %v418 = vunpack.c.l.b16 %v333
        %v419 = vunpack.c.l.b16 %v334
        %v420 = vunpack.c.h.b16 %v334
        %v421 = vunpack.c.l.b16 %v335
        %v422 = vpack.c.b16 %v377, %v374
        %v423 = vpack.c.b16 %v378, %v375
        %v424 = vpack.c.b16 %v379, %v376
        %v425 = vpack.c.b16 %v383, %v380
        %v426 = vpack.c.b16 %v384, %v381
        %v427 = vpack.c.b16 %v385, %v382
        %v428 = vpack.c.b16 %v389, %v386
        %v429 = vpack.c.b16 %v390, %v387
        %v430 = vpack.c.b16 %v391, %v388
        %v431 = vpack.c.b16 %v395, %v392
        %v432 = vpack.c.b16 %v396, %v393
        %v433 = vpack.c.b16 %v397, %v394
        %v434 = vpack.c.b16 %v401, %v398
        %v435 = vpack.c.b16 %v402, %v399
        %v436 = vpack.c.b16 %v403, %v400
        %v437 = vpack.c.b16 %v407, %v404
        %v438 = vpack.c.b16 %v408, %v405
        %v439 = vpack.c.b16 %v409, %v406
        %v440 = vpack.c.b16 %v413, %v410
        %v441 = vpack.c.b16 %v414, %v411
        %v442 = vpack.c.b16 %v415, %v412
        %v443 = vpack.c.b16 %v419, %v416
        %v444 = vpack.c.b16 %v420, %v417
        %v445 = vpack.c.b16 %v421, %v418
        %470 = vmatprep.subr.bf16.mxu0 %v444
        %471 = vmatpush1.bf16.msra.mxu0 %v443
        %472 = vmatprep.subr.bf16.mxu0 %v441
        %473 = vmatpush1.bf16.msra.mxu0 %v440
        %474 = vmatprep.subr.bf16.mxu0 %v438
        %475 = vmatpush1.bf16.msra.mxu0 %v437
        %476 = vmatprep.subr.bf16.mxu0 %v435
        %477 = vmatpush1.bf16.msra.mxu0 %v434
        %478 = vmatprep.subr.bf16.mxu0 %v432
        %479 = vmatpush1.bf16.msra.mxu0 %v431
        %480 = vmatprep.subr.bf16.mxu0 %v429
        %481 = vmatpush1.bf16.msra.mxu0 %v428
        %482 = vmatprep.subr.bf16.mxu0 %v426
        %483 = vmatpush1.bf16.msra.mxu0 %v425
        %484 = vmatprep.subr.bf16.mxu0 %v423
        %485 = vmatpush1.bf16.msra.mxu0 %v422
        %486 = vmatprep.subr.bf16.mxu0 0
        %487 = vmatpush2.bf16.msra.mxu0 0
        %488 = vmatprep.subr.bf16.mxu0 0
        %489 = vmatpush2.bf16.msra.mxu0 0
        %490 = vmatprep.subr.bf16.mxu0 0
        %491 = vmatpush2.bf16.msra.mxu0 0
        %492 = vmatprep.subr.bf16.mxu0 0
        %493 = vmatpush2.bf16.msra.mxu0 0
        %494 = vmatprep.subr.bf16.mxu0 0
        %495 = vmatpush2.bf16.msra.mxu0 0
        %496 = vmatprep.subr.bf16.mxu0 0
        %497 = vmatpush2.bf16.msra.mxu0 0
        %498 = vmatprep.subr.bf16.mxu0 0
        %499 = vmatpush2.bf16.msra.mxu0 0
        %500 = vmatprep.subr.bf16.mxu0 0
        %501 = vmatpush2.bf16.msra.mxu0 0
        %502 = vmatprep.mubr.bf16.mxu0 0
        %503 = vmatmul.mubr.bf16.gmra.mxu0 %v340
        %v504 = vpop.f32.mrf.mxu0
        %v505 = vadd.f32 0.0, %v504
        %v506 = vpop.f32.mrf.mxu0
        %v507 = vadd.f32 0.0, %v506
        %v508 = vpop.f32.mrf.mxu0
        %v509 = vadd.f32 0.0, %v508
        %v510 = vpop.f32.mrf.mxu0
        %v511 = vadd.f32 0.0, %v510
        %512 = vdwg.mxu0
        %513 = vmatprep.subr.bf16.mxu0 0
        %514 = vmatpush1.bf16.msra.mxu0 %v445
        %515 = vmatprep.subr.bf16.mxu0 0
        %516 = vmatpush1.bf16.msra.mxu0 %v442
        %517 = vmatprep.subr.bf16.mxu0 0
        %518 = vmatpush1.bf16.msra.mxu0 %v439
        %519 = vmatprep.subr.bf16.mxu0 0
        %520 = vmatpush1.bf16.msra.mxu0 %v436
        %521 = vmatprep.subr.bf16.mxu0 0
        %522 = vmatpush1.bf16.msra.mxu0 %v433
        %523 = vmatprep.subr.bf16.mxu0 0
        %524 = vmatpush1.bf16.msra.mxu0 %v430
        %525 = vmatprep.subr.bf16.mxu0 0
        %526 = vmatpush1.bf16.msra.mxu0 %v427
        %527 = vmatprep.subr.bf16.mxu0 0
        %528 = vmatpush1.bf16.msra.mxu0 %v424
        %529 = vmatprep.subr.bf16.mxu0 0
        %530 = vmatpush2.bf16.msra.mxu0 0
        %531 = vmatprep.subr.bf16.mxu0 0
        %532 = vmatpush2.bf16.msra.mxu0 0
        %533 = vmatprep.subr.bf16.mxu0 0
        %534 = vmatpush2.bf16.msra.mxu0 0
        %535 = vmatprep.subr.bf16.mxu0 0
        %536 = vmatpush2.bf16.msra.mxu0 0
        %537 = vmatprep.subr.bf16.mxu0 0
        %538 = vmatpush2.bf16.msra.mxu0 0
        %539 = vmatprep.subr.bf16.mxu0 0
        %540 = vmatpush2.bf16.msra.mxu0 0
        %541 = vmatprep.subr.bf16.mxu0 0
        %542 = vmatpush2.bf16.msra.mxu0 0
        %543 = vmatprep.subr.bf16.mxu0 0
        %544 = vmatpush2.bf16.msra.mxu0 0
        %545 = vmatprep.mubr.bf16.mxu0 0
        %546 = vmatmul.mubr.bf16.gmra.mxu0 %v340
        %v547 = vpop.f32.mrf.mxu0
        %v548 = vadd.f32 0.0, %v547
        %v549 = vpop.f32.mrf.mxu0
        %v550 = vpop.f32.mrf.mxu0
        %v551 = vadd.f32 0.0, %v550
        %v552 = vpop.f32.mrf.mxu0
        %553 = vdwg.mxu0
        %v556 = vunpack.c.l.b16 %v268
        %v557 = vunpack.c.l.b16 %v269
        %v558 = vpack.c.b16 %v557, %v556
        %v592 = vunpack.c.l.b16 %v270
        %v593 = vunpack.c.h.b16 %v270
        %v594 = vunpack.c.l.b16 %v271
        %v595 = vunpack.c.l.b16 %v272
        %v596 = vunpack.c.h.b16 %v272
        %v597 = vunpack.c.l.b16 %v273
        %v598 = vunpack.c.l.b16 %v274
        %v599 = vunpack.c.h.b16 %v274
        %v600 = vunpack.c.l.b16 %v275
        %v601 = vunpack.c.l.b16 %v276
        %v602 = vunpack.c.h.b16 %v276
        %v603 = vunpack.c.l.b16 %v277
        %v604 = vunpack.c.l.b16 %v278
        %v605 = vunpack.c.h.b16 %v278
        %v606 = vunpack.c.l.b16 %v279
        %v607 = vunpack.c.l.b16 %v280
        %v608 = vunpack.c.h.b16 %v280
        %v609 = vunpack.c.l.b16 %v281
        %v610 = vunpack.c.l.b16 %v282
        %v611 = vunpack.c.h.b16 %v282
        %v612 = vunpack.c.l.b16 %v283
        %v613 = vunpack.c.l.b16 %v284
        %v614 = vunpack.c.h.b16 %v284
        %v615 = vunpack.c.l.b16 %v285
        %v616 = vunpack.c.l.b16 %v286
        %v617 = vunpack.c.h.b16 %v286
        %v618 = vunpack.c.l.b16 %v287
        %v619 = vunpack.c.l.b16 %v288
        %v620 = vunpack.c.h.b16 %v288
        %v621 = vunpack.c.l.b16 %v289
        %v622 = vunpack.c.l.b16 %v290
        %v623 = vunpack.c.h.b16 %v290
        %v624 = vunpack.c.l.b16 %v291
        %v625 = vunpack.c.l.b16 %v292
        %v626 = vunpack.c.h.b16 %v292
        %v627 = vunpack.c.l.b16 %v293
        %v628 = vunpack.c.l.b16 %v294
        %v629 = vunpack.c.h.b16 %v294
        %v630 = vunpack.c.l.b16 %v295
        %v631 = vunpack.c.l.b16 %v296
        %v632 = vunpack.c.h.b16 %v296
        %v633 = vunpack.c.l.b16 %v297
        %v634 = vunpack.c.l.b16 %v298
        %v635 = vunpack.c.h.b16 %v298
        %v636 = vunpack.c.l.b16 %v299
        %v637 = vunpack.c.l.b16 %v300
        %v638 = vunpack.c.h.b16 %v300
        %v639 = vunpack.c.l.b16 %v301
        %v640 = vpack.c.b16 %v595, %v592
        %v641 = vpack.c.b16 %v596, %v593
        %v642 = vpack.c.b16 %v597, %v594
        %v643 = vpack.c.b16 %v601, %v598
        %v644 = vpack.c.b16 %v602, %v599
        %v645 = vpack.c.b16 %v603, %v600
        %v646 = vpack.c.b16 %v607, %v604
        %v647 = vpack.c.b16 %v608, %v605
        %v648 = vpack.c.b16 %v609, %v606
        %v649 = vpack.c.b16 %v613, %v610
        %v650 = vpack.c.b16 %v614, %v611
        %v651 = vpack.c.b16 %v615, %v612
        %v652 = vpack.c.b16 %v619, %v616
        %v653 = vpack.c.b16 %v620, %v617
        %v654 = vpack.c.b16 %v621, %v618
        %v655 = vpack.c.b16 %v625, %v622
        %v656 = vpack.c.b16 %v626, %v623
        %v657 = vpack.c.b16 %v627, %v624
        %v658 = vpack.c.b16 %v631, %v628
        %v659 = vpack.c.b16 %v632, %v629
        %v660 = vpack.c.b16 %v633, %v630
        %v661 = vpack.c.b16 %v637, %v634
        %v662 = vpack.c.b16 %v638, %v635
        %v663 = vpack.c.b16 %v639, %v636
        %688 = vmatprep.subr.bf16.mxu0 %v662
        %689 = vmatpush1.bf16.msra.mxu0 %v661
        %690 = vmatprep.subr.bf16.mxu0 %v659
        %691 = vmatpush1.bf16.msra.mxu0 %v658
        %692 = vmatprep.subr.bf16.mxu0 %v656
        %693 = vmatpush1.bf16.msra.mxu0 %v655
        %694 = vmatprep.subr.bf16.mxu0 %v653
        %695 = vmatpush1.bf16.msra.mxu0 %v652
        %696 = vmatprep.subr.bf16.mxu0 %v650
        %697 = vmatpush1.bf16.msra.mxu0 %v649
        %698 = vmatprep.subr.bf16.mxu0 %v647
        %699 = vmatpush1.bf16.msra.mxu0 %v646
        %700 = vmatprep.subr.bf16.mxu0 %v644
        %701 = vmatpush1.bf16.msra.mxu0 %v643
        %702 = vmatprep.subr.bf16.mxu0 %v641
        %703 = vmatpush1.bf16.msra.mxu0 %v640
        %704 = vmatprep.subr.bf16.mxu0 0
        %705 = vmatpush2.bf16.msra.mxu0 0
        %706 = vmatprep.subr.bf16.mxu0 0
        %707 = vmatpush2.bf16.msra.mxu0 0
        %708 = vmatprep.subr.bf16.mxu0 0
        %709 = vmatpush2.bf16.msra.mxu0 0
        %710 = vmatprep.subr.bf16.mxu0 0
        %711 = vmatpush2.bf16.msra.mxu0 0
        %712 = vmatprep.subr.bf16.mxu0 0
        %713 = vmatpush2.bf16.msra.mxu0 0
        %714 = vmatprep.subr.bf16.mxu0 0
        %715 = vmatpush2.bf16.msra.mxu0 0
        %716 = vmatprep.subr.bf16.mxu0 0
        %717 = vmatpush2.bf16.msra.mxu0 0
        %718 = vmatprep.subr.bf16.mxu0 0
        %719 = vmatpush2.bf16.msra.mxu0 0
        %720 = vmatprep.mubr.bf16.mxu0 0
        %721 = vmatmul.mubr.bf16.gmra.mxu0 %v558
        %v722 = vpop.f32.mrf.mxu0
        %v723 = vadd.f32 %v505, %v722
        %v724 = vpop.f32.mrf.mxu0
        %v725 = vadd.f32 %v507, %v724
        %v726 = vpop.f32.mrf.mxu0
        %v727 = vadd.f32 %v509, %v726
        %v728 = vpop.f32.mrf.mxu0
        %v729 = vadd.f32 %v511, %v728
        %730 = vdwg.mxu0
        %731 = vmatprep.subr.bf16.mxu0 0
        %732 = vmatpush1.bf16.msra.mxu0 %v663
        %733 = vmatprep.subr.bf16.mxu0 0
        %734 = vmatpush1.bf16.msra.mxu0 %v660
        %735 = vmatprep.subr.bf16.mxu0 0
        %736 = vmatpush1.bf16.msra.mxu0 %v657
        %737 = vmatprep.subr.bf16.mxu0 0
        %738 = vmatpush1.bf16.msra.mxu0 %v654
        %739 = vmatprep.subr.bf16.mxu0 0
        %740 = vmatpush1.bf16.msra.mxu0 %v651
        %741 = vmatprep.subr.bf16.mxu0 0
        %742 = vmatpush1.bf16.msra.mxu0 %v648
        %743 = vmatprep.subr.bf16.mxu0 0
        %744 = vmatpush1.bf16.msra.mxu0 %v645
        %745 = vmatprep.subr.bf16.mxu0 0
        %746 = vmatpush1.bf16.msra.mxu0 %v642
        %747 = vmatprep.subr.bf16.mxu0 0
        %748 = vmatpush2.bf16.msra.mxu0 0
        %749 = vmatprep.subr.bf16.mxu0 0
        %750 = vmatpush2.bf16.msra.mxu0 0
        %751 = vmatprep.subr.bf16.mxu0 0
        %752 = vmatpush2.bf16.msra.mxu0 0
        %753 = vmatprep.subr.bf16.mxu0 0
        %754 = vmatpush2.bf16.msra.mxu0 0
        %755 = vmatprep.subr.bf16.mxu0 0
        %756 = vmatpush2.bf16.msra.mxu0 0
        %757 = vmatprep.subr.bf16.mxu0 0
        %758 = vmatpush2.bf16.msra.mxu0 0
        %759 = vmatprep.subr.bf16.mxu0 0
        %760 = vmatpush2.bf16.msra.mxu0 0
        %761 = vmatprep.subr.bf16.mxu0 0
        %762 = vmatpush2.bf16.msra.mxu0 0
        %763 = vmatprep.mubr.bf16.mxu0 0
        %764 = vmatmul.mubr.bf16.gmra.mxu0 %v558
        %v765 = vpop.f32.mrf.mxu0
        %v766 = vadd.f32 %v548, %v765
        %v767 = vpop.f32.mrf.mxu0
        %v768 = vpop.f32.mrf.mxu0
        %v769 = vadd.f32 %v551, %v768
        %v770 = vpop.f32.mrf.mxu0
        %771 = vdwg.mxu0
        %v772 = vld [vmem:[%s4] sm:$0x7]
        %v774 = vlaneseq
        %v775 = vshrl.u32 %v774, 7
        %v776 = vsub.s32 0, %v775
        %v777 = vrot.slane %v772, %v776
        %v778 = vlaneseq
        %v779 = vshrl.u32 %v778, 7
        %v780 = vsub.s32 1, %v779
        %v781 = vrot.slane %v772, %v780
        %v782 = vlaneseq
        %v783 = vshrl.u32 %v782, 7
        %v784 = vsub.s32 2, %v783
        %v785 = vrot.slane %v772, %v784
        %v789 = vadd.f32 %v723, %v777
        %v790 = vadd.f32 %v725, %v781
        %v791 = vadd.f32 %v766, %v785
        %v792 = vadd.f32 %v727, %v777
        %v793 = vadd.f32 %v729, %v781
        %v794 = vadd.f32 %v769, %v785
        %v795 = vpack.c.bf16 %v792, %v789
        %v796 = vpack.c.bf16 %v793, %v790
        %v797 = vpack.c.bf16 %v794, %v791
        %v801 = vunpack.c.l.b16 %v795
        %v802 = vunpack.c.l.b16 %v796
        %v803 = vunpack.c.l.b16 %v797
        %v804 = vunpack.c.h.b16 %v795
        %v805 = vunpack.c.h.b16 %v796
        %v806 = vunpack.c.h.b16 %v797
        %v807 = vpack.c.b16 %v802, %v801
        %v808 = vpack.c.b16 %v803, %v803
        %v809 = vpack.c.b16 %v805, %v804
        %v810 = vpack.c.b16 %v806, %v806
        %815 = vst [vmem:[%s265] sm:$0xff] %v807
        %816 = vst [vmem:[%s265 + $0x8] sm:$0xf] %v808
        %817 = vst [vmem:[%s265 + $0xc] sm:$0xff] %v809
        %818 = vst [vmem:[%s265 + $0x14] sm:$0xf] %v810
        %s819 = smul.u32 2, %s17
        %p820 = scmp.lt.s32.totalorder %s819, 7
        %s821 = scalar_select %p820, %s819, 7
        %s822 = smul.addr %s821, 3
        %s823 = smul.addr %s822, 4
        %s824 = scalar_lea.vmem %s5, %s823
        // Predicated region
        $region45: #{gru_rnn_forward.6} parent=39 // pred_check
          %p825 = pneg %p150
        $region46: #{gru_rnn_forward.6} parent=39 // pred_check_branch
          %827 = sbr.rel (%p825) target = $region48
        $region47: #{gru_rnn_forward.6} parent=39 // pred_region
          %s828 = smul.u32 2, %s17
        $region48: #{gru_rnn_forward.6} parent=39 // pred_fallthru
          _
      $region40: #{gru_rnn_forward.6} parent=5 // pred_fallthru
        _
      %p829 = scmp.le.s32.totalorder 2, %s12
      // Predicated region
      $region49: #{gru_rnn_forward.6} parent=5 // pred_check
        %p830 = pneg %p829
      $region50: #{gru_rnn_forward.6} parent=5 // pred_check_branch
        %832 = sbr.rel (%p830) target = $region52
      $region51: #{gru_rnn_forward.6} parent=5 // pred_region
        %s833 = ssub.s32 %s12, 2
        // Predicated region
        $region53: #{gru_rnn_forward.6} parent=51 // pred_check
          %p834 = pneg %p156
        $region54: #{gru_rnn_forward.6} parent=51 // pred_check_branch
          %836 = sbr.rel (%p834) target = $region56
        $region55: #{gru_rnn_forward.6} parent=51 // pred_region
          %s837 = smul.u32 2, %s18
          %p838 = scmp.lt.s32.totalorder %s837, 7
          %s839 = scalar_select %p838, %s837, 7
          %s840 = smul.addr %s839, 3
          %s841 = smul.addr %s840, 4
          %s842 = scalar_lea.vmem %s5, %s841
        $region56: #{gru_rnn_forward.6} parent=51 // pred_fallthru
          _
      $region52: #{gru_rnn_forward.6} parent=5 // pred_fallthru
        _
    $region6: #{gru_rnn_forward.6} parent=1 // loop_footer
      %s16 = sadd.s32 1, %s12
    $region7: #{gru_rnn_forward.6} parent=1 // loop_footer_branch
      %11 = sbr.rel target = $region3
    $region8: #{gru_rnn_forward.6} parent=1 // loop_exit
      _
    %843 = vsyncpa [#allocation3], 1
    %s844 = scalar_lea.sflag [#allocation3], 1
    %845 = vsyncpa %s844, 1

// kernel: gru_rnn_forward.7
$region0: #{gru_rnn_forward.7}
  #allocation0 [shape = 'u32[]', space=smem, size = 0x4, offset = 0x4, fixed_abs, tag = 'smem constant byte address 0x4 - core index']
  #allocation1 [shape = 'u32[144,128]{1,0:T(1,128)}', space=vmem, size = 0x12000, scoped, tag = 'internal scratch']
  #allocation2 [shape = 'f32[8,128]{1,0:T(8,128)}', space=vmem, size = 0x1000, scoped, tag = 'scratch operand']
  %s0 = inlined_call_operand.vmem [shape: bf16[64,384], index: 0, kind: input, shape index: {}]
  %s1 = inlined_call_operand.vmem [shape: bf16[128,384], index: 1, kind: input, shape index: {}]
  %s2 = inlined_call_operand.vmem [shape: f32[1,128], index: 2, kind: input, shape index: {}]
  %s3 = inlined_call_operand.vmem [shape: bf16[8,128], index: 3, kind: input, shape index: {}]
  %s4 = inlined_call_operand.vmem [shape: bf16[8,128], index: 4, kind: input, shape index: {}]
  %s5 = inlined_call_operand.vmem [shape: bf16[128,384], index: 5, kind: input, shape index: {}]
  %s6 = inlined_call_operand.hbm [shape: bf16[128,384], index: 6, kind: input, shape index: {}]
  %s7 = inlined_call_operand.vmem [shape: f32[1,384], index: 7, kind: input, shape index: {}]
  %s8 = inlined_call_operand.vmem [shape: f32[1,128], index: 8, kind: input, shape index: {}]
  %s9 = inlined_call_operand.vmem [shape: bf16[256,1024], index: 9, kind: input, shape index: {}]
  %s10 = inlined_call_operand.vmem [shape: f32[1,1024], index: 10, kind: input, shape index: {}]
  %s11 = inlined_call_operand.vmem [shape: f32[8,1024], index: 11, kind: output, shape index: {}]
  %s12 = sld [smem:[#allocation0]]
  $region89: #{gru_rnn_forward.7} parent=0
    _
  %s14 = ssub.s32 1, %s12
  %s15 = scalar_select 0, %s14, %s12
  $region1: #{gru_rnn_forward.7} parent=0
    #allocation3 [shape = 'u8[98304]{0}', space=vmem, size = 0x18000, scoped, tag = 'input window, operand 6, single buffered']
    #allocation4 [shape = 's32[2]{0}', space=sflag, size = 0x8, scoped, tag = 'scoped memory for gru_rnn_forward.7']
    %16 = vsyncpa [#allocation4], 0
    loop: start=0, step=1, limit=6
    $region2: #{gru_rnn_forward.7} parent=1 // loop_pre_header
      _
    $region3: #{gru_rnn_forward.7} parent=1 // loop_header
      %s18 = sphi 0, %s22
      %p19 = scmp.ge.s32.totalorder %s18, 6
      %s28 = sphi 0, %s30
      %s31 = sphi 0, %s28
      %s32 = sphi 0, %s31
      %s48 = sphi 0, %s32
      %s52 = sphi 0, %s52
      %s54 = sphi 0, %s52
      %s55 = sphi 0, %s54
      %s69 = sphi 0, %s55
      %s73 = sphi 0, %s73
      %s75 = sphi 0, %s73
      %s76 = sphi 0, %s75
      %s90 = sphi 0, %s76
      %s94 = sphi 0, %s94
      %s96 = sphi 0, %s94
      %s97 = sphi 0, %s96
      %s111 = sphi 0, %s97
      %s115 = sphi 0, %s115
      %s117 = sphi 0, %s115
      %s118 = sphi 0, %s117
      %s132 = sphi 0, %s118
      %s136 = sphi 0, %s136
      %s138 = sphi 0, %s136
      %s139 = sphi 0, %s138
      %s153 = sphi 0, %s139
      %s157 = sphi 0, %s157
      %s159 = sphi 0, %s157
      %s160 = sphi 0, %s159
      %s174 = sphi 0, %s160
      %s178 = sphi 0, %s178
      %s180 = sphi 0, %s178
      %s181 = sphi 0, %s180
      %s195 = sphi 0, %s181
      %s199 = sphi 0, %s199
      %s201 = sphi 0, %s199
      %s202 = sphi 0, %s201
      %s216 = sphi 0, %s202
      %s220 = sphi 0, %s220
      %s222 = sphi 0, %s220
      %s223 = sphi 0, %s222
      %s237 = sphi 0, %s223
      %s241 = sphi 0, %s241
      %s243 = sphi 0, %s241
      %s244 = sphi 0, %s243
      %s258 = sphi 0, %s244
      %s262 = sphi 0, %s262
      %s264 = sphi 0, %s262
      %s265 = sphi 0, %s264
      %s279 = sphi 0, %s265
    $region4: #{gru_rnn_forward.7} parent=1 // loop_header_branch
      %21 = sbr.rel (%p19) target = $region8
    $region5: #{gru_rnn_forward.7} parent=1 // loop_body
      %s23 = ssub.s32 %s18, 1
      %s24 = ssub.s32 %s18, 2
      %s25 = sadd.s32 %s18, 1
      %s26 = ssub.s32 %s18, %s25
      %p27 = scmp.eq.s32.totalorder %s26, 0
      %s29 = sadd.s32 %s28, 1
      %s30 = scalar_select %p27, %s28, %s29
      %p33 = pneg %p27
      %p34 = scmp.eq.s32.totalorder %s18, 3
      %p35 = por %p33, %p34
      %p36 = scmp.ne.s32.totalorder %s28, %s31
      %p37 = scmp.eq.s32.totalorder %s18, 0
      %p38 = por %p36, %p37
      %p39 = scmp.ne.s32.totalorder %s28, %s31
      %p40 = scmp.eq.s32.totalorder %s23, 3
      %p41 = por %p39, %p40
      %p42 = scmp.ne.s32.totalorder %s31, %s32
      %p43 = scmp.eq.s32.totalorder %s23, 0
      %p44 = por %p42, %p43
      %p45 = scmp.ne.s32.totalorder %s31, %s32
      %p46 = scmp.eq.s32.totalorder %s24, 3
      %p47 = por %p45, %p46
      %p49 = scmp.ne.s32.totalorder %s32, %s48
      %p50 = scmp.eq.s32.totalorder %s24, 0
      %p51 = por %p49, %p50
      %s53 = sadd.s32 %s52, 1
      %p56 = scmp.eq.s32.totalorder %s18, 3
      %p57 = scmp.ne.s32.totalorder %s52, %s54
      %p58 = scmp.eq.s32.totalorder %s18, 0
      %p59 = por %p57, %p58
      %p60 = scmp.ne.s32.totalorder %s52, %s54
      %p61 = scmp.eq.s32.totalorder %s23, 3
      %p62 = por %p60, %p61
      %p63 = scmp.ne.s32.totalorder %s54, %s55
      %p64 = scmp.eq.s32.totalorder %s23, 0
      %p65 = por %p63, %p64
      %p66 = scmp.ne.s32.totalorder %s54, %s55
      %p67 = scmp.eq.s32.totalorder %s24, 3
      %p68 = por %p66, %p67
      %p70 = scmp.ne.s32.totalorder %s55, %s69
      %p71 = scmp.eq.s32.totalorder %s24, 0
      %p72 = por %p70, %p71
      %s74 = sadd.s32 %s73, 1
      %p77 = scmp.eq.s32.totalorder %s18, 3
      %p78 = scmp.ne.s32.totalorder %s73, %s75
      %p79 = scmp.eq.s32.totalorder %s18, 0
      %p80 = por %p78, %p79
      %p81 = scmp.ne.s32.totalorder %s73, %s75
      %p82 = scmp.eq.s32.totalorder %s23, 3
      %p83 = por %p81, %p82
      %p84 = scmp.ne.s32.totalorder %s75, %s76
      %p85 = scmp.eq.s32.totalorder %s23, 0
      %p86 = por %p84, %p85
      %p87 = scmp.ne.s32.totalorder %s75, %s76
      %p88 = scmp.eq.s32.totalorder %s24, 3
      %p89 = por %p87, %p88
      %p91 = scmp.ne.s32.totalorder %s76, %s90
      %p92 = scmp.eq.s32.totalorder %s24, 0
      %p93 = por %p91, %p92
      %s95 = sadd.s32 %s94, 1
      %p98 = scmp.eq.s32.totalorder %s18, 3
      %p99 = scmp.ne.s32.totalorder %s94, %s96
      %p100 = scmp.eq.s32.totalorder %s18, 0
      %p101 = por %p99, %p100
      %p102 = scmp.ne.s32.totalorder %s94, %s96
      %p103 = scmp.eq.s32.totalorder %s23, 3
      %p104 = por %p102, %p103
      %p105 = scmp.ne.s32.totalorder %s96, %s97
      %p106 = scmp.eq.s32.totalorder %s23, 0
      %p107 = por %p105, %p106
      %p108 = scmp.ne.s32.totalorder %s96, %s97
      %p109 = scmp.eq.s32.totalorder %s24, 3
      %p110 = por %p108, %p109
      %p112 = scmp.ne.s32.totalorder %s97, %s111
      %p113 = scmp.eq.s32.totalorder %s24, 0
      %p114 = por %p112, %p113
      %s116 = sadd.s32 %s115, 1
      %p119 = scmp.eq.s32.totalorder %s18, 3
      %p120 = scmp.ne.s32.totalorder %s115, %s117
      %p121 = scmp.eq.s32.totalorder %s18, 0
      %p122 = por %p120, %p121
      %p123 = scmp.ne.s32.totalorder %s115, %s117
      %p124 = scmp.eq.s32.totalorder %s23, 3
      %p125 = por %p123, %p124
      %p126 = scmp.ne.s32.totalorder %s117, %s118
      %p127 = scmp.eq.s32.totalorder %s23, 0
      %p128 = por %p126, %p127
      %p129 = scmp.ne.s32.totalorder %s117, %s118
      %p130 = scmp.eq.s32.totalorder %s24, 3
      %p131 = por %p129, %p130
      %p133 = scmp.ne.s32.totalorder %s118, %s132
      %p134 = scmp.eq.s32.totalorder %s24, 0
      %p135 = por %p133, %p134
      %s137 = sadd.s32 %s136, 1
      %p140 = scmp.eq.s32.totalorder %s18, 3
      %p141 = scmp.ne.s32.totalorder %s136, %s138
      %p142 = scmp.eq.s32.totalorder %s18, 0
      %p143 = por %p141, %p142
      %p144 = scmp.ne.s32.totalorder %s136, %s138
      %p145 = scmp.eq.s32.totalorder %s23, 3
      %p146 = por %p144, %p145
      %p147 = scmp.ne.s32.totalorder %s138, %s139
      %p148 = scmp.eq.s32.totalorder %s23, 0
      %p149 = por %p147, %p148
      %p150 = scmp.ne.s32.totalorder %s138, %s139
      %p151 = scmp.eq.s32.totalorder %s24, 3
      %p152 = por %p150, %p151
      %p154 = scmp.ne.s32.totalorder %s139, %s153
      %p155 = scmp.eq.s32.totalorder %s24, 0
      %p156 = por %p154, %p155
      %s158 = sadd.s32 %s157, 1
      %p161 = scmp.eq.s32.totalorder %s18, 3
      %p162 = scmp.ne.s32.totalorder %s157, %s159
      %p163 = scmp.eq.s32.totalorder %s18, 0
      %p164 = por %p162, %p163
      %p165 = scmp.ne.s32.totalorder %s157, %s159
      %p166 = scmp.eq.s32.totalorder %s23, 3
      %p167 = por %p165, %p166
      %p168 = scmp.ne.s32.totalorder %s159, %s160
      %p169 = scmp.eq.s32.totalorder %s23, 0
      %p170 = por %p168, %p169
      %p171 = scmp.ne.s32.totalorder %s159, %s160
      %p172 = scmp.eq.s32.totalorder %s24, 3
      %p173 = por %p171, %p172
      %p175 = scmp.ne.s32.totalorder %s160, %s174
      %p176 = scmp.eq.s32.totalorder %s24, 0
      %p177 = por %p175, %p176
      %s179 = sadd.s32 %s178, 1
      %p182 = scmp.eq.s32.totalorder %s18, 3
      %p183 = scmp.ne.s32.totalorder %s178, %s180
      %p184 = scmp.eq.s32.totalorder %s18, 0
      %p185 = por %p183, %p184
      %p186 = scmp.ne.s32.totalorder %s178, %s180
      %p187 = scmp.eq.s32.totalorder %s23, 3
      %p188 = por %p186, %p187
      %p189 = scmp.ne.s32.totalorder %s180, %s181
      %p190 = scmp.eq.s32.totalorder %s23, 0
      %p191 = por %p189, %p190
      %p192 = scmp.ne.s32.totalorder %s180, %s181
      %p193 = scmp.eq.s32.totalorder %s24, 3
      %p194 = por %p192, %p193
      %p196 = scmp.ne.s32.totalorder %s181, %s195
      %p197 = scmp.eq.s32.totalorder %s24, 0
      %p198 = por %p196, %p197
      %s200 = sadd.s32 %s199, 1
      %p203 = scmp.eq.s32.totalorder %s18, 3
      %p204 = scmp.ne.s32.totalorder %s199, %s201
      %p205 = scmp.eq.s32.totalorder %s18, 0
      %p206 = por %p204, %p205
      %p207 = scmp.ne.s32.totalorder %s199, %s201
      %p208 = scmp.eq.s32.totalorder %s23, 3
      %p209 = por %p207, %p208
      %p210 = scmp.ne.s32.totalorder %s201, %s202
      %p211 = scmp.eq.s32.totalorder %s23, 0
      %p212 = por %p210, %p211
      %p213 = scmp.ne.s32.totalorder %s201, %s202
      %p214 = scmp.eq.s32.totalorder %s24, 3
      %p215 = por %p213, %p214
      %p217 = scmp.ne.s32.totalorder %s202, %s216
      %p218 = scmp.eq.s32.totalorder %s24, 0
      %p219 = por %p217, %p218
      %s221 = sadd.s32 %s220, 1
      %p224 = scmp.eq.s32.totalorder %s18, 3
      %p225 = scmp.ne.s32.totalorder %s220, %s222
      %p226 = scmp.eq.s32.totalorder %s18, 0
      %p227 = por %p225, %p226
      %p228 = scmp.ne.s32.totalorder %s220, %s222
      %p229 = scmp.eq.s32.totalorder %s23, 3
      %p230 = por %p228, %p229
      %p231 = scmp.ne.s32.totalorder %s222, %s223
      %p232 = scmp.eq.s32.totalorder %s23, 0
      %p233 = por %p231, %p232
      %p234 = scmp.ne.s32.totalorder %s222, %s223
      %p235 = scmp.eq.s32.totalorder %s24, 3
      %p236 = por %p234, %p235
      %p238 = scmp.ne.s32.totalorder %s223, %s237
      %p239 = scmp.eq.s32.totalorder %s24, 0
      %p240 = por %p238, %p239
      %s242 = sadd.s32 %s241, 1
      %p245 = scmp.eq.s32.totalorder %s18, 3
      %p246 = scmp.ne.s32.totalorder %s241, %s243
      %p247 = scmp.eq.s32.totalorder %s18, 0
      %p248 = por %p246, %p247
      %p249 = scmp.ne.s32.totalorder %s241, %s243
      %p250 = scmp.eq.s32.totalorder %s23, 3
      %p251 = por %p249, %p250
      %p252 = scmp.ne.s32.totalorder %s243, %s244
      %p253 = scmp.eq.s32.totalorder %s23, 0
      %p254 = por %p252, %p253
      %p255 = scmp.ne.s32.totalorder %s243, %s244
      %p256 = scmp.eq.s32.totalorder %s24, 3
      %p257 = por %p255, %p256
      %p259 = scmp.ne.s32.totalorder %s244, %s258
      %p260 = scmp.eq.s32.totalorder %s24, 0
      %p261 = por %p259, %p260
      %s263 = sadd.s32 %s262, 1
      %p266 = scmp.eq.s32.totalorder %s18, 3
      %p267 = scmp.ne.s32.totalorder %s262, %s264
      %p268 = scmp.eq.s32.totalorder %s18, 0
      %p269 = por %p267, %p268
      %p270 = scmp.ne.s32.totalorder %s262, %s264
      %p271 = scmp.eq.s32.totalorder %s23, 3
      %p272 = por %p270, %p271
      %p273 = scmp.ne.s32.totalorder %s264, %s265
      %p274 = scmp.eq.s32.totalorder %s23, 0
      %p275 = por %p273, %p274
      %p276 = scmp.ne.s32.totalorder %s264, %s265
      %p277 = scmp.eq.s32.totalorder %s24, 3
      %p278 = por %p276, %p277
      %p280 = scmp.ne.s32.totalorder %s265, %s279
      %p281 = scmp.eq.s32.totalorder %s24, 0
      %p282 = por %p280, %p281
      %p283 = scmp.le.s32.totalorder 1, %s18
      %p284 = scmp.lt.s32.totalorder %s18, 5
      %p285 = pnand %p283, %p284
      %p286 = pneg %p285
      // Predicated region
      $region9: #{gru_rnn_forward.7} parent=5 // pred_check
        _
      $region10: #{gru_rnn_forward.7} parent=5 // pred_check_branch
        %288 = sbr.rel (%p285) target = $region12
      $region11: #{gru_rnn_forward.7} parent=5 // pred_region
        %s289 = ssub.s32 %s18, 1
        // Predicated region
        $region13: #{gru_rnn_forward.7} parent=11 // pred_check
          %p290 = pneg %p65
        $region14: #{gru_rnn_forward.7} parent=11 // pred_check_branch
          %292 = sbr.rel (%p290) target = $region16
        $region15: #{gru_rnn_forward.7} parent=11 // pred_region
          _
        $region16: #{gru_rnn_forward.7} parent=11 // pred_fallthru
          _
        // Predicated region
        $region17: #{gru_rnn_forward.7} parent=11 // pred_check
          %p293 = pneg %p86
        $region18: #{gru_rnn_forward.7} parent=11 // pred_check_branch
          %295 = sbr.rel (%p293) target = $region20
        $region19: #{gru_rnn_forward.7} parent=11 // pred_region
          _
        $region20: #{gru_rnn_forward.7} parent=11 // pred_fallthru
          _
        // Predicated region
        $region21: #{gru_rnn_forward.7} parent=11 // pred_check
          %p296 = pneg %p107
        $region22: #{gru_rnn_forward.7} parent=11 // pred_check_branch
          %298 = sbr.rel (%p296) target = $region24
        $region23: #{gru_rnn_forward.7} parent=11 // pred_region
          _
        $region24: #{gru_rnn_forward.7} parent=11 // pred_fallthru
          _
        // Predicated region
        $region25: #{gru_rnn_forward.7} parent=11 // pred_check
          %p299 = pneg %p128
        $region26: #{gru_rnn_forward.7} parent=11 // pred_check_branch
          %301 = sbr.rel (%p299) target = $region28
        $region27: #{gru_rnn_forward.7} parent=11 // pred_region
          _
        $region28: #{gru_rnn_forward.7} parent=11 // pred_fallthru
          _
        // Predicated region
        $region29: #{gru_rnn_forward.7} parent=11 // pred_check
          %p302 = pneg %p149
        $region30: #{gru_rnn_forward.7} parent=11 // pred_check_branch
          %304 = sbr.rel (%p302) target = $region32
        $region31: #{gru_rnn_forward.7} parent=11 // pred_region
          _
        $region32: #{gru_rnn_forward.7} parent=11 // pred_fallthru
          _
        // Predicated region
        $region33: #{gru_rnn_forward.7} parent=11 // pred_check
          %p305 = pneg %p170
        $region34: #{gru_rnn_forward.7} parent=11 // pred_check_branch
          %307 = sbr.rel (%p305) target = $region36
        $region35: #{gru_rnn_forward.7} parent=11 // pred_region
          %s309 = ssub.s32 3072, 3072
          %310 = vsyncadd [#allocation4], %s309
          %s311 = sshll.u32 [#allocation3], 4
          %s312 = int_to_ptr.vmem [resolvable:$true] %s311
          %317 = dma.hbm_to_vmem [thread:$0]  %s6, 3072, %s312, [#allocation4], 192, 192, 12
        $region36: #{gru_rnn_forward.7} parent=11 // pred_fallthru
          _
        // Predicated region
        $region37: #{gru_rnn_forward.7} parent=11 // pred_check
          %p318 = pneg %p191
        $region38: #{gru_rnn_forward.7} parent=11 // pred_check_branch
          %320 = sbr.rel (%p318) target = $region40
        $region39: #{gru_rnn_forward.7} parent=11 // pred_region
          _
        $region40: #{gru_rnn_forward.7} parent=11 // pred_fallthru
          _
        // Predicated region
        $region41: #{gru_rnn_forward.7} parent=11 // pred_check
          %p321 = pneg %p212
        $region42: #{gru_rnn_forward.7} parent=11 // pred_check_branch
          %323 = sbr.rel (%p321) target = $region44
        $region43: #{gru_rnn_forward.7} parent=11 // pred_region
          _
        $region44: #{gru_rnn_forward.7} parent=11 // pred_fallthru
          _
        // Predicated region
        $region45: #{gru_rnn_forward.7} parent=11 // pred_check
          %p324 = pneg %p233
        $region46: #{gru_rnn_forward.7} parent=11 // pred_check_branch
          %326 = sbr.rel (%p324) target = $region48
        $region47: #{gru_rnn_forward.7} parent=11 // pred_region
          _
        $region48: #{gru_rnn_forward.7} parent=11 // pred_fallthru
          _
        // Predicated region
        $region49: #{gru_rnn_forward.7} parent=11 // pred_check
          %p327 = pneg %p254
        $region50: #{gru_rnn_forward.7} parent=11 // pred_check_branch
          %329 = sbr.rel (%p327) target = $region52
        $region51: #{gru_rnn_forward.7} parent=11 // pred_region
          _
        $region52: #{gru_rnn_forward.7} parent=11 // pred_fallthru
          _
      $region12: #{gru_rnn_forward.7} parent=5 // pred_fallthru
        _
      %p330 = scmp.lt.s32.totalorder %s18, 4
      // Predicated region
      $region53: #{gru_rnn_forward.7} parent=5 // pred_check
        %p331 = pneg %p330
      $region54: #{gru_rnn_forward.7} parent=5 // pred_check_branch
        %333 = sbr.rel (%p331) target = $region56
      $region55: #{gru_rnn_forward.7} parent=5 // pred_region
        // Predicated region
        $region57: #{gru_rnn_forward.7} parent=55 // pred_check
          %p334 = pneg %p38
        $region58: #{gru_rnn_forward.7} parent=55 // pred_check_branch
          %336 = sbr.rel (%p334) target = $region60
        $region59: #{gru_rnn_forward.7} parent=55 // pred_region
          %s337 = smul.u32 2, %s18
          %p338 = scmp.lt.s32.totalorder %s337, 7
          %s339 = scalar_select %p338, %s337, 7
          %s340 = smul.addr %s339, 3
          %s341 = smul.addr %s340, 4
          %s342 = scalar_lea.vmem %s0, %s341
          %s343 = smul.u32 2, %s18
        $region60: #{gru_rnn_forward.7} parent=55 // pred_fallthru
          _
      $region56: #{gru_rnn_forward.7} parent=5 // pred_fallthru
        _
      %p344 = scmp.le.s32.totalorder 1, %s18
      %p345 = scmp.lt.s32.totalorder %s18, 5
      %p346 = pnand %p344, %p345
      %p347 = pneg %p346
      // Predicated region
      $region61: #{gru_rnn_forward.7} parent=5 // pred_check
        _
      $region62: #{gru_rnn_forward.7} parent=5 // pred_check_branch
        %349 = sbr.rel (%p346) target = $region64
      $region63: #{gru_rnn_forward.7} parent=5 // pred_region
        %s350 = ssub.s32 %s18, 1
        // Predicated region
        $region65: #{gru_rnn_forward.7} parent=63 // pred_check
          %p351 = pneg %p170
        $region66: #{gru_rnn_forward.7} parent=63 // pred_check_branch
          %353 = sbr.rel (%p351) target = $region68
        $region67: #{gru_rnn_forward.7} parent=63 // pred_region
          %354 = dma.done [#allocation4], 3072
        $region68: #{gru_rnn_forward.7} parent=63 // pred_fallthru
          _
        %s355 = smul.u32 2, %s23
        %p356 = scmp.lt.s32.totalorder %s355, 7
        %s357 = scalar_select %p356, %s355, 7
        %s358 = smul.addr %s357, 3
        %s359 = smul.addr %s358, 4
        %s360 = scalar_lea.vmem %s0, %s359
        %p361 = pneg %p44
        %p362 = pneg %p41
        %p363 = pneg %p65
        %p364 = pneg %p62
        %p365 = pneg %p86
        %p366 = pneg %p83
        %p367 = pneg %p107
        %p368 = pneg %p104
        %p369 = pneg %p128
        %p370 = pneg %p125
        %p371 = pneg %p149
        %p372 = pneg %p146
        %p373 = pneg %p170
        %p374 = pneg %p167
        %p375 = pneg %p191
        %p376 = pneg %p188
        %p377 = pneg %p212
        %p378 = pneg %p209
        %p379 = pneg %p233
        %p380 = pneg %p230
        %p381 = pneg %p254
        %p382 = pneg %p251
        %p383 = pneg %p275
        %p384 = pneg %p272
        %s385 = smul.u32 2, %s23
        %p386 = scmp.lt.s32.totalorder %s385, 7
        %s387 = scalar_select %p386, %s385, 7
        %s388 = smul.addr %s387, 3
        %s389 = smul.addr %s388, 4
        %s390 = scalar_lea.vmem %s0, %s389
        %s391 = smul.u32 2, %s23
        %p393 = scmp.eq.s32.totalorder %s23, 0
        // Predicated region
        $region69: #{gru_rnn_forward.7} parent=63 // pred_check
          %p394 = pneg %p393
        $region70: #{gru_rnn_forward.7} parent=63 // pred_check_branch
          %396 = sbr.rel (%p394) target = $region72
        $region71: #{gru_rnn_forward.7} parent=63 // pred_region
          %397 = vst [vmem:[#allocation2] sm:$0xff] 0.0
        $region72: #{gru_rnn_forward.7} parent=63 // pred_fallthru
          _
        %v398 = vld [vmem:[%s2] sm:$0x1]
        %v400 = vlaneseq
        %v401 = vshrl.u32 %v400, 7
        %v402 = vsub.s32 0, %v401
        %v403 = vrot.slane %v398, %v402
        %v405 = vld [vmem:[#allocation2] sm:$0xff]
        %v406 = vpack.c.bf16 %v405, %v405
        %v407 = vld [vmem:[%s1] sm:$0xff]
        %v408 = vld [vmem:[%s1 + $0x8] sm:$0xf]
        %v409 = vld [vmem:[%s1 + $0xc] sm:$0xff]
        %v410 = vld [vmem:[%s1 + $0x14] sm:$0xf]
        %v411 = vld [vmem:[%s1 + $0x18] sm:$0xff]
        %v412 = vld [vmem:[%s1 + $0x20] sm:$0xf]
        %v413 = vld [vmem:[%s1 + $0x24] sm:$0xff]
        %v414 = vld [vmem:[%s1 + $0x2c] sm:$0xf]
        %v415 = vld [vmem:[%s1 + $0x30] sm:$0xff]
        %v416 = vld [vmem:[%s1 + $0x38] sm:$0xf]
        %v417 = vld [vmem:[%s1 + $0x3c] sm:$0xff]
        %v418 = vld [vmem:[%s1 + $0x44] sm:$0xf]
        %v419 = vld [vmem:[%s1 + $0x48] sm:$0xff]
        %v420 = vld [vmem:[%s1 + $0x50] sm:$0xf]
        %v421 = vld [vmem:[%s1 + $0x54] sm:$0xff]
        %v422 = vld [vmem:[%s1 + $0x5c] sm:$0xf]
        %v423 = vld [vmem:[%s1 + $0x60] sm:$0xff]
        %v424 = vld [vmem:[%s1 + $0x68] sm:$0xf]
        %v425 = vld [vmem:[%s1 + $0x6c] sm:$0xff]
        %v426 = vld [vmem:[%s1 + $0x74] sm:$0xf]
        %v427 = vld [vmem:[%s1 + $0x78] sm:$0xff]
        %v428 = vld [vmem:[%s1 + $0x80] sm:$0xf]
        %v429 = vld [vmem:[%s1 + $0x84] sm:$0xff]
        %v430 = vld [vmem:[%s1 + $0x8c] sm:$0xf]
        %v431 = vld [vmem:[%s1 + $0x90] sm:$0xff]
        %v432 = vld [vmem:[%s1 + $0x98] sm:$0xf]
        %v433 = vld [vmem:[%s1 + $0x9c] sm:$0xff]
        %v434 = vld [vmem:[%s1 + $0xa4] sm:$0xf]
        %v435 = vld [vmem:[%s1 + $0xa8] sm:$0xff]
        %v436 = vld [vmem:[%s1 + $0xb0] sm:$0xf]
        %v437 = vld [vmem:[%s1 + $0xb4] sm:$0xff]
        %v438 = vld [vmem:[%s1 + $0xbc] sm:$0xf]
        %v471 = vunpack.c.l.b16 %v407
        %v472 = vunpack.c.h.b16 %v407
        %v473 = vunpack.c.l.b16 %v408
        %v474 = vunpack.c.l.b16 %v409
        %v475 = vunpack.c.h.b16 %v409
        %v476 = vunpack.c.l.b16 %v410
        %v477 = vunpack.c.l.b16 %v411
        %v478 = vunpack.c.h.b16 %v411
        %v479 = vunpack.c.l.b16 %v412
        %v480 = vunpack.c.l.b16 %v413
        %v481 = vunpack.c.h.b16 %v413
        %v482 = vunpack.c.l.b16 %v414
        %v483 = vunpack.c.l.b16 %v415
        %v484 = vunpack.c.h.b16 %v415
        %v485 = vunpack.c.l.b16 %v416
        %v486 = vunpack.c.l.b16 %v417
        %v487 = vunpack.c.h.b16 %v417
        %v488 = vunpack.c.l.b16 %v418
        %v489 = vunpack.c.l.b16 %v419
        %v490 = vunpack.c.h.b16 %v419
        %v491 = vunpack.c.l.b16 %v420
        %v492 = vunpack.c.l.b16 %v421
        %v493 = vunpack.c.h.b16 %v421
        %v494 = vunpack.c.l.b16 %v422
        %v495 = vunpack.c.l.b16 %v423
        %v496 = vunpack.c.h.b16 %v423
        %v497 = vunpack.c.l.b16 %v424
        %v498 = vunpack.c.l.b16 %v425
        %v499 = vunpack.c.h.b16 %v425
        %v500 = vunpack.c.l.b16 %v426
        %v501 = vunpack.c.l.b16 %v427
        %v502 = vunpack.c.h.b16 %v427
        %v503 = vunpack.c.l.b16 %v428
        %v504 = vunpack.c.l.b16 %v429
        %v505 = vunpack.c.h.b16 %v429
        %v506 = vunpack.c.l.b16 %v430
        %v507 = vunpack.c.l.b16 %v431
        %v508 = vunpack.c.h.b16 %v431
        %v509 = vunpack.c.l.b16 %v432
        %v510 = vunpack.c.l.b16 %v433
        %v511 = vunpack.c.h.b16 %v433
        %v512 = vunpack.c.l.b16 %v434
        %v513 = vunpack.c.l.b16 %v435
        %v514 = vunpack.c.h.b16 %v435
        %v515 = vunpack.c.l.b16 %v436
        %v516 = vunpack.c.l.b16 %v437
        %v517 = vunpack.c.h.b16 %v437
        %v518 = vunpack.c.l.b16 %v438
        %v519 = vpack.c.b16 %v474, %v471
        %v520 = vpack.c.b16 %v475, %v472
        %v521 = vpack.c.b16 %v476, %v473
        %v522 = vpack.c.b16 %v480, %v477
        %v523 = vpack.c.b16 %v481, %v478
        %v524 = vpack.c.b16 %v482, %v479
        %v525 = vpack.c.b16 %v486, %v483
        %v526 = vpack.c.b16 %v487, %v484
        %v527 = vpack.c.b16 %v488, %v485
        %v528 = vpack.c.b16 %v492, %v489
        %v529 = vpack.c.b16 %v493, %v490
        %v530 = vpack.c.b16 %v494, %v491
        %v531 = vpack.c.b16 %v498, %v495
        %v532 = vpack.c.b16 %v499, %v496
        %v533 = vpack.c.b16 %v500, %v497
        %v534 = vpack.c.b16 %v504, %v501
        %v535 = vpack.c.b16 %v505, %v502
        %v536 = vpack.c.b16 %v506, %v503
        %v537 = vpack.c.b16 %v510, %v507
        %v538 = vpack.c.b16 %v511, %v508
        %v539 = vpack.c.b16 %v512, %v509
        %v540 = vpack.c.b16 %v516, %v513
        %v541 = vpack.c.b16 %v517, %v514
        %v542 = vpack.c.b16 %v518, %v515
        %567 = vmatprep.subr.bf16.mxu0 %v541
        %568 = vmatpush1.bf16.msra.mxu0 %v540
        %569 = vmatprep.subr.bf16.mxu0 %v538
        %570 = vmatpush1.bf16.msra.mxu0 %v537
        %571 = vmatprep.subr.bf16.mxu0 %v535
        %572 = vmatpush1.bf16.msra.mxu0 %v534
        %573 = vmatprep.subr.bf16.mxu0 %v532
        %574 = vmatpush1.bf16.msra.mxu0 %v531
        %575 = vmatprep.subr.bf16.mxu0 %v529
        %576 = vmatpush1.bf16.msra.mxu0 %v528
        %577 = vmatprep.subr.bf16.mxu0 %v526
        %578 = vmatpush1.bf16.msra.mxu0 %v525
        %579 = vmatprep.subr.bf16.mxu0 %v523
        %580 = vmatpush1.bf16.msra.mxu0 %v522
        %581 = vmatprep.subr.bf16.mxu0 %v520
        %582 = vmatpush1.bf16.msra.mxu0 %v519
        %583 = vmatprep.subr.bf16.mxu0 0
        %584 = vmatpush2.bf16.msra.mxu0 0
        %585 = vmatprep.subr.bf16.mxu0 0
        %586 = vmatpush2.bf16.msra.mxu0 0
        %587 = vmatprep.subr.bf16.mxu0 0
        %588 = vmatpush2.bf16.msra.mxu0 0
        %589 = vmatprep.subr.bf16.mxu0 0
        %590 = vmatpush2.bf16.msra.mxu0 0
        %591 = vmatprep.subr.bf16.mxu0 0
        %592 = vmatpush2.bf16.msra.mxu0 0
        %593 = vmatprep.subr.bf16.mxu0 0
        %594 = vmatpush2.bf16.msra.mxu0 0
        %595 = vmatprep.subr.bf16.mxu0 0
        %596 = vmatpush2.bf16.msra.mxu0 0
        %597 = vmatprep.subr.bf16.mxu0 0
        %598 = vmatpush2.bf16.msra.mxu0 0
        %599 = vmatprep.mubr.bf16.mxu0 0
        %600 = vmatmul.mubr.bf16.gmra.mxu0 %v406
        %v601 = vpop.f32.mrf.mxu0
        %v602 = vadd.f32 0.0, %v601
        %v603 = vpop.f32.mrf.mxu0
        %v604 = vadd.f32 0.0, %v603
        %v605 = vpop.f32.mrf.mxu0
        %v606 = vpop.f32.mrf.mxu0
        %607 = vdwg.mxu0
        %608 = vmatprep.subr.bf16.mxu0 0
        %609 = vmatpush1.bf16.msra.mxu0 %v542
        %610 = vmatprep.subr.bf16.mxu0 0
        %611 = vmatpush1.bf16.msra.mxu0 %v539
        %612 = vmatprep.subr.bf16.mxu0 0
        %613 = vmatpush1.bf16.msra.mxu0 %v536
        %614 = vmatprep.subr.bf16.mxu0 0
        %615 = vmatpush1.bf16.msra.mxu0 %v533
        %616 = vmatprep.subr.bf16.mxu0 0
        %617 = vmatpush1.bf16.msra.mxu0 %v530
        %618 = vmatprep.subr.bf16.mxu0 0
        %619 = vmatpush1.bf16.msra.mxu0 %v527
        %620 = vmatprep.subr.bf16.mxu0 0
        %621 = vmatpush1.bf16.msra.mxu0 %v524
        %622 = vmatprep.subr.bf16.mxu0 0
        %623 = vmatpush1.bf16.msra.mxu0 %v521
        %624 = vmatprep.subr.bf16.mxu0 0
        %625 = vmatpush2.bf16.msra.mxu0 0
        %626 = vmatprep.subr.bf16.mxu0 0
        %627 = vmatpush2.bf16.msra.mxu0 0
        %628 = vmatprep.subr.bf16.mxu0 0
        %629 = vmatpush2.bf16.msra.mxu0 0
        %630 = vmatprep.subr.bf16.mxu0 0
        %631 = vmatpush2.bf16.msra.mxu0 0
        %632 = vmatprep.subr.bf16.mxu0 0
        %633 = vmatpush2.bf16.msra.mxu0 0
        %634 = vmatprep.subr.bf16.mxu0 0
        %635 = vmatpush2.bf16.msra.mxu0 0
        %636 = vmatprep.subr.bf16.mxu0 0
        %637 = vmatpush2.bf16.msra.mxu0 0
        %638 = vmatprep.subr.bf16.mxu0 0
        %639 = vmatpush2.bf16.msra.mxu0 0
        %640 = vmatprep.mubr.bf16.mxu0 0
        %641 = vmatmul.mubr.bf16.gmra.mxu0 %v406
        %v642 = vpop.f32.mrf.mxu0
        %v643 = vadd.f32 0.0, %v642
        %v644 = vpop.f32.mrf.mxu0
        %v645 = vpop.f32.mrf.mxu0
        %v646 = vpop.f32.mrf.mxu0
        %647 = vdwg.mxu0
        %s648 = smul.u32 0, 3
        %s649 = smul.addr %s648, 4
        %s650 = scalar_lea.vmem %s390, %s649
        %v651 = vld [vmem:[%s650] sm:$0xff]
        %v652 = vld [vmem:[%s650 + $0x8] sm:$0xf]
        %v653 = vunpack.c.l.bf16 %v651
        %v654 = vunpack.c.h.bf16 %v651
        %v655 = vunpack.c.l.bf16 %v652
        %v656 = vadd.f32 %v653, %v602
        %v657 = vxor.u32 %v656, 2147483648
        %v658 = vmul.f32 %v657, 1.442695
        %v659 = vpow.pop %v658
        %v660 = vadd.f32 %v659, 1.0
        %v661 = vrcp.pop %v660
        %v662 = vmul.f32 1.0, %v661
        %v663 = vadd.f32 %v654, %v604
        %v664 = vxor.u32 %v663, 2147483648
        %v665 = vmul.f32 %v664, 1.442695
        %v666 = vpow.pop %v665
        %v667 = vadd.f32 %v666, 1.0
        %v668 = vrcp.pop %v667
        %v669 = vmul.f32 1.0, %v668
        %v670 = vadd.f32 %v643, %v403
        %v671 = vmul.f32 %v662, %v670
        %v672 = vadd.f32 %v655, %v671
        %v673 = vtanh.pop %v672
        %v674 = vsub.f32 1.0, %v669
        %v675 = vmul.f32 %v674, %v673
        %v676 = vmul.f32 %v669, %v405
        %v677 = vadd.f32 %v675, %v676
        %678 = vst [vmem:[#allocation2] sm:$0xff] %v677
        %v679 = vld [vmem:[#allocation2] sm:$0xff]
        %v680 = vpack.c.bf16 %v679, %v679
        %v681 = vld [vmem:[%s1] sm:$0xff]
        %v682 = vld [vmem:[%s1 + $0x8] sm:$0xf]
        %v683 = vld [vmem:[%s1 + $0xc] sm:$0xff]
        %v684 = vld [vmem:[%s1 + $0x14] sm:$0xf]
        %v685 = vld [vmem:[%s1 + $0x18] sm:$0xff]
        %v686 = vld [vmem:[%s1 + $0x20] sm:$0xf]
        %v687 = vld [vmem:[%s1 + $0x24] sm:$0xff]
        %v688 = vld [vmem:[%s1 + $0x2c] sm:$0xf]
        %v689 = vld [vmem:[%s1 + $0x30] sm:$0xff]
        %v690 = vld [vmem:[%s1 + $0x38] sm:$0xf]
        %v691 = vld [vmem:[%s1 + $0x3c] sm:$0xff]
        %v692 = vld [vmem:[%s1 + $0x44] sm:$0xf]
        %v693 = vld [vmem:[%s1 + $0x48] sm:$0xff]
        %v694 = vld [vmem:[%s1 + $0x50] sm:$0xf]
        %v695 = vld [vmem:[%s1 + $0x54] sm:$0xff]
        %v696 = vld [vmem:[%s1 + $0x5c] sm:$0xf]
        %v697 = vld [vmem:[%s1 + $0x60] sm:$0xff]
        %v698 = vld [vmem:[%s1 + $0x68] sm:$0xf]
        %v699 = vld [vmem:[%s1 + $0x6c] sm:$0xff]
        %v700 = vld [vmem:[%s1 + $0x74] sm:$0xf]
        %v701 = vld [vmem:[%s1 + $0x78] sm:$0xff]
        %v702 = vld [vmem:[%s1 + $0x80] sm:$0xf]
        %v703 = vld [vmem:[%s1 + $0x84] sm:$0xff]
        %v704 = vld [vmem:[%s1 + $0x8c] sm:$0xf]
        %v705 = vld [vmem:[%s1 + $0x90] sm:$0xff]
        %v706 = vld [vmem:[%s1 + $0x98] sm:$0xf]
        %v707 = vld [vmem:[%s1 + $0x9c] sm:$0xff]
        %v708 = vld [vmem:[%s1 + $0xa4] sm:$0xf]
        %v709 = vld [vmem:[%s1 + $0xa8] sm:$0xff]
        %v710 = vld [vmem:[%s1 + $0xb0] sm:$0xf]
        %v711 = vld [vmem:[%s1 + $0xb4] sm:$0xff]
        %v712 = vld [vmem:[%s1 + $0xbc] sm:$0xf]
        %v745 = vunpack.c.l.b16 %v681
        %v746 = vunpack.c.h.b16 %v681
        %v747 = vunpack.c.l.b16 %v682
        %v748 = vunpack.c.l.b16 %v683
        %v749 = vunpack.c.h.b16 %v683
        %v750 = vunpack.c.l.b16 %v684
        %v751 = vunpack.c.l.b16 %v685
        %v752 = vunpack.c.h.b16 %v685
        %v753 = vunpack.c.l.b16 %v686
        %v754 = vunpack.c.l.b16 %v687
        %v755 = vunpack.c.h.b16 %v687
        %v756 = vunpack.c.l.b16 %v688
        %v757 = vunpack.c.l.b16 %v689
        %v758 = vunpack.c.h.b16 %v689
        %v759 = vunpack.c.l.b16 %v690
        %v760 = vunpack.c.l.b16 %v691
        %v761 = vunpack.c.h.b16 %v691
        %v762 = vunpack.c.l.b16 %v692
        %v763 = vunpack.c.l.b16 %v693
        %v764 = vunpack.c.h.b16 %v693
        %v765 = vunpack.c.l.b16 %v694
        %v766 = vunpack.c.l.b16 %v695
        %v767 = vunpack.c.h.b16 %v695
        %v768 = vunpack.c.l.b16 %v696
        %v769 = vunpack.c.l.b16 %v697
        %v770 = vunpack.c.h.b16 %v697
        %v771 = vunpack.c.l.b16 %v698
        %v772 = vunpack.c.l.b16 %v699
        %v773 = vunpack.c.h.b16 %v699
        %v774 = vunpack.c.l.b16 %v700
        %v775 = vunpack.c.l.b16 %v701
        %v776 = vunpack.c.h.b16 %v701
        %v777 = vunpack.c.l.b16 %v702
        %v778 = vunpack.c.l.b16 %v703
        %v779 = vunpack.c.h.b16 %v703
        %v780 = vunpack.c.l.b16 %v704
        %v781 = vunpack.c.l.b16 %v705
        %v782 = vunpack.c.h.b16 %v705
        %v783 = vunpack.c.l.b16 %v706
        %v784 = vunpack.c.l.b16 %v707
        %v785 = vunpack.c.h.b16 %v707
        %v786 = vunpack.c.l.b16 %v708
        %v787 = vunpack.c.l.b16 %v709
        %v788 = vunpack.c.h.b16 %v709
        %v789 = vunpack.c.l.b16 %v710
        %v790 = vunpack.c.l.b16 %v711
        %v791 = vunpack.c.h.b16 %v711
        %v792 = vunpack.c.l.b16 %v712
        %v793 = vpack.c.b16 %v748, %v745
        %v794 = vpack.c.b16 %v749, %v746
        %v795 = vpack.c.b16 %v750, %v747
        %v796 = vpack.c.b16 %v754, %v751
        %v797 = vpack.c.b16 %v755, %v752
        %v798 = vpack.c.b16 %v756, %v753
        %v799 = vpack.c.b16 %v760, %v757
        %v800 = vpack.c.b16 %v761, %v758
        %v801 = vpack.c.b16 %v762, %v759
        %v802 = vpack.c.b16 %v766, %v763
        %v803 = vpack.c.b16 %v767, %v764
        %v804 = vpack.c.b16 %v768, %v765
        %v805 = vpack.c.b16 %v772, %v769
        %v806 = vpack.c.b16 %v773, %v770
        %v807 = vpack.c.b16 %v774, %v771
        %v808 = vpack.c.b16 %v778, %v775
        %v809 = vpack.c.b16 %v779, %v776
        %v810 = vpack.c.b16 %v780, %v777
        %v811 = vpack.c.b16 %v784, %v781
        %v812 = vpack.c.b16 %v785, %v782
        %v813 = vpack.c.b16 %v786, %v783
        %v814 = vpack.c.b16 %v790, %v787
        %v815 = vpack.c.b16 %v791, %v788
        %v816 = vpack.c.b16 %v792, %v789
        %841 = vmatprep.subr.bf16.mxu0 %v815
        %842 = vmatpush1.bf16.msra.mxu0 %v814
        %843 = vmatprep.subr.bf16.mxu0 %v812
        %844 = vmatpush1.bf16.msra.mxu0 %v811
        %845 = vmatprep.subr.bf16.mxu0 %v809
        %846 = vmatpush1.bf16.msra.mxu0 %v808
        %847 = vmatprep.subr.bf16.mxu0 %v806
        %848 = vmatpush1.bf16.msra.mxu0 %v805
        %849 = vmatprep.subr.bf16.mxu0 %v803
        %850 = vmatpush1.bf16.msra.mxu0 %v802
        %851 = vmatprep.subr.bf16.mxu0 %v800
        %852 = vmatpush1.bf16.msra.mxu0 %v799
        %853 = vmatprep.subr.bf16.mxu0 %v797
        %854 = vmatpush1.bf16.msra.mxu0 %v796
        %855 = vmatprep.subr.bf16.mxu0 %v794
        %856 = vmatpush1.bf16.msra.mxu0 %v793
        %857 = vmatprep.subr.bf16.mxu0 0
        %858 = vmatpush2.bf16.msra.mxu0 0
        %859 = vmatprep.subr.bf16.mxu0 0
        %860 = vmatpush2.bf16.msra.mxu0 0
        %861 = vmatprep.subr.bf16.mxu0 0
        %862 = vmatpush2.bf16.msra.mxu0 0
        %863 = vmatprep.subr.bf16.mxu0 0
        %864 = vmatpush2.bf16.msra.mxu0 0
        %865 = vmatprep.subr.bf16.mxu0 0
        %866 = vmatpush2.bf16.msra.mxu0 0
        %867 = vmatprep.subr.bf16.mxu0 0
        %868 = vmatpush2.bf16.msra.mxu0 0
        %869 = vmatprep.subr.bf16.mxu0 0
        %870 = vmatpush2.bf16.msra.mxu0 0
        %871 = vmatprep.subr.bf16.mxu0 0
        %872 = vmatpush2.bf16.msra.mxu0 0
        %873 = vmatprep.mubr.bf16.mxu0 0
        %874 = vmatmul.mubr.bf16.gmra.mxu0 %v680
        %v875 = vpop.f32.mrf.mxu0
        %v876 = vadd.f32 0.0, %v875
        %v877 = vpop.f32.mrf.mxu0
        %v878 = vadd.f32 0.0, %v877
        %v879 = vpop.f32.mrf.mxu0
        %v880 = vpop.f32.mrf.mxu0
        %881 = vdwg.mxu0
        %882 = vmatprep.subr.bf16.mxu0 0
        %883 = vmatpush1.bf16.msra.mxu0 %v816
        %884 = vmatprep.subr.bf16.mxu0 0
        %885 = vmatpush1.bf16.msra.mxu0 %v813
        %886 = vmatprep.subr.bf16.mxu0 0
        %887 = vmatpush1.bf16.msra.mxu0 %v810
        %888 = vmatprep.subr.bf16.mxu0 0
        %889 = vmatpush1.bf16.msra.mxu0 %v807
        %890 = vmatprep.subr.bf16.mxu0 0
        %891 = vmatpush1.bf16.msra.mxu0 %v804
        %892 = vmatprep.subr.bf16.mxu0 0
        %893 = vmatpush1.bf16.msra.mxu0 %v801
        %894 = vmatprep.subr.bf16.mxu0 0
        %895 = vmatpush1.bf16.msra.mxu0 %v798
        %896 = vmatprep.subr.bf16.mxu0 0
        %897 = vmatpush1.bf16.msra.mxu0 %v795
        %898 = vmatprep.subr.bf16.mxu0 0
        %899 = vmatpush2.bf16.msra.mxu0 0
        %900 = vmatprep.subr.bf16.mxu0 0
        %901 = vmatpush2.bf16.msra.mxu0 0
        %902 = vmatprep.subr.bf16.mxu0 0
        %903 = vmatpush2.bf16.msra.mxu0 0
        %904 = vmatprep.subr.bf16.mxu0 0
        %905 = vmatpush2.bf16.msra.mxu0 0
        %906 = vmatprep.subr.bf16.mxu0 0
        %907 = vmatpush2.bf16.msra.mxu0 0
        %908 = vmatprep.subr.bf16.mxu0 0
        %909 = vmatpush2.bf16.msra.mxu0 0
        %910 = vmatprep.subr.bf16.mxu0 0
        %911 = vmatpush2.bf16.msra.mxu0 0
        %912 = vmatprep.subr.bf16.mxu0 0
        %913 = vmatpush2.bf16.msra.mxu0 0
        %914 = vmatprep.mubr.bf16.mxu0 0
        %915 = vmatmul.mubr.bf16.gmra.mxu0 %v680
        %v916 = vpop.f32.mrf.mxu0
        %v917 = vadd.f32 0.0, %v916
        %v918 = vpop.f32.mrf.mxu0
        %v919 = vpop.f32.mrf.mxu0
        %v920 = vpop.f32.mrf.mxu0
        %921 = vdwg.mxu0
        %s922 = smul.u32 1, 3
        %s923 = smul.addr %s922, 4
        %s924 = scalar_lea.vmem %s390, %s923
        %v925 = vld [vmem:[%s924] sm:$0xff]
        %v926 = vld [vmem:[%s924 + $0x8] sm:$0xf]
        %v927 = vunpack.c.l.bf16 %v925
        %v928 = vunpack.c.h.bf16 %v925
        %v929 = vunpack.c.l.bf16 %v926
        %v930 = vadd.f32 %v927, %v876
        %v931 = vxor.u32 %v930, 2147483648
        %v932 = vmul.f32 %v931, 1.442695
        %v933 = vpow.pop %v932
        %v934 = vadd.f32 %v933, 1.0
        %v935 = vrcp.pop %v934
        %v936 = vmul.f32 1.0, %v935
        %v937 = vadd.f32 %v928, %v878
        %v938 = vxor.u32 %v937, 2147483648
        %v939 = vmul.f32 %v938, 1.442695
        %v940 = vpow.pop %v939
        %v941 = vadd.f32 %v940, 1.0
        %v942 = vrcp.pop %v941
        %v943 = vmul.f32 1.0, %v942
        %v944 = vadd.f32 %v917, %v403
        %v945 = vmul.f32 %v936, %v944
        %v946 = vadd.f32 %v929, %v945
        %v947 = vtanh.pop %v946
        %v948 = vsub.f32 1.0, %v943
        %v949 = vmul.f32 %v948, %v947
        %v950 = vmul.f32 %v943, %v679
        %v951 = vadd.f32 %v949, %v950
        %952 = vst [vmem:[#allocation2] sm:$0xff] %v951
        %p953 = scmp.eq.s32.totalorder %s23, 3
        // Predicated region
        $region73: #{gru_rnn_forward.7} parent=63 // pred_check
          %p954 = pneg %p953
        $region74: #{gru_rnn_forward.7} parent=63 // pred_check_branch
          %956 = sbr.rel (%p954) target = $region76
        $region75: #{gru_rnn_forward.7} parent=63 // pred_region
          %v957 = vld [vmem:[#allocation2] sm:$0xff]
          %v958 = vld [vmem:[%s3] sm:$0xf]
          %v959 = vld [vmem:[%s5] sm:$0xff]
          %v960 = vld [vmem:[%s5 + $0x8] sm:$0xf]
          %v961 = vld [vmem:[%s5 + $0xc] sm:$0xff]
          %v962 = vld [vmem:[%s5 + $0x14] sm:$0xf]
          %v963 = vld [vmem:[%s5 + $0x18] sm:$0xff]
          %v964 = vld [vmem:[%s5 + $0x20] sm:$0xf]
          %v965 = vld [vmem:[%s5 + $0x24] sm:$0xff]
          %v966 = vld [vmem:[%s5 + $0x2c] sm:$0xf]
          %v967 = vld [vmem:[%s5 + $0x30] sm:$0xff]
          %v968 = vld [vmem:[%s5 + $0x38] sm:$0xf]
          %v969 = vld [vmem:[%s5 + $0x3c] sm:$0xff]
          %v970 = vld [vmem:[%s5 + $0x44] sm:$0xf]
          %v971 = vld [vmem:[%s5 + $0x48] sm:$0xff]
          %v972 = vld [vmem:[%s5 + $0x50] sm:$0xf]
          %v973 = vld [vmem:[%s5 + $0x54] sm:$0xff]
          %v974 = vld [vmem:[%s5 + $0x5c] sm:$0xf]
          %v975 = vld [vmem:[%s5 + $0x60] sm:$0xff]
          %v976 = vld [vmem:[%s5 + $0x68] sm:$0xf]
          %v977 = vld [vmem:[%s5 + $0x6c] sm:$0xff]
          %v978 = vld [vmem:[%s5 + $0x74] sm:$0xf]
          %v979 = vld [vmem:[%s5 + $0x78] sm:$0xff]
          %v980 = vld [vmem:[%s5 + $0x80] sm:$0xf]
          %v981 = vld [vmem:[%s5 + $0x84] sm:$0xff]
          %v982 = vld [vmem:[%s5 + $0x8c] sm:$0xf]
          %v983 = vld [vmem:[%s5 + $0x90] sm:$0xff]
          %v984 = vld [vmem:[%s5 + $0x98] sm:$0xf]
          %v985 = vld [vmem:[%s5 + $0x9c] sm:$0xff]
          %v986 = vld [vmem:[%s5 + $0xa4] sm:$0xf]
          %v987 = vld [vmem:[%s5 + $0xa8] sm:$0xff]
          %v988 = vld [vmem:[%s5 + $0xb0] sm:$0xf]
          %v989 = vld [vmem:[%s5 + $0xb4] sm:$0xff]
          %v990 = vld [vmem:[%s5 + $0xbc] sm:$0xf]
          %v991 = vld [vmem:[%s4] sm:$0xf]
          %v992 = vld [vmem:[#allocation3] sm:$0xff]
          %v993 = vld [vmem:[#allocation3 + $0x8] sm:$0xf]
          %v994 = vld [vmem:[#allocation3 + $0xc] sm:$0xff]
          %v995 = vld [vmem:[#allocation3 + $0x14] sm:$0xf]
          %v996 = vld [vmem:[#allocation3 + $0x18] sm:$0xff]
          %v997 = vld [vmem:[#allocation3 + $0x20] sm:$0xf]
          %v998 = vld [vmem:[#allocation3 + $0x24] sm:$0xff]
          %v999 = vld [vmem:[#allocation3 + $0x2c] sm:$0xf]
          %v1000 = vld [vmem:[#allocation3 + $0x30] sm:$0xff]
          %v1001 = vld [vmem:[#allocation3 + $0x38] sm:$0xf]
          %v1002 = vld [vmem:[#allocation3 + $0x3c] sm:$0xff]
          %v1003 = vld [vmem:[#allocation3 + $0x44] sm:$0xf]
          %v1004 = vld [vmem:[#allocation3 + $0x48] sm:$0xff]
          %v1005 = vld [vmem:[#allocation3 + $0x50] sm:$0xf]
          %v1006 = vld [vmem:[#allocation3 + $0x54] sm:$0xff]
          %v1007 = vld [vmem:[#allocation3 + $0x5c] sm:$0xf]
          %v1008 = vld [vmem:[#allocation3 + $0x60] sm:$0xff]
          %v1009 = vld [vmem:[#allocation3 + $0x68] sm:$0xf]
          %v1010 = vld [vmem:[#allocation3 + $0x6c] sm:$0xff]
          %v1011 = vld [vmem:[#allocation3 + $0x74] sm:$0xf]
          %v1012 = vld [vmem:[#allocation3 + $0x78] sm:$0xff]
          %v1013 = vld [vmem:[#allocation3 + $0x80] sm:$0xf]
          %v1014 = vld [vmem:[#allocation3 + $0x84] sm:$0xff]
          %v1015 = vld [vmem:[#allocation3 + $0x8c] sm:$0xf]
          %v1016 = vld [vmem:[#allocation3 + $0x90] sm:$0xff]
          %v1017 = vld [vmem:[#allocation3 + $0x98] sm:$0xf]
          %v1018 = vld [vmem:[#allocation3 + $0x9c] sm:$0xff]
          %v1019 = vld [vmem:[#allocation3 + $0xa4] sm:$0xf]
          %v1020 = vld [vmem:[#allocation3 + $0xa8] sm:$0xff]
          %v1021 = vld [vmem:[#allocation3 + $0xb0] sm:$0xf]
          %v1022 = vld [vmem:[#allocation3 + $0xb4] sm:$0xff]
          %v1023 = vld [vmem:[#allocation3 + $0xbc] sm:$0xf]
          %v1056 = vunpack.c.l.b16 %v992
          %v1057 = vunpack.c.h.b16 %v992
          %v1058 = vunpack.c.l.b16 %v993
          %v1059 = vunpack.c.l.b16 %v994
          %v1060 = vunpack.c.h.b16 %v994
          %v1061 = vunpack.c.l.b16 %v995
          %v1062 = vunpack.c.l.b16 %v996
          %v1063 = vunpack.c.h.b16 %v996
          %v1064 = vunpack.c.l.b16 %v997
          %v1065 = vunpack.c.l.b16 %v998
          %v1066 = vunpack.c.h.b16 %v998
          %v1067 = vunpack.c.l.b16 %v999
          %v1068 = vunpack.c.l.b16 %v1000
          %v1069 = vunpack.c.h.b16 %v1000
          %v1070 = vunpack.c.l.b16 %v1001
          %v1071 = vunpack.c.l.b16 %v1002
          %v1072 = vunpack.c.h.b16 %v1002
          %v1073 = vunpack.c.l.b16 %v1003
          %v1074 = vunpack.c.l.b16 %v1004
          %v1075 = vunpack.c.h.b16 %v1004
          %v1076 = vunpack.c.l.b16 %v1005
          %v1077 = vunpack.c.l.b16 %v1006
          %v1078 = vunpack.c.h.b16 %v1006
          %v1079 = vunpack.c.l.b16 %v1007
          %v1080 = vunpack.c.l.b16 %v1008
          %v1081 = vunpack.c.h.b16 %v1008
          %v1082 = vunpack.c.l.b16 %v1009
          %v1083 = vunpack.c.l.b16 %v1010
          %v1084 = vunpack.c.h.b16 %v1010
          %v1085 = vunpack.c.l.b16 %v1011
          %v1086 = vunpack.c.l.b16 %v1012
          %v1087 = vunpack.c.h.b16 %v1012
          %v1088 = vunpack.c.l.b16 %v1013
          %v1089 = vunpack.c.l.b16 %v1014
          %v1090 = vunpack.c.h.b16 %v1014
          %v1091 = vunpack.c.l.b16 %v1015
          %v1092 = vunpack.c.l.b16 %v1016
          %v1093 = vunpack.c.h.b16 %v1016
          %v1094 = vunpack.c.l.b16 %v1017
          %v1095 = vunpack.c.l.b16 %v1018
          %v1096 = vunpack.c.h.b16 %v1018
          %v1097 = vunpack.c.l.b16 %v1019
          %v1098 = vunpack.c.l.b16 %v1020
          %v1099 = vunpack.c.h.b16 %v1020
          %v1100 = vunpack.c.l.b16 %v1021
          %v1101 = vunpack.c.l.b16 %v1022
          %v1102 = vunpack.c.h.b16 %v1022
          %v1103 = vunpack.c.l.b16 %v1023
          %v1104 = vpack.c.b16 %v1059, %v1056
          %v1105 = vpack.c.b16 %v1060, %v1057
          %v1106 = vpack.c.b16 %v1061, %v1058
          %v1107 = vpack.c.b16 %v1065, %v1062
          %v1108 = vpack.c.b16 %v1066, %v1063
          %v1109 = vpack.c.b16 %v1067, %v1064
          %v1110 = vpack.c.b16 %v1071, %v1068
          %v1111 = vpack.c.b16 %v1072, %v1069
          %v1112 = vpack.c.b16 %v1073, %v1070
          %v1113 = vpack.c.b16 %v1077, %v1074
          %v1114 = vpack.c.b16 %v1078, %v1075
          %v1115 = vpack.c.b16 %v1079, %v1076
          %v1116 = vpack.c.b16 %v1083, %v1080
          %v1117 = vpack.c.b16 %v1084, %v1081
          %v1118 = vpack.c.b16 %v1085, %v1082
          %v1119 = vpack.c.b16 %v1089, %v1086
          %v1120 = vpack.c.b16 %v1090, %v1087
          %v1121 = vpack.c.b16 %v1091, %v1088
          %v1122 = vpack.c.b16 %v1095, %v1092
          %v1123 = vpack.c.b16 %v1096, %v1093
          %v1124 = vpack.c.b16 %v1097, %v1094
          %v1125 = vpack.c.b16 %v1101, %v1098
          %v1126 = vpack.c.b16 %v1102, %v1099
          %v1127 = vpack.c.b16 %v1103, %v1100
          %1152 = vmatprep.subr.bf16.mxu0 %v1126
          %1153 = vmatpush1.bf16.msra.mxu0 %v1125
          %1154 = vmatprep.subr.bf16.mxu0 %v1123
          %1155 = vmatpush1.bf16.msra.mxu0 %v1122
          %1156 = vmatprep.subr.bf16.mxu0 %v1120
          %1157 = vmatpush1.bf16.msra.mxu0 %v1119
          %1158 = vmatprep.subr.bf16.mxu0 %v1117
          %1159 = vmatpush1.bf16.msra.mxu0 %v1116
          %1160 = vmatprep.subr.bf16.mxu0 %v1114
          %1161 = vmatpush1.bf16.msra.mxu0 %v1113
          %1162 = vmatprep.subr.bf16.mxu0 %v1111
          %1163 = vmatpush1.bf16.msra.mxu0 %v1110
          %1164 = vmatprep.subr.bf16.mxu0 %v1108
          %1165 = vmatpush1.bf16.msra.mxu0 %v1107
          %1166 = vmatprep.subr.bf16.mxu0 %v1105
          %1167 = vmatpush1.bf16.msra.mxu0 %v1104
          %1168 = vmatprep.subr.bf16.mxu0 0
          %1169 = vmatpush2.bf16.msra.mxu0 0
          %1170 = vmatprep.subr.bf16.mxu0 0
          %1171 = vmatpush2.bf16.msra.mxu0 0
          %1172 = vmatprep.subr.bf16.mxu0 0
          %1173 = vmatpush2.bf16.msra.mxu0 0
          %1174 = vmatprep.subr.bf16.mxu0 0
          %1175 = vmatpush2.bf16.msra.mxu0 0
          %1176 = vmatprep.subr.bf16.mxu0 0
          %1177 = vmatpush2.bf16.msra.mxu0 0
          %1178 = vmatprep.subr.bf16.mxu0 0
          %1179 = vmatpush2.bf16.msra.mxu0 0
          %1180 = vmatprep.subr.bf16.mxu0 0
          %1181 = vmatpush2.bf16.msra.mxu0 0
          %1182 = vmatprep.subr.bf16.mxu0 0
          %1183 = vmatpush2.bf16.msra.mxu0 0
          %1184 = vmatprep.mubr.bf16.mxu0 0
          %1185 = vmatmul.mubr.bf16.gmra.mxu0 %v991
          %v1186 = vpop.f32.mrf.mxu0
          %v1187 = vadd.f32 0.0, %v1186
          %v1188 = vpop.f32.mrf.mxu0
          %v1189 = vadd.f32 0.0, %v1188
          %v1190 = vpop.f32.mrf.mxu0
          %v1191 = vpop.f32.mrf.mxu0
          %1192 = vdwg.mxu0
          %1193 = vmatprep.subr.bf16.mxu0 0
          %1194 = vmatpush1.bf16.msra.mxu0 %v1127
          %1195 = vmatprep.subr.bf16.mxu0 0
          %1196 = vmatpush1.bf16.msra.mxu0 %v1124
          %1197 = vmatprep.subr.bf16.mxu0 0
          %1198 = vmatpush1.bf16.msra.mxu0 %v1121
          %1199 = vmatprep.subr.bf16.mxu0 0
          %1200 = vmatpush1.bf16.msra.mxu0 %v1118
          %1201 = vmatprep.subr.bf16.mxu0 0
          %1202 = vmatpush1.bf16.msra.mxu0 %v1115
          %1203 = vmatprep.subr.bf16.mxu0 0
          %1204 = vmatpush1.bf16.msra.mxu0 %v1112
          %1205 = vmatprep.subr.bf16.mxu0 0
          %1206 = vmatpush1.bf16.msra.mxu0 %v1109
          %1207 = vmatprep.subr.bf16.mxu0 0
          %1208 = vmatpush1.bf16.msra.mxu0 %v1106
          %1209 = vmatprep.subr.bf16.mxu0 0
          %1210 = vmatpush2.bf16.msra.mxu0 0
          %1211 = vmatprep.subr.bf16.mxu0 0
          %1212 = vmatpush2.bf16.msra.mxu0 0
          %1213 = vmatprep.subr.bf16.mxu0 0
          %1214 = vmatpush2.bf16.msra.mxu0 0
          %1215 = vmatprep.subr.bf16.mxu0 0
          %1216 = vmatpush2.bf16.msra.mxu0 0
          %1217 = vmatprep.subr.bf16.mxu0 0
          %1218 = vmatpush2.bf16.msra.mxu0 0
          %1219 = vmatprep.subr.bf16.mxu0 0
          %1220 = vmatpush2.bf16.msra.mxu0 0
          %1221 = vmatprep.subr.bf16.mxu0 0
          %1222 = vmatpush2.bf16.msra.mxu0 0
          %1223 = vmatprep.subr.bf16.mxu0 0
          %1224 = vmatpush2.bf16.msra.mxu0 0
          %1225 = vmatprep.mubr.bf16.mxu0 0
          %1226 = vmatmul.mubr.bf16.gmra.mxu0 %v991
          %v1227 = vpop.f32.mrf.mxu0
          %v1228 = vadd.f32 0.0, %v1227
          %v1229 = vpop.f32.mrf.mxu0
          %v1230 = vpop.f32.mrf.mxu0
          %v1231 = vpop.f32.mrf.mxu0
          %1232 = vdwg.mxu0
          %v1265 = vunpack.c.l.b16 %v959
          %v1266 = vunpack.c.h.b16 %v959
          %v1267 = vunpack.c.l.b16 %v960
          %v1268 = vunpack.c.l.b16 %v961
          %v1269 = vunpack.c.h.b16 %v961
          %v1270 = vunpack.c.l.b16 %v962
          %v1271 = vunpack.c.l.b16 %v963
          %v1272 = vunpack.c.h.b16 %v963
          %v1273 = vunpack.c.l.b16 %v964
          %v1274 = vunpack.c.l.b16 %v965
          %v1275 = vunpack.c.h.b16 %v965
          %v1276 = vunpack.c.l.b16 %v966
          %v1277 = vunpack.c.l.b16 %v967
          %v1278 = vunpack.c.h.b16 %v967
          %v1279 = vunpack.c.l.b16 %v968
          %v1280 = vunpack.c.l.b16 %v969
          %v1281 = vunpack.c.h.b16 %v969
          %v1282 = vunpack.c.l.b16 %v970
          %v1283 = vunpack.c.l.b16 %v971
          %v1284 = vunpack.c.h.b16 %v971
          %v1285 = vunpack.c.l.b16 %v972
          %v1286 = vunpack.c.l.b16 %v973
          %v1287 = vunpack.c.h.b16 %v973
          %v1288 = vunpack.c.l.b16 %v974
          %v1289 = vunpack.c.l.b16 %v975
          %v1290 = vunpack.c.h.b16 %v975
          %v1291 = vunpack.c.l.b16 %v976
          %v1292 = vunpack.c.l.b16 %v977
          %v1293 = vunpack.c.h.b16 %v977
          %v1294 = vunpack.c.l.b16 %v978
          %v1295 = vunpack.c.l.b16 %v979
          %v1296 = vunpack.c.h.b16 %v979
          %v1297 = vunpack.c.l.b16 %v980
          %v1298 = vunpack.c.l.b16 %v981
          %v1299 = vunpack.c.h.b16 %v981
          %v1300 = vunpack.c.l.b16 %v982
          %v1301 = vunpack.c.l.b16 %v983
          %v1302 = vunpack.c.h.b16 %v983
          %v1303 = vunpack.c.l.b16 %v984
          %v1304 = vunpack.c.l.b16 %v985
          %v1305 = vunpack.c.h.b16 %v985
          %v1306 = vunpack.c.l.b16 %v986
          %v1307 = vunpack.c.l.b16 %v987
          %v1308 = vunpack.c.h.b16 %v987
          %v1309 = vunpack.c.l.b16 %v988
          %v1310 = vunpack.c.l.b16 %v989
          %v1311 = vunpack.c.h.b16 %v989
          %v1312 = vunpack.c.l.b16 %v990
          %v1313 = vpack.c.b16 %v1268, %v1265
          %v1314 = vpack.c.b16 %v1269, %v1266
          %v1315 = vpack.c.b16 %v1270, %v1267
          %v1316 = vpack.c.b16 %v1274, %v1271
          %v1317 = vpack.c.b16 %v1275, %v1272
          %v1318 = vpack.c.b16 %v1276, %v1273
          %v1319 = vpack.c.b16 %v1280, %v1277
          %v1320 = vpack.c.b16 %v1281, %v1278
          %v1321 = vpack.c.b16 %v1282, %v1279
          %v1322 = vpack.c.b16 %v1286, %v1283
          %v1323 = vpack.c.b16 %v1287, %v1284
          %v1324 = vpack.c.b16 %v1288, %v1285
          %v1325 = vpack.c.b16 %v1292, %v1289
          %v1326 = vpack.c.b16 %v1293, %v1290
          %v1327 = vpack.c.b16 %v1294, %v1291
          %v1328 = vpack.c.b16 %v1298, %v1295
          %v1329 = vpack.c.b16 %v1299, %v1296
          %v1330 = vpack.c.b16 %v1300, %v1297
          %v1331 = vpack.c.b16 %v1304, %v1301
          %v1332 = vpack.c.b16 %v1305, %v1302
          %v1333 = vpack.c.b16 %v1306, %v1303
          %v1334 = vpack.c.b16 %v1310, %v1307
          %v1335 = vpack.c.b16 %v1311, %v1308
          %v1336 = vpack.c.b16 %v1312, %v1309
          %1361 = vmatprep.subr.bf16.mxu0 %v1335
          %1362 = vmatpush1.bf16.msra.mxu0 %v1334
          %1363 = vmatprep.subr.bf16.mxu0 %v1332
          %1364 = vmatpush1.bf16.msra.mxu0 %v1331
          %1365 = vmatprep.subr.bf16.mxu0 %v1329
          %1366 = vmatpush1.bf16.msra.mxu0 %v1328
          %1367 = vmatprep.subr.bf16.mxu0 %v1326
          %1368 = vmatpush1.bf16.msra.mxu0 %v1325
          %1369 = vmatprep.subr.bf16.mxu0 %v1323
          %1370 = vmatpush1.bf16.msra.mxu0 %v1322
          %1371 = vmatprep.subr.bf16.mxu0 %v1320
          %1372 = vmatpush1.bf16.msra.mxu0 %v1319
          %1373 = vmatprep.subr.bf16.mxu0 %v1317
          %1374 = vmatpush1.bf16.msra.mxu0 %v1316
          %1375 = vmatprep.subr.bf16.mxu0 %v1314
          %1376 = vmatpush1.bf16.msra.mxu0 %v1313
          %1377 = vmatprep.subr.bf16.mxu0 0
          %1378 = vmatpush2.bf16.msra.mxu0 0
          %1379 = vmatprep.subr.bf16.mxu0 0
          %1380 = vmatpush2.bf16.msra.mxu0 0
          %1381 = vmatprep.subr.bf16.mxu0 0
          %1382 = vmatpush2.bf16.msra.mxu0 0
          %1383 = vmatprep.subr.bf16.mxu0 0
          %1384 = vmatpush2.bf16.msra.mxu0 0
          %1385 = vmatprep.subr.bf16.mxu0 0
          %1386 = vmatpush2.bf16.msra.mxu0 0
          %1387 = vmatprep.subr.bf16.mxu0 0
          %1388 = vmatpush2.bf16.msra.mxu0 0
          %1389 = vmatprep.subr.bf16.mxu0 0
          %1390 = vmatpush2.bf16.msra.mxu0 0
          %1391 = vmatprep.subr.bf16.mxu0 0
          %1392 = vmatpush2.bf16.msra.mxu0 0
          %1393 = vmatprep.mubr.bf16.mxu0 0
          %1394 = vmatmul.mubr.bf16.gmra.mxu0 %v958
          %v1395 = vpop.f32.mrf.mxu0
          %v1396 = vadd.f32 %v1187, %v1395
          %v1397 = vpop.f32.mrf.mxu0
          %v1398 = vadd.f32 %v1189, %v1397
          %v1399 = vpop.f32.mrf.mxu0
          %v1400 = vpop.f32.mrf.mxu0
          %1401 = vdwg.mxu0
          %1402 = vmatprep.subr.bf16.mxu0 0
          %1403 = vmatpush1.bf16.msra.mxu0 %v1336
          %1404 = vmatprep.subr.bf16.mxu0 0
          %1405 = vmatpush1.bf16.msra.mxu0 %v1333
          %1406 = vmatprep.subr.bf16.mxu0 0
          %1407 = vmatpush1.bf16.msra.mxu0 %v1330
          %1408 = vmatprep.subr.bf16.mxu0 0
          %1409 = vmatpush1.bf16.msra.mxu0 %v1327
          %1410 = vmatprep.subr.bf16.mxu0 0
          %1411 = vmatpush1.bf16.msra.mxu0 %v1324
          %1412 = vmatprep.subr.bf16.mxu0 0
          %1413 = vmatpush1.bf16.msra.mxu0 %v1321
          %1414 = vmatprep.subr.bf16.mxu0 0
          %1415 = vmatpush1.bf16.msra.mxu0 %v1318
          %1416 = vmatprep.subr.bf16.mxu0 0
          %1417 = vmatpush1.bf16.msra.mxu0 %v1315
          %1418 = vmatprep.subr.bf16.mxu0 0
          %1419 = vmatpush2.bf16.msra.mxu0 0
          %1420 = vmatprep.subr.bf16.mxu0 0
          %1421 = vmatpush2.bf16.msra.mxu0 0
          %1422 = vmatprep.subr.bf16.mxu0 0
          %1423 = vmatpush2.bf16.msra.mxu0 0
          %1424 = vmatprep.subr.bf16.mxu0 0
          %1425 = vmatpush2.bf16.msra.mxu0 0
          %1426 = vmatprep.subr.bf16.mxu0 0
          %1427 = vmatpush2.bf16.msra.mxu0 0
          %1428 = vmatprep.subr.bf16.mxu0 0
          %1429 = vmatpush2.bf16.msra.mxu0 0
          %1430 = vmatprep.subr.bf16.mxu0 0
          %1431 = vmatpush2.bf16.msra.mxu0 0
          %1432 = vmatprep.subr.bf16.mxu0 0
          %1433 = vmatpush2.bf16.msra.mxu0 0
          %1434 = vmatprep.mubr.bf16.mxu0 0
          %1435 = vmatmul.mubr.bf16.gmra.mxu0 %v958
          %v1436 = vpop.f32.mrf.mxu0
          %v1437 = vadd.f32 %v1228, %v1436
          %v1438 = vpop.f32.mrf.mxu0
          %v1439 = vpop.f32.mrf.mxu0
          %v1440 = vpop.f32.mrf.mxu0
          %1441 = vdwg.mxu0
          %v1442 = vld [vmem:[%s7] sm:$0x7]
          %v1444 = vlaneseq
          %v1445 = vshrl.u32 %v1444, 7
          %v1446 = vsub.s32 0, %v1445
          %v1447 = vrot.slane %v1442, %v1446
          %v1448 = vlaneseq
          %v1449 = vshrl.u32 %v1448, 7
          %v1450 = vsub.s32 1, %v1449
          %v1451 = vrot.slane %v1442, %v1450
          %v1452 = vlaneseq
          %v1453 = vshrl.u32 %v1452, 7
          %v1454 = vsub.s32 2, %v1453
          %v1455 = vrot.slane %v1442, %v1454
          %v1459 = vadd.f32 %v1396, %v1447
          %v1460 = vadd.f32 %v1398, %v1451
          %v1461 = vadd.f32 %v1437, %v1455
          %v1462 = vxor.u32 %v1459, 2147483648
          %v1463 = vmul.f32 %v1462, 1.442695
          %v1464 = vpow.pop %v1463
          %v1465 = vadd.f32 %v1464, 1.0
          %v1466 = vrcp.pop %v1465
          %v1467 = vmul.f32 1.0, %v1466
          %v1468 = vxor.u32 %v1460, 2147483648
          %v1469 = vmul.f32 %v1468, 1.442695
          %v1470 = vpow.pop %v1469
          %v1471 = vadd.f32 %v1470, 1.0
          %v1472 = vrcp.pop %v1471
          %v1473 = vmul.f32 1.0, %v1472
          %v1474 = vld [vmem:[%s8] sm:$0x1]
          %v1476 = vlaneseq
          %v1477 = vshrl.u32 %v1476, 7
          %v1478 = vsub.s32 0, %v1477
          %v1479 = vrot.slane %v1474, %v1478
          %v1481 = vmul.f32 %v1467, %v1479
          %v1482 = vadd.f32 %v1461, %v1481
          %v1483 = vtanh.pop %v1482
          %v1484 = vsub.f32 1.0, %v1473
          %v1485 = vmul.f32 %v1484, %v1483
          %v1486 = vpack.c.bf16 %v957, %v957
          %v1487 = vld [vmem:[%s9] sm:$0xff]
          %v1488 = vld [vmem:[%s9 + $0x8] sm:$0xff]
          %v1489 = vld [vmem:[%s9 + $0x10] sm:$0xff]
          %v1490 = vld [vmem:[%s9 + $0x18] sm:$0xff]
          %v1491 = vld [vmem:[%s9 + $0x20] sm:$0xff]
          %v1492 = vld [vmem:[%s9 + $0x28] sm:$0xff]
          %v1493 = vld [vmem:[%s9 + $0x30] sm:$0xff]
          %v1494 = vld [vmem:[%s9 + $0x38] sm:$0xff]
          %v1495 = vld [vmem:[%s9 + $0x40] sm:$0xff]
          %v1496 = vld [vmem:[%s9 + $0x48] sm:$0xff]
          %v1497 = vld [vmem:[%s9 + $0x50] sm:$0xff]
          %v1498 = vld [vmem:[%s9 + $0x58] sm:$0xff]
          %v1499 = vld [vmem:[%s9 + $0x60] sm:$0xff]
          %v1500 = vld [vmem:[%s9 + $0x68] sm:$0xff]
          %v1501 = vld [vmem:[%s9 + $0x70] sm:$0xff]
          %v1502 = vld [vmem:[%s9 + $0x78] sm:$0xff]
          %v1503 = vld [vmem:[%s9 + $0x80] sm:$0xff]
          %v1504 = vld [vmem:[%s9 + $0x88] sm:$0xff]
          %v1505 = vld [vmem:[%s9 + $0x90] sm:$0xff]
          %v1506 = vld [vmem:[%s9 + $0x98] sm:$0xff]
          %v1507 = vld [vmem:[%s9 + $0xa0] sm:$0xff]
          %v1508 = vld [vmem:[%s9 + $0xa8] sm:$0xff]
          %v1509 = vld [vmem:[%s9 + $0xb0] sm:$0xff]
          %v1510 = vld [vmem:[%s9 + $0xb8] sm:$0xff]
          %v1511 = vld [vmem:[%s9 + $0xc0] sm:$0xff]
          %v1512 = vld [vmem:[%s9 + $0xc8] sm:$0xff]
          %v1513 = vld [vmem:[%s9 + $0xd0] sm:$0xff]
          %v1514 = vld [vmem:[%s9 + $0xd8] sm:$0xff]
          %v1515 = vld [vmem:[%s9 + $0xe0] sm:$0xff]
          %v1516 = vld [vmem:[%s9 + $0xe8] sm:$0xff]
          %v1517 = vld [vmem:[%s9 + $0xf0] sm:$0xff]
          %v1518 = vld [vmem:[%s9 + $0xf8] sm:$0xff]
          %v1519 = vld [vmem:[%s9 + $0x100] sm:$0xff]
          %v1520 = vld [vmem:[%s9 + $0x108] sm:$0xff]
          %v1521 = vld [vmem:[%s9 + $0x110] sm:$0xff]
          %v1522 = vld [vmem:[%s9 + $0x118] sm:$0xff]
          %v1523 = vld [vmem:[%s9 + $0x120] sm:$0xff]
          %v1524 = vld [vmem:[%s9 + $0x128] sm:$0xff]
          %v1525 = vld [vmem:[%s9 + $0x130] sm:$0xff]
          %v1526 = vld [vmem:[%s9 + $0x138] sm:$0xff]
          %v1527 = vld [vmem:[%s9 + $0x140] sm:$0xff]
          %v1528 = vld [vmem:[%s9 + $0x148] sm:$0xff]
          %v1529 = vld [vmem:[%s9 + $0x150] sm:$0xff]
          %v1530 = vld [vmem:[%s9 + $0x158] sm:$0xff]
          %v1531 = vld [vmem:[%s9 + $0x160] sm:$0xff]
          %v1532 = vld [vmem:[%s9 + $0x168] sm:$0xff]
          %v1533 = vld [vmem:[%s9 + $0x170] sm:$0xff]
          %v1534 = vld [vmem:[%s9 + $0x178] sm:$0xff]
          %v1535 = vld [vmem:[%s9 + $0x180] sm:$0xff]
          %v1536 = vld [vmem:[%s9 + $0x188] sm:$0xff]
          %v1537 = vld [vmem:[%s9 + $0x190] sm:$0xff]
          %v1538 = vld [vmem:[%s9 + $0x198] sm:$0xff]
          %v1539 = vld [vmem:[%s9 + $0x1a0] sm:$0xff]
          %v1540 = vld [vmem:[%s9 + $0x1a8] sm:$0xff]
          %v1541 = vld [vmem:[%s9 + $0x1b0] sm:$0xff]
          %v1542 = vld [vmem:[%s9 + $0x1b8] sm:$0xff]
          %v1543 = vld [vmem:[%s9 + $0x1c0] sm:$0xff]
          %v1544 = vld [vmem:[%s9 + $0x1c8] sm:$0xff]
          %v1545 = vld [vmem:[%s9 + $0x1d0] sm:$0xff]
          %v1546 = vld [vmem:[%s9 + $0x1d8] sm:$0xff]
          %v1547 = vld [vmem:[%s9 + $0x1e0] sm:$0xff]
          %v1548 = vld [vmem:[%s9 + $0x1e8] sm:$0xff]
          %v1549 = vld [vmem:[%s9 + $0x1f0] sm:$0xff]
          %v1550 = vld [vmem:[%s9 + $0x1f8] sm:$0xff]
          %v1551 = vpack.c.bf16 %v1485, %v1485
          %v1552 = vld [vmem:[%s9 + $0x200] sm:$0xff]
          %v1553 = vld [vmem:[%s9 + $0x208] sm:$0xff]
          %v1554 = vld [vmem:[%s9 + $0x210] sm:$0xff]
          %v1555 = vld [vmem:[%s9 + $0x218] sm:$0xff]
          %v1556 = vld [vmem:[%s9 + $0x220] sm:$0xff]
          %v1557 = vld [vmem:[%s9 + $0x228] sm:$0xff]
          %v1558 = vld [vmem:[%s9 + $0x230] sm:$0xff]
          %v1559 = vld [vmem:[%s9 + $0x238] sm:$0xff]
          %v1560 = vld [vmem:[%s9 + $0x240] sm:$0xff]
          %v1561 = vld [vmem:[%s9 + $0x248] sm:$0xff]
          %v1562 = vld [vmem:[%s9 + $0x250] sm:$0xff]
          %v1563 = vld [vmem:[%s9 + $0x258] sm:$0xff]
          %v1564 = vld [vmem:[%s9 + $0x260] sm:$0xff]
          %v1565 = vld [vmem:[%s9 + $0x268] sm:$0xff]
          %v1566 = vld [vmem:[%s9 + $0x270] sm:$0xff]
          %v1567 = vld [vmem:[%s9 + $0x278] sm:$0xff]
          %v1568 = vld [vmem:[%s9 + $0x280] sm:$0xff]
          %v1569 = vld [vmem:[%s9 + $0x288] sm:$0xff]
          %v1570 = vld [vmem:[%s9 + $0x290] sm:$0xff]
          %v1571 = vld [vmem:[%s9 + $0x298] sm:$0xff]
          %v1572 = vld [vmem:[%s9 + $0x2a0] sm:$0xff]
          %v1573 = vld [vmem:[%s9 + $0x2a8] sm:$0xff]
          %v1574 = vld [vmem:[%s9 + $0x2b0] sm:$0xff]
          %v1575 = vld [vmem:[%s9 + $0x2b8] sm:$0xff]
          %v1576 = vld [vmem:[%s9 + $0x2c0] sm:$0xff]
          %v1577 = vld [vmem:[%s9 + $0x2c8] sm:$0xff]
          %v1578 = vld [vmem:[%s9 + $0x2d0] sm:$0xff]
          %v1579 = vld [vmem:[%s9 + $0x2d8] sm:$0xff]
          %v1580 = vld [vmem:[%s9 + $0x2e0] sm:$0xff]
          %v1581 = vld [vmem:[%s9 + $0x2e8] sm:$0xff]
          %v1582 = vld [vmem:[%s9 + $0x2f0] sm:$0xff]
          %v1583 = vld [vmem:[%s9 + $0x2f8] sm:$0xff]
          %v1584 = vld [vmem:[%s9 + $0x300] sm:$0xff]
          %v1585 = vld [vmem:[%s9 + $0x308] sm:$0xff]
          %v1586 = vld [vmem:[%s9 + $0x310] sm:$0xff]
          %v1587 = vld [vmem:[%s9 + $0x318] sm:$0xff]
          %v1588 = vld [vmem:[%s9 + $0x320] sm:$0xff]
          %v1589 = vld [vmem:[%s9 + $0x328] sm:$0xff]
          %v1590 = vld [vmem:[%s9 + $0x330] sm:$0xff]
          %v1591 = vld [vmem:[%s9 + $0x338] sm:$0xff]
          %v1592 = vld [vmem:[%s9 + $0x340] sm:$0xff]
          %v1593 = vld [vmem:[%s9 + $0x348] sm:$0xff]
          %v1594 = vld [vmem:[%s9 + $0x350] sm:$0xff]
          %v1595 = vld [vmem:[%s9 + $0x358] sm:$0xff]
          %v1596 = vld [vmem:[%s9 + $0x360] sm:$0xff]
          %v1597 = vld [vmem:[%s9 + $0x368] sm:$0xff]
          %v1598 = vld [vmem:[%s9 + $0x370] sm:$0xff]
          %v1599 = vld [vmem:[%s9 + $0x378] sm:$0xff]
          %v1600 = vld [vmem:[%s9 + $0x380] sm:$0xff]
          %v1601 = vld [vmem:[%s9 + $0x388] sm:$0xff]
          %v1602 = vld [vmem:[%s9 + $0x390] sm:$0xff]
          %v1603 = vld [vmem:[%s9 + $0x398] sm:$0xff]
          %v1604 = vld [vmem:[%s9 + $0x3a0] sm:$0xff]
          %v1605 = vld [vmem:[%s9 + $0x3a8] sm:$0xff]
          %v1606 = vld [vmem:[%s9 + $0x3b0] sm:$0xff]
          %v1607 = vld [vmem:[%s9 + $0x3b8] sm:$0xff]
          %v1608 = vld [vmem:[%s9 + $0x3c0] sm:$0xff]
          %v1609 = vld [vmem:[%s9 + $0x3c8] sm:$0xff]
          %v1610 = vld [vmem:[%s9 + $0x3d0] sm:$0xff]
          %v1611 = vld [vmem:[%s9 + $0x3d8] sm:$0xff]
          %v1612 = vld [vmem:[%s9 + $0x3e0] sm:$0xff]
          %v1613 = vld [vmem:[%s9 + $0x3e8] sm:$0xff]
          %v1614 = vld [vmem:[%s9 + $0x3f0] sm:$0xff]
          %v1615 = vld [vmem:[%s9 + $0x3f8] sm:$0xff]
          %v1680 = vunpack.c.l.b16 %v1552
          %v1681 = vunpack.c.h.b16 %v1552
          %v1682 = vunpack.c.l.b16 %v1553
          %v1683 = vunpack.c.h.b16 %v1553
          %v1684 = vunpack.c.l.b16 %v1554
          %v1685 = vunpack.c.h.b16 %v1554
          %v1686 = vunpack.c.l.b16 %v1555
          %v1687 = vunpack.c.h.b16 %v1555
          %v1688 = vunpack.c.l.b16 %v1556
          %v1689 = vunpack.c.h.b16 %v1556
          %v1690 = vunpack.c.l.b16 %v1557
          %v1691 = vunpack.c.h.b16 %v1557
          %v1692 = vunpack.c.l.b16 %v1558
          %v1693 = vunpack.c.h.b16 %v1558
          %v1694 = vunpack.c.l.b16 %v1559
          %v1695 = vunpack.c.h.b16 %v1559
          %v1696 = vunpack.c.l.b16 %v1560
          %v1697 = vunpack.c.h.b16 %v1560
          %v1698 = vunpack.c.l.b16 %v1561
          %v1699 = vunpack.c.h.b16 %v1561
          %v1700 = vunpack.c.l.b16 %v1562
          %v1701 = vunpack.c.h.b16 %v1562
          %v1702 = vunpack.c.l.b16 %v1563
          %v1703 = vunpack.c.h.b16 %v1563
          %v1704 = vunpack.c.l.b16 %v1564
          %v1705 = vunpack.c.h.b16 %v1564
          %v1706 = vunpack.c.l.b16 %v1565
          %v1707 = vunpack.c.h.b16 %v1565
          %v1708 = vunpack.c.l.b16 %v1566
          %v1709 = vunpack.c.h.b16 %v1566
          %v1710 = vunpack.c.l.b16 %v1567
          %v1711 = vunpack.c.h.b16 %v1567
          %v1712 = vunpack.c.l.b16 %v1568
          %v1713 = vunpack.c.h.b16 %v1568
          %v1714 = vunpack.c.l.b16 %v1569
          %v1715 = vunpack.c.h.b16 %v1569
          %v1716 = vunpack.c.l.b16 %v1570
          %v1717 = vunpack.c.h.b16 %v1570
          %v1718 = vunpack.c.l.b16 %v1571
          %v1719 = vunpack.c.h.b16 %v1571
          %v1720 = vunpack.c.l.b16 %v1572
          %v1721 = vunpack.c.h.b16 %v1572
          %v1722 = vunpack.c.l.b16 %v1573
          %v1723 = vunpack.c.h.b16 %v1573
          %v1724 = vunpack.c.l.b16 %v1574
          %v1725 = vunpack.c.h.b16 %v1574
          %v1726 = vunpack.c.l.b16 %v1575
          %v1727 = vunpack.c.h.b16 %v1575
          %v1728 = vunpack.c.l.b16 %v1576
          %v1729 = vunpack.c.h.b16 %v1576
          %v1730 = vunpack.c.l.b16 %v1577
          %v1731 = vunpack.c.h.b16 %v1577
          %v1732 = vunpack.c.l.b16 %v1578
          %v1733 = vunpack.c.h.b16 %v1578
          %v1734 = vunpack.c.l.b16 %v1579
          %v1735 = vunpack.c.h.b16 %v1579
          %v1736 = vunpack.c.l.b16 %v1580
          %v1737 = vunpack.c.h.b16 %v1580
          %v1738 = vunpack.c.l.b16 %v1581
          %v1739 = vunpack.c.h.b16 %v1581
          %v1740 = vunpack.c.l.b16 %v1582
          %v1741 = vunpack.c.h.b16 %v1582
          %v1742 = vunpack.c.l.b16 %v1583
          %v1743 = vunpack.c.h.b16 %v1583
          %v1744 = vunpack.c.l.b16 %v1584
          %v1745 = vunpack.c.h.b16 %v1584
          %v1746 = vunpack.c.l.b16 %v1585
          %v1747 = vunpack.c.h.b16 %v1585
          %v1748 = vunpack.c.l.b16 %v1586
          %v1749 = vunpack.c.h.b16 %v1586
          %v1750 = vunpack.c.l.b16 %v1587
          %v1751 = vunpack.c.h.b16 %v1587
          %v1752 = vunpack.c.l.b16 %v1588
          %v1753 = vunpack.c.h.b16 %v1588
          %v1754 = vunpack.c.l.b16 %v1589
          %v1755 = vunpack.c.h.b16 %v1589
          %v1756 = vunpack.c.l.b16 %v1590
          %v1757 = vunpack.c.h.b16 %v1590
          %v1758 = vunpack.c.l.b16 %v1591
          %v1759 = vunpack.c.h.b16 %v1591
          %v1760 = vunpack.c.l.b16 %v1592
          %v1761 = vunpack.c.h.b16 %v1592
          %v1762 = vunpack.c.l.b16 %v1593
          %v1763 = vunpack.c.h.b16 %v1593
          %v1764 = vunpack.c.l.b16 %v1594
          %v1765 = vunpack.c.h.b16 %v1594
          %v1766 = vunpack.c.l.b16 %v1595
          %v1767 = vunpack.c.h.b16 %v1595
          %v1768 = vunpack.c.l.b16 %v1596
          %v1769 = vunpack.c.h.b16 %v1596
          %v1770 = vunpack.c.l.b16 %v1597
          %v1771 = vunpack.c.h.b16 %v1597
          %v1772 = vunpack.c.l.b16 %v1598
          %v1773 = vunpack.c.h.b16 %v1598
          %v1774 = vunpack.c.l.b16 %v1599
          %v1775 = vunpack.c.h.b16 %v1599
          %v1776 = vunpack.c.l.b16 %v1600
          %v1777 = vunpack.c.h.b16 %v1600
          %v1778 = vunpack.c.l.b16 %v1601
          %v1779 = vunpack.c.h.b16 %v1601
          %v1780 = vunpack.c.l.b16 %v1602
          %v1781 = vunpack.c.h.b16 %v1602
          %v1782 = vunpack.c.l.b16 %v1603
          %v1783 = vunpack.c.h.b16 %v1603
          %v1784 = vunpack.c.l.b16 %v1604
          %v1785 = vunpack.c.h.b16 %v1604
          %v1786 = vunpack.c.l.b16 %v1605
          %v1787 = vunpack.c.h.b16 %v1605
          %v1788 = vunpack.c.l.b16 %v1606
          %v1789 = vunpack.c.h.b16 %v1606
          %v1790 = vunpack.c.l.b16 %v1607
          %v1791 = vunpack.c.h.b16 %v1607
          %v1792 = vunpack.c.l.b16 %v1608
          %v1793 = vunpack.c.h.b16 %v1608
          %v1794 = vunpack.c.l.b16 %v1609
          %v1795 = vunpack.c.h.b16 %v1609
          %v1796 = vunpack.c.l.b16 %v1610
          %v1797 = vunpack.c.h.b16 %v1610
          %v1798 = vunpack.c.l.b16 %v1611
          %v1799 = vunpack.c.h.b16 %v1611
          %v1800 = vunpack.c.l.b16 %v1612
          %v1801 = vunpack.c.h.b16 %v1612
          %v1802 = vunpack.c.l.b16 %v1613
          %v1803 = vunpack.c.h.b16 %v1613
          %v1804 = vunpack.c.l.b16 %v1614
          %v1805 = vunpack.c.h.b16 %v1614
          %v1806 = vunpack.c.l.b16 %v1615
          %v1807 = vunpack.c.h.b16 %v1615
          %v1808 = vpack.c.b16 %v1688, %v1680
          %v1809 = vpack.c.b16 %v1689, %v1681
          %v1810 = vpack.c.b16 %v1690, %v1682
          %v1811 = vpack.c.b16 %v1691, %v1683
          %v1812 = vpack.c.b16 %v1692, %v1684
          %v1813 = vpack.c.b16 %v1693, %v1685
          %v1814 = vpack.c.b16 %v1694, %v1686
          %v1815 = vpack.c.b16 %v1695, %v1687
          %v1816 = vpack.c.b16 %v1704, %v1696
          %v1817 = vpack.c.b16 %v1705, %v1697
          %v1818 = vpack.c.b16 %v1706, %v1698
          %v1819 = vpack.c.b16 %v1707, %v1699
          %v1820 = vpack.c.b16 %v1708, %v1700
          %v1821 = vpack.c.b16 %v1709, %v1701
          %v1822 = vpack.c.b16 %v1710, %v1702
          %v1823 = vpack.c.b16 %v1711, %v1703
          %v1824 = vpack.c.b16 %v1720, %v1712
          %v1825 = vpack.c.b16 %v1721, %v1713
          %v1826 = vpack.c.b16 %v1722, %v1714
          %v1827 = vpack.c.b16 %v1723, %v1715
          %v1828 = vpack.c.b16 %v1724, %v1716
          %v1829 = vpack.c.b16 %v1725, %v1717
          %v1830 = vpack.c.b16 %v1726, %v1718
          %v1831 = vpack.c.b16 %v1727, %v1719
          %v1832 = vpack.c.b16 %v1736, %v1728
          %v1833 = vpack.c.b16 %v1737, %v1729
          %v1834 = vpack.c.b16 %v1738, %v1730
          %v1835 = vpack.c.b16 %v1739, %v1731
          %v1836 = vpack.c.b16 %v1740, %v1732
          %v1837 = vpack.c.b16 %v1741, %v1733
          %v1838 = vpack.c.b16 %v1742, %v1734
          %v1839 = vpack.c.b16 %v1743, %v1735
          %v1840 = vpack.c.b16 %v1752, %v1744
          %v1841 = vpack.c.b16 %v1753, %v1745
          %v1842 = vpack.c.b16 %v1754, %v1746
          %v1843 = vpack.c.b16 %v1755, %v1747
          %v1844 = vpack.c.b16 %v1756, %v1748
          %v1845 = vpack.c.b16 %v1757, %v1749
          %v1846 = vpack.c.b16 %v1758, %v1750
          %v1847 = vpack.c.b16 %v1759, %v1751
          %v1848 = vpack.c.b16 %v1768, %v1760
          %v1849 = vpack.c.b16 %v1769, %v1761
          %v1850 = vpack.c.b16 %v1770, %v1762
          %v1851 = vpack.c.b16 %v1771, %v1763
          %v1852 = vpack.c.b16 %v1772, %v1764
          %v1853 = vpack.c.b16 %v1773, %v1765
          %v1854 = vpack.c.b16 %v1774, %v1766
          %v1855 = vpack.c.b16 %v1775, %v1767
          %v1856 = vpack.c.b16 %v1784, %v1776
          %v1857 = vpack.c.b16 %v1785, %v1777
          %v1858 = vpack.c.b16 %v1786, %v1778
          %v1859 = vpack.c.b16 %v1787, %v1779
          %v1860 = vpack.c.b16 %v1788, %v1780
          %v1861 = vpack.c.b16 %v1789, %v1781
          %v1862 = vpack.c.b16 %v1790, %v1782
          %v1863 = vpack.c.b16 %v1791, %v1783
          %v1864 = vpack.c.b16 %v1800, %v1792
          %v1865 = vpack.c.b16 %v1801, %v1793
          %v1866 = vpack.c.b16 %v1802, %v1794
          %v1867 = vpack.c.b16 %v1803, %v1795
          %v1868 = vpack.c.b16 %v1804, %v1796
          %v1869 = vpack.c.b16 %v1805, %v1797
          %v1870 = vpack.c.b16 %v1806, %v1798
          %v1871 = vpack.c.b16 %v1807, %v1799
          %1936 = vmatprep.subr.bf16.mxu0 %v1865
          %1937 = vmatpush1.bf16.msra.mxu0 %v1864
          %1938 = vmatprep.subr.bf16.mxu0 %v1857
          %1939 = vmatpush1.bf16.msra.mxu0 %v1856
          %1940 = vmatprep.subr.bf16.mxu0 %v1849
          %1941 = vmatpush1.bf16.msra.mxu0 %v1848
          %1942 = vmatprep.subr.bf16.mxu0 %v1841
          %1943 = vmatpush1.bf16.msra.mxu0 %v1840
          %1944 = vmatprep.subr.bf16.mxu0 %v1833
          %1945 = vmatpush1.bf16.msra.mxu0 %v1832
          %1946 = vmatprep.subr.bf16.mxu0 %v1825
          %1947 = vmatpush1.bf16.msra.mxu0 %v1824
          %1948 = vmatprep.subr.bf16.mxu0 %v1817
          %1949 = vmatpush1.bf16.msra.mxu0 %v1816
          %1950 = vmatprep.subr.bf16.mxu0 %v1809
          %1951 = vmatpush1.bf16.msra.mxu0 %v1808
          %1952 = vmatprep.subr.bf16.mxu0 0
          %1953 = vmatpush2.bf16.msra.mxu0 0
          %1954 = vmatprep.subr.bf16.mxu0 0
          %1955 = vmatpush2.bf16.msra.mxu0 0
          %1956 = vmatprep.subr.bf16.mxu0 0
          %1957 = vmatpush2.bf16.msra.mxu0 0
          %1958 = vmatprep.subr.bf16.mxu0 0
          %1959 = vmatpush2.bf16.msra.mxu0 0
          %1960 = vmatprep.subr.bf16.mxu0 0
          %1961 = vmatpush2.bf16.msra.mxu0 0
          %1962 = vmatprep.subr.bf16.mxu0 0
          %1963 = vmatpush2.bf16.msra.mxu0 0
          %1964 = vmatprep.subr.bf16.mxu0 0
          %1965 = vmatpush2.bf16.msra.mxu0 0
          %1966 = vmatprep.subr.bf16.mxu0 0
          %1967 = vmatpush2.bf16.msra.mxu0 0
          %1968 = vmatprep.mubr.bf16.mxu0 0
          %1969 = vmatmul.mubr.bf16.gmra.mxu0 %v1551
          %v1970 = vpop.f32.mrf.mxu0
          %v1971 = vadd.f32 0.0, %v1970
          %v1972 = vpop.f32.mrf.mxu0
          %v1973 = vadd.f32 0.0, %v1972
          %v1974 = vpop.f32.mrf.mxu0
          %v1975 = vpop.f32.mrf.mxu0
          %1976 = vdwg.mxu0
          %1977 = vmatprep.subr.bf16.mxu0 %v1867
          %1978 = vmatpush1.bf16.msra.mxu0 %v1866
          %1979 = vmatprep.subr.bf16.mxu0 %v1859
          %1980 = vmatpush1.bf16.msra.mxu0 %v1858
          %1981 = vmatprep.subr.bf16.mxu0 %v1851
          %1982 = vmatpush1.bf16.msra.mxu0 %v1850
          %1983 = vmatprep.subr.bf16.mxu0 %v1843
          %1984 = vmatpush1.bf16.msra.mxu0 %v1842
          %1985 = vmatprep.subr.bf16.mxu0 %v1835
          %1986 = vmatpush1.bf16.msra.mxu0 %v1834
          %1987 = vmatprep.subr.bf16.mxu0 %v1827
          %1988 = vmatpush1.bf16.msra.mxu0 %v1826
          %1989 = vmatprep.subr.bf16.mxu0 %v1819
          %1990 = vmatpush1.bf16.msra.mxu0 %v1818
          %1991 = vmatprep.subr.bf16.mxu0 %v1811
          %1992 = vmatpush1.bf16.msra.mxu0 %v1810
          %1993 = vmatprep.subr.bf16.mxu0 0
          %1994 = vmatpush2.bf16.msra.mxu0 0
          %1995 = vmatprep.subr.bf16.mxu0 0
          %1996 = vmatpush2.bf16.msra.mxu0 0
          %1997 = vmatprep.subr.bf16.mxu0 0
          %1998 = vmatpush2.bf16.msra.mxu0 0
          %1999 = vmatprep.subr.bf16.mxu0 0
          %2000 = vmatpush2.bf16.msra.mxu0 0
          %2001 = vmatprep.subr.bf16.mxu0 0
          %2002 = vmatpush2.bf16.msra.mxu0 0
          %2003 = vmatprep.subr.bf16.mxu0 0
          %2004 = vmatpush2.bf16.msra.mxu0 0
          %2005 = vmatprep.subr.bf16.mxu0 0
          %2006 = vmatpush2.bf16.msra.mxu0 0
          %2007 = vmatprep.subr.bf16.mxu0 0
          %2008 = vmatpush2.bf16.msra.mxu0 0
          %2009 = vmatprep.mubr.bf16.mxu0 0
          %2010 = vmatmul.mubr.bf16.gmra.mxu0 %v1551
          %v2011 = vpop.f32.mrf.mxu0
          %v2012 = vadd.f32 0.0, %v2011
          %v2013 = vpop.f32.mrf.mxu0
          %v2014 = vadd.f32 0.0, %v2013
          %v2015 = vpop.f32.mrf.mxu0
          %v2016 = vpop.f32.mrf.mxu0
          %2017 = vdwg.mxu0
          %2018 = vmatprep.subr.bf16.mxu0 %v1869
          %2019 = vmatpush1.bf16.msra.mxu0 %v1868
          %2020 = vmatprep.subr.bf16.mxu0 %v1861
          %2021 = vmatpush1.bf16.msra.mxu0 %v1860
          %2022 = vmatprep.subr.bf16.mxu0 %v1853
          %2023 = vmatpush1.bf16.msra.mxu0 %v1852
          %2024 = vmatprep.subr.bf16.mxu0 %v1845
          %2025 = vmatpush1.bf16.msra.mxu0 %v1844
          %2026 = vmatprep.subr.bf16.mxu0 %v1837
          %2027 = vmatpush1.bf16.msra.mxu0 %v1836
          %2028 = vmatprep.subr.bf16.mxu0 %v1829
          %2029 = vmatpush1.bf16.msra.mxu0 %v1828
          %2030 = vmatprep.subr.bf16.mxu0 %v1821
          %2031 = vmatpush1.bf16.msra.mxu0 %v1820
          %2032 = vmatprep.subr.bf16.mxu0 %v1813
          %2033 = vmatpush1.bf16.msra.mxu0 %v1812
          %2034 = vmatprep.subr.bf16.mxu0 0
          %2035 = vmatpush2.bf16.msra.mxu0 0
          %2036 = vmatprep.subr.bf16.mxu0 0
          %2037 = vmatpush2.bf16.msra.mxu0 0
          %2038 = vmatprep.subr.bf16.mxu0 0
          %2039 = vmatpush2.bf16.msra.mxu0 0
          %2040 = vmatprep.subr.bf16.mxu0 0
          %2041 = vmatpush2.bf16.msra.mxu0 0
          %2042 = vmatprep.subr.bf16.mxu0 0
          %2043 = vmatpush2.bf16.msra.mxu0 0
          %2044 = vmatprep.subr.bf16.mxu0 0
          %2045 = vmatpush2.bf16.msra.mxu0 0
          %2046 = vmatprep.subr.bf16.mxu0 0
          %2047 = vmatpush2.bf16.msra.mxu0 0
          %2048 = vmatprep.subr.bf16.mxu0 0
          %2049 = vmatpush2.bf16.msra.mxu0 0
          %2050 = vmatprep.mubr.bf16.mxu0 0
          %2051 = vmatmul.mubr.bf16.gmra.mxu0 %v1551
          %v2052 = vpop.f32.mrf.mxu0
          %v2053 = vadd.f32 0.0, %v2052
          %v2054 = vpop.f32.mrf.mxu0
          %v2055 = vadd.f32 0.0, %v2054
          %v2056 = vpop.f32.mrf.mxu0
          %v2057 = vpop.f32.mrf.mxu0
          %2058 = vdwg.mxu0
          %2059 = vmatprep.subr.bf16.mxu0 %v1871
          %2060 = vmatpush1.bf16.msra.mxu0 %v1870
          %2061 = vmatprep.subr.bf16.mxu0 %v1863
          %2062 = vmatpush1.bf16.msra.mxu0 %v1862
          %2063 = vmatprep.subr.bf16.mxu0 %v1855
          %2064 = vmatpush1.bf16.msra.mxu0 %v1854
          %2065 = vmatprep.subr.bf16.mxu0 %v1847
          %2066 = vmatpush1.bf16.msra.mxu0 %v1846
          %2067 = vmatprep.subr.bf16.mxu0 %v1839
          %2068 = vmatpush1.bf16.msra.mxu0 %v1838
          %2069 = vmatprep.subr.bf16.mxu0 %v1831
          %2070 = vmatpush1.bf16.msra.mxu0 %v1830
          %2071 = vmatprep.subr.bf16.mxu0 %v1823
          %2072 = vmatpush1.bf16.msra.mxu0 %v1822
          %2073 = vmatprep.subr.bf16.mxu0 %v1815
          %2074 = vmatpush1.bf16.msra.mxu0 %v1814
          %2075 = vmatprep.subr.bf16.mxu0 0
          %2076 = vmatpush2.bf16.msra.mxu0 0
          %2077 = vmatprep.subr.bf16.mxu0 0
          %2078 = vmatpush2.bf16.msra.mxu0 0
          %2079 = vmatprep.subr.bf16.mxu0 0
          %2080 = vmatpush2.bf16.msra.mxu0 0
          %2081 = vmatprep.subr.bf16.mxu0 0
          %2082 = vmatpush2.bf16.msra.mxu0 0
          %2083 = vmatprep.subr.bf16.mxu0 0
          %2084 = vmatpush2.bf16.msra.mxu0 0
          %2085 = vmatprep.subr.bf16.mxu0 0
          %2086 = vmatpush2.bf16.msra.mxu0 0
          %2087 = vmatprep.subr.bf16.mxu0 0
          %2088 = vmatpush2.bf16.msra.mxu0 0
          %2089 = vmatprep.subr.bf16.mxu0 0
          %2090 = vmatpush2.bf16.msra.mxu0 0
          %2091 = vmatprep.mubr.bf16.mxu0 0
          %2092 = vmatmul.mubr.bf16.gmra.mxu0 %v1551
          %v2093 = vpop.f32.mrf.mxu0
          %v2094 = vadd.f32 0.0, %v2093
          %v2095 = vpop.f32.mrf.mxu0
          %v2096 = vadd.f32 0.0, %v2095
          %v2097 = vpop.f32.mrf.mxu0
          %v2098 = vpop.f32.mrf.mxu0
          %2099 = vdwg.mxu0
          %v2164 = vunpack.c.l.b16 %v1487
          %v2165 = vunpack.c.h.b16 %v1487
          %v2166 = vunpack.c.l.b16 %v1488
          %v2167 = vunpack.c.h.b16 %v1488
          %v2168 = vunpack.c.l.b16 %v1489
          %v2169 = vunpack.c.h.b16 %v1489
          %v2170 = vunpack.c.l.b16 %v1490
          %v2171 = vunpack.c.h.b16 %v1490
          %v2172 = vunpack.c.l.b16 %v1491
          %v2173 = vunpack.c.h.b16 %v1491
          %v2174 = vunpack.c.l.b16 %v1492
          %v2175 = vunpack.c.h.b16 %v1492
          %v2176 = vunpack.c.l.b16 %v1493
          %v2177 = vunpack.c.h.b16 %v1493
          %v2178 = vunpack.c.l.b16 %v1494
          %v2179 = vunpack.c.h.b16 %v1494
          %v2180 = vunpack.c.l.b16 %v1495
          %v2181 = vunpack.c.h.b16 %v1495
          %v2182 = vunpack.c.l.b16 %v1496
          %v2183 = vunpack.c.h.b16 %v1496
          %v2184 = vunpack.c.l.b16 %v1497
          %v2185 = vunpack.c.h.b16 %v1497
          %v2186 = vunpack.c.l.b16 %v1498
          %v2187 = vunpack.c.h.b16 %v1498
          %v2188 = vunpack.c.l.b16 %v1499
          %v2189 = vunpack.c.h.b16 %v1499
          %v2190 = vunpack.c.l.b16 %v1500
          %v2191 = vunpack.c.h.b16 %v1500
          %v2192 = vunpack.c.l.b16 %v1501
          %v2193 = vunpack.c.h.b16 %v1501
          %v2194 = vunpack.c.l.b16 %v1502
          %v2195 = vunpack.c.h.b16 %v1502
          %v2196 = vunpack.c.l.b16 %v1503
          %v2197 = vunpack.c.h.b16 %v1503
          %v2198 = vunpack.c.l.b16 %v1504
          %v2199 = vunpack.c.h.b16 %v1504
          %v2200 = vunpack.c.l.b16 %v1505
          %v2201 = vunpack.c.h.b16 %v1505
          %v2202 = vunpack.c.l.b16 %v1506
          %v2203 = vunpack.c.h.b16 %v1506
          %v2204 = vunpack.c.l.b16 %v1507
          %v2205 = vunpack.c.h.b16 %v1507
          %v2206 = vunpack.c.l.b16 %v1508
          %v2207 = vunpack.c.h.b16 %v1508
          %v2208 = vunpack.c.l.b16 %v1509
          %v2209 = vunpack.c.h.b16 %v1509
          %v2210 = vunpack.c.l.b16 %v1510
          %v2211 = vunpack.c.h.b16 %v1510
          %v2212 = vunpack.c.l.b16 %v1511
          %v2213 = vunpack.c.h.b16 %v1511
          %v2214 = vunpack.c.l.b16 %v1512
          %v2215 = vunpack.c.h.b16 %v1512
          %v2216 = vunpack.c.l.b16 %v1513
          %v2217 = vunpack.c.h.b16 %v1513
          %v2218 = vunpack.c.l.b16 %v1514
          %v2219 = vunpack.c.h.b16 %v1514
          %v2220 = vunpack.c.l.b16 %v1515
          %v2221 = vunpack.c.h.b16 %v1515
          %v2222 = vunpack.c.l.b16 %v1516
          %v2223 = vunpack.c.h.b16 %v1516
          %v2224 = vunpack.c.l.b16 %v1517
          %v2225 = vunpack.c.h.b16 %v1517
          %v2226 = vunpack.c.l.b16 %v1518
          %v2227 = vunpack.c.h.b16 %v1518
          %v2228 = vunpack.c.l.b16 %v1519
          %v2229 = vunpack.c.h.b16 %v1519
          %v2230 = vunpack.c.l.b16 %v1520
          %v2231 = vunpack.c.h.b16 %v1520
          %v2232 = vunpack.c.l.b16 %v1521
          %v2233 = vunpack.c.h.b16 %v1521
          %v2234 = vunpack.c.l.b16 %v1522
          %v2235 = vunpack.c.h.b16 %v1522
          %v2236 = vunpack.c.l.b16 %v1523
          %v2237 = vunpack.c.h.b16 %v1523
          %v2238 = vunpack.c.l.b16 %v1524
          %v2239 = vunpack.c.h.b16 %v1524
          %v2240 = vunpack.c.l.b16 %v1525
          %v2241 = vunpack.c.h.b16 %v1525
          %v2242 = vunpack.c.l.b16 %v1526
          %v2243 = vunpack.c.h.b16 %v1526
          %v2244 = vunpack.c.l.b16 %v1527
          %v2245 = vunpack.c.h.b16 %v1527
          %v2246 = vunpack.c.l.b16 %v1528
          %v2247 = vunpack.c.h.b16 %v1528
          %v2248 = vunpack.c.l.b16 %v1529
          %v2249 = vunpack.c.h.b16 %v1529
          %v2250 = vunpack.c.l.b16 %v1530
          %v2251 = vunpack.c.h.b16 %v1530
          %v2252 = vunpack.c.l.b16 %v1531
          %v2253 = vunpack.c.h.b16 %v1531
          %v2254 = vunpack.c.l.b16 %v1532
          %v2255 = vunpack.c.h.b16 %v1532
          %v2256 = vunpack.c.l.b16 %v1533
          %v2257 = vunpack.c.h.b16 %v1533
          %v2258 = vunpack.c.l.b16 %v1534
          %v2259 = vunpack.c.h.b16 %v1534
          %v2260 = vunpack.c.l.b16 %v1535
          %v2261 = vunpack.c.h.b16 %v1535
          %v2262 = vunpack.c.l.b16 %v1536
          %v2263 = vunpack.c.h.b16 %v1536
          %v2264 = vunpack.c.l.b16 %v1537
          %v2265 = vunpack.c.h.b16 %v1537
          %v2266 = vunpack.c.l.b16 %v1538
          %v2267 = vunpack.c.h.b16 %v1538
          %v2268 = vunpack.c.l.b16 %v1539
          %v2269 = vunpack.c.h.b16 %v1539
          %v2270 = vunpack.c.l.b16 %v1540
          %v2271 = vunpack.c.h.b16 %v1540
          %v2272 = vunpack.c.l.b16 %v1541
          %v2273 = vunpack.c.h.b16 %v1541
          %v2274 = vunpack.c.l.b16 %v1542
          %v2275 = vunpack.c.h.b16 %v1542
          %v2276 = vunpack.c.l.b16 %v1543
          %v2277 = vunpack.c.h.b16 %v1543
          %v2278 = vunpack.c.l.b16 %v1544
          %v2279 = vunpack.c.h.b16 %v1544
          %v2280 = vunpack.c.l.b16 %v1545
          %v2281 = vunpack.c.h.b16 %v1545
          %v2282 = vunpack.c.l.b16 %v1546
          %v2283 = vunpack.c.h.b16 %v1546
          %v2284 = vunpack.c.l.b16 %v1547
          %v2285 = vunpack.c.h.b16 %v1547
          %v2286 = vunpack.c.l.b16 %v1548
          %v2287 = vunpack.c.h.b16 %v1548
          %v2288 = vunpack.c.l.b16 %v1549
          %v2289 = vunpack.c.h.b16 %v1549
          %v2290 = vunpack.c.l.b16 %v1550
          %v2291 = vunpack.c.h.b16 %v1550
          %v2292 = vpack.c.b16 %v2172, %v2164
          %v2293 = vpack.c.b16 %v2173, %v2165
          %v2294 = vpack.c.b16 %v2174, %v2166
          %v2295 = vpack.c.b16 %v2175, %v2167
          %v2296 = vpack.c.b16 %v2176, %v2168
          %v2297 = vpack.c.b16 %v2177, %v2169
          %v2298 = vpack.c.b16 %v2178, %v2170
          %v2299 = vpack.c.b16 %v2179, %v2171
          %v2300 = vpack.c.b16 %v2188, %v2180
          %v2301 = vpack.c.b16 %v2189, %v2181
          %v2302 = vpack.c.b16 %v2190, %v2182
          %v2303 = vpack.c.b16 %v2191, %v2183
          %v2304 = vpack.c.b16 %v2192, %v2184
          %v2305 = vpack.c.b16 %v2193, %v2185
          %v2306 = vpack.c.b16 %v2194, %v2186
          %v2307 = vpack.c.b16 %v2195, %v2187
          %v2308 = vpack.c.b16 %v2204, %v2196
          %v2309 = vpack.c.b16 %v2205, %v2197
          %v2310 = vpack.c.b16 %v2206, %v2198
          %v2311 = vpack.c.b16 %v2207, %v2199
          %v2312 = vpack.c.b16 %v2208, %v2200
          %v2313 = vpack.c.b16 %v2209, %v2201
          %v2314 = vpack.c.b16 %v2210, %v2202
          %v2315 = vpack.c.b16 %v2211, %v2203
          %v2316 = vpack.c.b16 %v2220, %v2212
          %v2317 = vpack.c.b16 %v2221, %v2213
          %v2318 = vpack.c.b16 %v2222, %v2214
          %v2319 = vpack.c.b16 %v2223, %v2215
          %v2320 = vpack.c.b16 %v2224, %v2216
          %v2321 = vpack.c.b16 %v2225, %v2217
          %v2322 = vpack.c.b16 %v2226, %v2218
          %v2323 = vpack.c.b16 %v2227, %v2219
          %v2324 = vpack.c.b16 %v2236, %v2228
          %v2325 = vpack.c.b16 %v2237, %v2229
          %v2326 = vpack.c.b16 %v2238, %v2230
          %v2327 = vpack.c.b16 %v2239, %v2231
          %v2328 = vpack.c.b16 %v2240, %v2232
          %v2329 = vpack.c.b16 %v2241, %v2233
          %v2330 = vpack.c.b16 %v2242, %v2234
          %v2331 = vpack.c.b16 %v2243, %v2235
          %v2332 = vpack.c.b16 %v2252, %v2244
          %v2333 = vpack.c.b16 %v2253, %v2245
          %v2334 = vpack.c.b16 %v2254, %v2246
          %v2335 = vpack.c.b16 %v2255, %v2247
          %v2336 = vpack.c.b16 %v2256, %v2248
          %v2337 = vpack.c.b16 %v2257, %v2249
          %v2338 = vpack.c.b16 %v2258, %v2250
          %v2339 = vpack.c.b16 %v2259, %v2251
          %v2340 = vpack.c.b16 %v2268, %v2260
          %v2341 = vpack.c.b16 %v2269, %v2261
          %v2342 = vpack.c.b16 %v2270, %v2262
          %v2343 = vpack.c.b16 %v2271, %v2263
          %v2344 = vpack.c.b16 %v2272, %v2264
          %v2345 = vpack.c.b16 %v2273, %v2265
          %v2346 = vpack.c.b16 %v2274, %v2266
          %v2347 = vpack.c.b16 %v2275, %v2267
          %v2348 = vpack.c.b16 %v2284, %v2276
          %v2349 = vpack.c.b16 %v2285, %v2277
          %v2350 = vpack.c.b16 %v2286, %v2278
          %v2351 = vpack.c.b16 %v2287, %v2279
          %v2352 = vpack.c.b16 %v2288, %v2280
          %v2353 = vpack.c.b16 %v2289, %v2281
          %v2354 = vpack.c.b16 %v2290, %v2282
          %v2355 = vpack.c.b16 %v2291, %v2283
          %2420 = vmatprep.subr.bf16.mxu0 %v2349
          %2421 = vmatpush1.bf16.msra.mxu0 %v2348
          %2422 = vmatprep.subr.bf16.mxu0 %v2341
          %2423 = vmatpush1.bf16.msra.mxu0 %v2340
          %2424 = vmatprep.subr.bf16.mxu0 %v2333
          %2425 = vmatpush1.bf16.msra.mxu0 %v2332
          %2426 = vmatprep.subr.bf16.mxu0 %v2325
          %2427 = vmatpush1.bf16.msra.mxu0 %v2324
          %2428 = vmatprep.subr.bf16.mxu0 %v2317
          %2429 = vmatpush1.bf16.msra.mxu0 %v2316
          %2430 = vmatprep.subr.bf16.mxu0 %v2309
          %2431 = vmatpush1.bf16.msra.mxu0 %v2308
          %2432 = vmatprep.subr.bf16.mxu0 %v2301
          %2433 = vmatpush1.bf16.msra.mxu0 %v2300
          %2434 = vmatprep.subr.bf16.mxu0 %v2293
          %2435 = vmatpush1.bf16.msra.mxu0 %v2292
          %2436 = vmatprep.subr.bf16.mxu0 0
          %2437 = vmatpush2.bf16.msra.mxu0 0
          %2438 = vmatprep.subr.bf16.mxu0 0
          %2439 = vmatpush2.bf16.msra.mxu0 0
          %2440 = vmatprep.subr.bf16.mxu0 0
          %2441 = vmatpush2.bf16.msra.mxu0 0
          %2442 = vmatprep.subr.bf16.mxu0 0
          %2443 = vmatpush2.bf16.msra.mxu0 0
          %2444 = vmatprep.subr.bf16.mxu0 0
          %2445 = vmatpush2.bf16.msra.mxu0 0
          %2446 = vmatprep.subr.bf16.mxu0 0
          %2447 = vmatpush2.bf16.msra.mxu0 0
          %2448 = vmatprep.subr.bf16.mxu0 0
          %2449 = vmatpush2.bf16.msra.mxu0 0
          %2450 = vmatprep.subr.bf16.mxu0 0
          %2451 = vmatpush2.bf16.msra.mxu0 0
          %2452 = vmatprep.mubr.bf16.mxu0 0
          %2453 = vmatmul.mubr.bf16.gmra.mxu0 %v1486
          %v2454 = vpop.f32.mrf.mxu0
          %v2455 = vadd.f32 %v1971, %v2454
          %v2456 = vpop.f32.mrf.mxu0
          %v2457 = vadd.f32 %v1973, %v2456
          %v2458 = vpop.f32.mrf.mxu0
          %v2459 = vpop.f32.mrf.mxu0
          %2460 = vdwg.mxu0
          %2461 = vmatprep.subr.bf16.mxu0 %v2351
          %2462 = vmatpush1.bf16.msra.mxu0 %v2350
          %2463 = vmatprep.subr.bf16.mxu0 %v2343
          %2464 = vmatpush1.bf16.msra.mxu0 %v2342
          %2465 = vmatprep.subr.bf16.mxu0 %v2335
          %2466 = vmatpush1.bf16.msra.mxu0 %v2334
          %2467 = vmatprep.subr.bf16.mxu0 %v2327
          %2468 = vmatpush1.bf16.msra.mxu0 %v2326
          %2469 = vmatprep.subr.bf16.mxu0 %v2319
          %2470 = vmatpush1.bf16.msra.mxu0 %v2318
          %2471 = vmatprep.subr.bf16.mxu0 %v2311
          %2472 = vmatpush1.bf16.msra.mxu0 %v2310
          %2473 = vmatprep.subr.bf16.mxu0 %v2303
          %2474 = vmatpush1.bf16.msra.mxu0 %v2302
          %2475 = vmatprep.subr.bf16.mxu0 %v2295
          %2476 = vmatpush1.bf16.msra.mxu0 %v2294
          %2477 = vmatprep.subr.bf16.mxu0 0
          %2478 = vmatpush2.bf16.msra.mxu0 0
          %2479 = vmatprep.subr.bf16.mxu0 0
          %2480 = vmatpush2.bf16.msra.mxu0 0
          %2481 = vmatprep.subr.bf16.mxu0 0
          %2482 = vmatpush2.bf16.msra.mxu0 0
          %2483 = vmatprep.subr.bf16.mxu0 0
          %2484 = vmatpush2.bf16.msra.mxu0 0
          %2485 = vmatprep.subr.bf16.mxu0 0
          %2486 = vmatpush2.bf16.msra.mxu0 0
          %2487 = vmatprep.subr.bf16.mxu0 0
          %2488 = vmatpush2.bf16.msra.mxu0 0
          %2489 = vmatprep.subr.bf16.mxu0 0
          %2490 = vmatpush2.bf16.msra.mxu0 0
          %2491 = vmatprep.subr.bf16.mxu0 0
          %2492 = vmatpush2.bf16.msra.mxu0 0
          %2493 = vmatprep.mubr.bf16.mxu0 0
          %2494 = vmatmul.mubr.bf16.gmra.mxu0 %v1486
          %v2495 = vpop.f32.mrf.mxu0
          %v2496 = vadd.f32 %v2012, %v2495
          %v2497 = vpop.f32.mrf.mxu0
          %v2498 = vadd.f32 %v2014, %v2497
          %v2499 = vpop.f32.mrf.mxu0
          %v2500 = vpop.f32.mrf.mxu0
          %2501 = vdwg.mxu0
          %2502 = vmatprep.subr.bf16.mxu0 %v2353
          %2503 = vmatpush1.bf16.msra.mxu0 %v2352
          %2504 = vmatprep.subr.bf16.mxu0 %v2345
          %2505 = vmatpush1.bf16.msra.mxu0 %v2344
          %2506 = vmatprep.subr.bf16.mxu0 %v2337
          %2507 = vmatpush1.bf16.msra.mxu0 %v2336
          %2508 = vmatprep.subr.bf16.mxu0 %v2329
          %2509 = vmatpush1.bf16.msra.mxu0 %v2328
          %2510 = vmatprep.subr.bf16.mxu0 %v2321
          %2511 = vmatpush1.bf16.msra.mxu0 %v2320
          %2512 = vmatprep.subr.bf16.mxu0 %v2313
          %2513 = vmatpush1.bf16.msra.mxu0 %v2312
          %2514 = vmatprep.subr.bf16.mxu0 %v2305
          %2515 = vmatpush1.bf16.msra.mxu0 %v2304
          %2516 = vmatprep.subr.bf16.mxu0 %v2297
          %2517 = vmatpush1.bf16.msra.mxu0 %v2296
          %2518 = vmatprep.subr.bf16.mxu0 0
          %2519 = vmatpush2.bf16.msra.mxu0 0
          %2520 = vmatprep.subr.bf16.mxu0 0
          %2521 = vmatpush2.bf16.msra.mxu0 0
          %2522 = vmatprep.subr.bf16.mxu0 0
          %2523 = vmatpush2.bf16.msra.mxu0 0
          %2524 = vmatprep.subr.bf16.mxu0 0
          %2525 = vmatpush2.bf16.msra.mxu0 0
          %2526 = vmatprep.subr.bf16.mxu0 0
          %2527 = vmatpush2.bf16.msra.mxu0 0
          %2528 = vmatprep.subr.bf16.mxu0 0
          %2529 = vmatpush2.bf16.msra.mxu0 0
          %2530 = vmatprep.subr.bf16.mxu0 0
          %2531 = vmatpush2.bf16.msra.mxu0 0
          %2532 = vmatprep.subr.bf16.mxu0 0
          %2533 = vmatpush2.bf16.msra.mxu0 0
          %2534 = vmatprep.mubr.bf16.mxu0 0
          %2535 = vmatmul.mubr.bf16.gmra.mxu0 %v1486
          %v2536 = vpop.f32.mrf.mxu0
          %v2537 = vadd.f32 %v2053, %v2536
          %v2538 = vpop.f32.mrf.mxu0
          %v2539 = vadd.f32 %v2055, %v2538
          %v2540 = vpop.f32.mrf.mxu0
          %v2541 = vpop.f32.mrf.mxu0
          %2542 = vdwg.mxu0
          %2543 = vmatprep.subr.bf16.mxu0 %v2355
          %2544 = vmatpush1.bf16.msra.mxu0 %v2354
          %2545 = vmatprep.subr.bf16.mxu0 %v2347
          %2546 = vmatpush1.bf16.msra.mxu0 %v2346
          %2547 = vmatprep.subr.bf16.mxu0 %v2339
          %2548 = vmatpush1.bf16.msra.mxu0 %v2338
          %2549 = vmatprep.subr.bf16.mxu0 %v2331
          %2550 = vmatpush1.bf16.msra.mxu0 %v2330
          %2551 = vmatprep.subr.bf16.mxu0 %v2323
          %2552 = vmatpush1.bf16.msra.mxu0 %v2322
          %2553 = vmatprep.subr.bf16.mxu0 %v2315
          %2554 = vmatpush1.bf16.msra.mxu0 %v2314
          %2555 = vmatprep.subr.bf16.mxu0 %v2307
          %2556 = vmatpush1.bf16.msra.mxu0 %v2306
          %2557 = vmatprep.subr.bf16.mxu0 %v2299
          %2558 = vmatpush1.bf16.msra.mxu0 %v2298
          %2559 = vmatprep.subr.bf16.mxu0 0
          %2560 = vmatpush2.bf16.msra.mxu0 0
          %2561 = vmatprep.subr.bf16.mxu0 0
          %2562 = vmatpush2.bf16.msra.mxu0 0
          %2563 = vmatprep.subr.bf16.mxu0 0
          %2564 = vmatpush2.bf16.msra.mxu0 0
          %2565 = vmatprep.subr.bf16.mxu0 0
          %2566 = vmatpush2.bf16.msra.mxu0 0
          %2567 = vmatprep.subr.bf16.mxu0 0
          %2568 = vmatpush2.bf16.msra.mxu0 0
          %2569 = vmatprep.subr.bf16.mxu0 0
          %2570 = vmatpush2.bf16.msra.mxu0 0
          %2571 = vmatprep.subr.bf16.mxu0 0
          %2572 = vmatpush2.bf16.msra.mxu0 0
          %2573 = vmatprep.subr.bf16.mxu0 0
          %2574 = vmatpush2.bf16.msra.mxu0 0
          %2575 = vmatprep.mubr.bf16.mxu0 0
          %2576 = vmatmul.mubr.bf16.gmra.mxu0 %v1486
          %v2577 = vpop.f32.mrf.mxu0
          %v2578 = vadd.f32 %v2094, %v2577
          %v2579 = vpop.f32.mrf.mxu0
          %v2580 = vadd.f32 %v2096, %v2579
          %v2581 = vpop.f32.mrf.mxu0
          %v2582 = vpop.f32.mrf.mxu0
          %2583 = vdwg.mxu0
          %v2584 = vld [vmem:[%s10] sm:$0xff]
          %v2586 = vlaneseq
          %v2587 = vshrl.u32 %v2586, 7
          %v2588 = vsub.s32 0, %v2587
          %v2589 = vrot.slane %v2584, %v2588
          %v2590 = vlaneseq
          %v2591 = vshrl.u32 %v2590, 7
          %v2592 = vsub.s32 1, %v2591
          %v2593 = vrot.slane %v2584, %v2592
          %v2594 = vlaneseq
          %v2595 = vshrl.u32 %v2594, 7
          %v2596 = vsub.s32 2, %v2595
          %v2597 = vrot.slane %v2584, %v2596
          %v2598 = vlaneseq
          %v2599 = vshrl.u32 %v2598, 7
          %v2600 = vsub.s32 3, %v2599
          %v2601 = vrot.slane %v2584, %v2600
          %v2602 = vlaneseq
          %v2603 = vshrl.u32 %v2602, 7
          %v2604 = vsub.s32 4, %v2603
          %v2605 = vrot.slane %v2584, %v2604
          %v2606 = vlaneseq
          %v2607 = vshrl.u32 %v2606, 7
          %v2608 = vsub.s32 5, %v2607
          %v2609 = vrot.slane %v2584, %v2608
          %v2610 = vlaneseq
          %v2611 = vshrl.u32 %v2610, 7
          %v2612 = vsub.s32 6, %v2611
          %v2613 = vrot.slane %v2584, %v2612
          %v2614 = vlaneseq
          %v2615 = vshrl.u32 %v2614, 7
          %v2616 = vsub.s32 7, %v2615
          %v2617 = vrot.slane %v2584, %v2616
          %v2626 = vadd.f32 %v2455, %v2589
          %v2627 = vadd.f32 %v2457, %v2593
          %v2628 = vadd.f32 %v2496, %v2597
          %v2629 = vadd.f32 %v2498, %v2601
          %v2630 = vadd.f32 %v2537, %v2605
          %v2631 = vadd.f32 %v2539, %v2609
          %v2632 = vadd.f32 %v2578, %v2613
          %v2633 = vadd.f32 %v2580, %v2617
          %2634 = vst [vmem:[%s11] sm:$0xff] %v2626
          %2635 = vst [vmem:[%s11 + $0x8] sm:$0xff] %v2627
          %2636 = vst [vmem:[%s11 + $0x10] sm:$0xff] %v2628
          %2637 = vst [vmem:[%s11 + $0x18] sm:$0xff] %v2629
          %2638 = vst [vmem:[%s11 + $0x20] sm:$0xff] %v2630
          %2639 = vst [vmem:[%s11 + $0x28] sm:$0xff] %v2631
          %2640 = vst [vmem:[%s11 + $0x30] sm:$0xff] %v2632
          %2641 = vst [vmem:[%s11 + $0x38] sm:$0xff] %v2633
        $region76: #{gru_rnn_forward.7} parent=63 // pred_fallthru
          _
        // Predicated region
        $region77: #{gru_rnn_forward.7} parent=63 // pred_check
          %p2642 = pneg %p272
        $region78: #{gru_rnn_forward.7} parent=63 // pred_check_branch
          %2644 = sbr.rel (%p2642) target = $region80
        $region79: #{gru_rnn_forward.7} parent=63 // pred_region
          _
        $region80: #{gru_rnn_forward.7} parent=63 // pred_fallthru
          _
        // Predicated region
        $region81: #{gru_rnn_forward.7} parent=63 // pred_check
          %p2645 = pneg %p272
        $region82: #{gru_rnn_forward.7} parent=63 // pred_check_branch
          %2647 = sbr.rel (%p2645) target = $region84
        $region83: #{gru_rnn_forward.7} parent=63 // pred_region
          _
        $region84: #{gru_rnn_forward.7} parent=63 // pred_fallthru
          _
      $region64: #{gru_rnn_forward.7} parent=5 // pred_fallthru
        _
      %p2648 = scmp.le.s32.totalorder 2, %s18
      // Predicated region
      $region85: #{gru_rnn_forward.7} parent=5 // pred_check
        %p2649 = pneg %p2648
      $region86: #{gru_rnn_forward.7} parent=5 // pred_check_branch
        %2651 = sbr.rel (%p2649) target = $region88
      $region87: #{gru_rnn_forward.7} parent=5 // pred_region
        %s2652 = ssub.s32 %s18, 2
      $region88: #{gru_rnn_forward.7} parent=5 // pred_fallthru
        _
    $region6: #{gru_rnn_forward.7} parent=1 // loop_footer
      %s22 = sadd.s32 1, %s18
    $region7: #{gru_rnn_forward.7} parent=1 // loop_footer_branch
      %17 = sbr.rel target = $region3
    $region8: #{gru_rnn_forward.7} parent=1 // loop_exit
      _
    %2653 = vsyncpa [#allocation4], 1
    %s2654 = scalar_lea.sflag [#allocation4], 1
    %2655 = vsyncpa %s2654, 1

</llo_original>
